<compile_context>
chip_gen: v7x
topology: tpu7x:2x2x1
jax: 0.10.0
libtpu: 0.0.40
codegen_flags: <defaults>
</compile_context>

<pallas_src>
import functools

import jax
import jax.numpy as jnp
from jax.experimental import pallas as pl
from jax.experimental.pallas import tpu as pltpu


# -----------------------------------------------------------------------------
# Tiny in-script darknet cfg (no file reading).  Same dict format parse_cfg
# would produce from a .cfg file.
# -----------------------------------------------------------------------------
CFG = """
[net]
batch=1
width=16
height=16
channels=3

[convolutional]
batch_normalize=1
filters=8
size=3
stride=1
pad=1
activation=leaky

[convolutional]
batch_normalize=1
filters=16
size=3
stride=2
pad=1
activation=mish

[convolutional]
batch_normalize=1
filters=16
size=1
stride=1
pad=1
activation=leaky

[shortcut]
from=-2
activation=leaky

[maxpool]
size=2
stride=2

[convolutional]
batch_normalize=1
filters=32
size=3
stride=1
pad=1
activation=leaky

[convolutional]
batch_normalize=0
filters=16
size=1
stride=1
pad=1
activation=linear

[yolo]
mask=0,1
anchors=4,6, 8,12, 16,24, 32,48
classes=3
num=4
scale_x_y=1.05
new_coords=0

[route]
layers=-3

[convolutional]
batch_normalize=1
filters=8
size=1
stride=1
pad=1
activation=leaky

[upsample]
stride=2

[route]
layers=-1,3

[convolutional]
batch_normalize=1
filters=16
size=3
stride=1
pad=1
activation=leaky

[convolutional]
batch_normalize=0
filters=16
size=1
stride=1
pad=1
activation=linear

[yolo]
mask=2,3
anchors=4,6, 8,12, 16,24, 32,48
classes=3
num=4
scale_x_y=1.1
new_coords=0
"""


def parse_cfg_string(cfg_text):
    """Mirror of Darknet.parse_cfg, but on an in-memory string."""
    blocks = []
    block = None
    for raw in cfg_text.splitlines():
        line = raw.rstrip()
        if line == '' or line[0] == '#':
            continue
        if line[0] == '[':
            if block:
                blocks.append(block)
            block = {'type': line.lstrip('[').rstrip(']')}
            if block['type'] == 'convolutional':
                block['batch_normalize'] = 0
            if block['type'] == 'yolo':
                block['new_coords'] = 0
                block['scale_x_y'] = 1.0
        else:
            key, value = line.split('=')
            block[key.strip()] = value.strip()
    if block:
        blocks.append(block)
    return blocks


# -----------------------------------------------------------------------------
# Pallas kernels
# -----------------------------------------------------------------------------
def _activation(x, act):
    if act == 'leaky':
        return jnp.where(x > 0, x, 0.1 * x)
    if act == 'relu':
        return jnp.maximum(x, 0.0)
    if act == 'mish':
        sp = jnp.where(x > 20.0, x, jnp.log1p(jnp.exp(jnp.minimum(x, 20.0))))
        return x * jnp.tanh(sp)
    if act == 'logistic':
        return 1.0 / (1.0 + jnp.exp(-x))
    return x  # 'linear' / identity


def _conv_gemm_kernel(w_ref, x_ref, b_ref, o_ref, *, act):
    # w: (Cout, Kdim) bf16, x: (1, Kdim, S) bf16, b: (Cout, 1) f32,
    # o: (1, Cout, S) f32
    acc = jnp.dot(w_ref[...], x_ref[0], preferred_element_type=jnp.float32)
    acc = acc + b_ref[...]
    o_ref[0] = _activation(acc, act)


def _conv_gemm_res_kernel(w_ref, x_ref, b_ref, r_ref, o_ref, *, act, res_act):
    # conv + bias + act, then fused shortcut: + residual, shortcut activation.
    acc = jnp.dot(w_ref[...], x_ref[0], preferred_element_type=jnp.float32)
    acc = _activation(acc + b_ref[...], act)
    acc = acc + r_ref[0]
    o_ref[0] = _activation(acc, res_act)


def _add_act_kernel(a_ref, b_ref, o_ref, *, act):
    # fallback shortcut (only used when the conv epilogue fusion is not legal)
    o_ref[...] = _activation(a_ref[...] + b_ref[...], act)


def _max_windows_kernel(*refs):
    # refs = (win_0, ..., win_{p*p-1}, out); elementwise max over the windows.
    o_ref = refs[-1]
    m = refs[0][...]
    for r in refs[1:-1]:
        m = jnp.maximum(m, r[...])
    o_ref[...] = m


def _yolo_kernel(x_ref, g_ref, o_ref, *, A, nc, S, W, H, scale,
                 anchor_w, anchor_h, version):
    # x: (1, A, C5, S), g: (2, S) -> rows [grid_x, grid_y], o: (1, 4+nc, A*S)
    # Spatial axis S stays on the lane dimension throughout; per-anchor
    # results are concatenated on lanes and written with one full-width store.
    gx = g_ref[0:1, :]
    gy = g_ref[1:2, :]
    half = 0.5 * (scale - 1.0)

    def sig(v):
        return 1.0 / (1.0 + jnp.exp(-v))

    preds = []
    for a in range(A):
        xa = x_ref[0, a]                 # (C5, S)
        tx = xa[0:1, :]
        ty = xa[1:2, :]
        tw = xa[2:3, :]
        th = xa[3:4, :]
        to = xa[4:5, :]
        tcls = xa[5:, :]                 # (nc, S)

        if version == 'scaled-yolov4':
            bx = (tx * scale - half + gx) / W
            by = (ty * scale - half + gy) / H
            bw = (((tw * 2.0) ** 2) * anchor_w[a]) / W
            bh = (((th * 2.0) ** 2) * anchor_h[a]) / H
            det = to
            cls = tcls
        else:  # 'yolov4' / 'yolov3'
            bx = (sig(tx) * scale - half + gx) / W
            by = (sig(ty) * scale - half + gy) / H
            # clamp keeps exp finite with untrained weights; unreachable for
            # any practically trained net (exp(80) is already astronomical).
            bw = (jnp.exp(jnp.minimum(tw, 80.0)) * anchor_w[a]) / W
            bh = (jnp.exp(jnp.minimum(th, 80.0)) * anchor_h[a]) / H
            det = sig(to)
            cls = sig(tcls)

        bx1 = bx - 0.5 * bw
        by1 = by - 0.5 * bh
        bx2 = bx1 + bw
        by2 = by1 + bh
        conf = cls * det                 # (nc, S)
        preds.append(jnp.concatenate([bx1, by1, bx2, by2, conf], axis=0))

    # (4+nc, A*S): single lane-dense store instead of A narrow ones.
    o_ref[0] = jnp.concatenate(preds, axis=-1)


# -----------------------------------------------------------------------------
# Wrappers (JAX glue around the Pallas kernels; everything runs under jit)
# -----------------------------------------------------------------------------
_VMEM = pl.BlockSpec(memory_space=pltpu.MemorySpace.VMEM)


def _im2col_batched(x, K, stride, pad):
    """(B, C, H, W) -> (B, C*K*K, Ho*Wo), channel-major / kernel-pos minor."""
    B, C, H, W = x.shape
    if K == 1 and stride == 1 and pad == 0:
        return x.reshape(B, C, H * W), H, W
    xp = jnp.pad(x, ((0, 0), (0, 0), (pad, pad), (pad, pad)))
    Hp, Wp = H + 2 * pad, W + 2 * pad
    Ho = (Hp - K) // stride + 1
    Wo = (Wp - K) // stride + 1
    cols = []
    for ki in range(K):
        for kj in range(K):
            cols.append(xp[:, :, ki:ki + stride * Ho:stride,
                           kj:kj + stride * Wo:stride])      # (B, C, Ho, Wo)
    col = jnp.stack(cols, axis=2)                            # (B, C, K*K, Ho, Wo)
    col = col.reshape(B, C * K * K, Ho * Wo)
    return col, Ho, Wo


def pallas_conv2d(x, w2, b2, stride, pad, act, K, residual=None, res_act='linear'):
    """Fused conv (+ optional residual shortcut) via im2col + Pallas GEMM.

    w2: (Cout, Cin*K*K) bf16 (BN already folded), b2: (Cout, 1) f32.
    Output layout is written directly as (B, Cout, Ho*Wo): no pad/trim and no
    post-GEMM transpose.
    """
    B = x.shape[0]
    Cout, Kdim = w2.shape
    # TODO(synk): im2col stays as jitted XLA glue; fully in-kernel window
    # extraction (strided VMEM reads) would further cut HBM traffic for 3x3
    # layers at large resolutions.
    col, Ho, Wo = _im2col_batched(x, K, stride, pad)
    col = col.astype(jnp.bfloat16)
    S = Ho * Wo

    w_spec = pl.BlockSpec((Cout, Kdim), lambda bi: (0, 0))
    x_spec = pl.BlockSpec((1, Kdim, S), lambda bi: (bi, 0, 0))
    b_spec = pl.BlockSpec((Cout, 1), lambda bi: (0, 0))
    o_spec = pl.BlockSpec((1, Cout, S), lambda bi: (bi, 0, 0))

    if residual is None:
        kernel = functools.partial(_conv_gemm_kernel, act=act)
        in_specs = [w_spec, x_spec, b_spec]
        args = (w2, col, b2)
    else:
        res = residual.reshape(B, Cout, S)
        kernel = functools.partial(_conv_gemm_res_kernel, act=act, res_act=res_act)
        in_specs = [w_spec, x_spec, b_spec,
                    pl.BlockSpec((1, Cout, S), lambda bi: (bi, 0, 0))]
        args = (w2, col, b2, res)

    out = pl.pallas_call(
        kernel,
        out_shape=jax.ShapeDtypeStruct((B, Cout, S), jnp.float32),
        grid=(B,),
        in_specs=in_specs,
        out_specs=o_spec,
        compiler_params=pltpu.CompilerParams(
            dimension_semantics=("parallel",)),
    )(*args)
    return out.reshape(B, Cout, Ho, Wo)


def pallas_shortcut(x1, x2, act):
    B, C, H, W = x1.shape
    a = x1.reshape(B * C, H * W)
    b = x2.reshape(B * C, H * W)
    out = pl.pallas_call(
        functools.partial(_add_act_kernel, act=act),
        out_shape=jax.ShapeDtypeStruct((B * C, H * W), jnp.float32),
        in_specs=[_VMEM, _VMEM],
        out_specs=_VMEM,
    )(a, b)
    return out.reshape(B, C, H, W)


def pallas_maxpool(x, pool, stride):
    B, C, H, W = x.shape
    if pool == 2 and stride == 1:
        x = jnp.pad(x, ((0, 0), (0, 0), (0, 1), (0, 1)))      # ZeroPad2d((0,1,0,1))
        H, W = H + 1, W + 1
        pd = 0
    else:
        pd = (pool - 1) // 2
        if pd > 0:
            x = jnp.pad(x, ((0, 0), (0, 0), (pd, pd), (pd, pd)),
                        constant_values=-jnp.inf)
            H, W = H + 2 * pd, W + 2 * pd
    Ho = (H - pool) // stride + 1
    Wo = (W - pool) // stride + 1
    # pool*pool strided views share the same out_spec; no (p*p, ...) stack in HBM.
    wins = []
    for ki in range(pool):
        for kj in range(pool):
            wins.append(x[:, :, ki:ki + stride * Ho:stride,
                          kj:kj + stride * Wo:stride].reshape(B * C, Ho * Wo))
    out = pl.pallas_call(
        _max_windows_kernel,
        out_shape=jax.ShapeDtypeStruct((B * C, Ho * Wo), jnp.float32),
        in_specs=[_VMEM] * len(wins),
        out_specs=_VMEM,
    )(*wins)
    return out.reshape(B, C, Ho, Wo)


def upsample_nearest(x, scale):
    # F.interpolate(..., scale_factor=scale, mode='nearest') for integer scale
    x = jnp.repeat(x, scale, axis=2)
    x = jnp.repeat(x, scale, axis=3)
    return x


def pallas_yolo(x, anchor_mask, anchors, num_anchors, num_classes, stride,
                scale_x_y, new_coords):
    B, C, H, W = x.shape
    A = len(anchor_mask)
    step = len(anchors) // num_anchors
    masked = []
    for m in anchor_mask:
        masked += anchors[m * step:(m + 1) * step]
    masked = [a / stride for a in masked]
    anchor_w = tuple(masked[0::2])
    anchor_h = tuple(masked[1::2])
    version = 'scaled-yolov4' if new_coords == 1 else 'yolov4'

    C5 = 5 + num_classes
    S = H * W
    # (B, A*C5, H, W) -> (B, A, C5, S): spatial stays on the lane axis.
    x5 = x.reshape(B, A, C5, S)
    gx = jnp.tile(jnp.arange(W, dtype=jnp.float32), H)
    gy = jnp.repeat(jnp.arange(H, dtype=jnp.float32), W)
    g = jnp.stack([gx, gy], axis=0)                          # (2, S)

    kernel = functools.partial(
        _yolo_kernel, A=A, nc=num_classes, S=S, W=W, H=H, scale=scale_x_y,
        anchor_w=anchor_w, anchor_h=anchor_h, version=version)

    out = pl.pallas_call(
        kernel,
        out_shape=jax.ShapeDtypeStruct((B, 4 + num_classes, A * S), jnp.float32),
        grid=(B,),
        in_specs=[
            pl.BlockSpec((1, A, C5, S), lambda b: (b, 0, 0, 0)),
            pl.BlockSpec((2, S), lambda b: (0, 0)),
        ],
        out_specs=pl.BlockSpec((1, 4 + num_classes, A * S), lambda b: (b, 0, 0)),
        compiler_params=pltpu.CompilerParams(
            dimension_semantics=("parallel",)),
    )(x5, g)
    # lane-dense kernel output -> (B, A*S, 4+nc) layout expected by the caller
    return out.transpose(0, 2, 1)


# -----------------------------------------------------------------------------
# Darknet network (eval forward), parameters built deterministically
# -----------------------------------------------------------------------------
class DarknetPallas:
    def __init__(self, cfg_text, key):
        self.blocks = parse_cfg_string(cfg_text)
        self.width = int(self.blocks[0]['width'])
        self.height = int(self.blocks[0]['height'])
        self.models, self._idx_blocks = self._create_network(self.blocks, key)
        self._block_at = dict(self._idx_blocks)
        self._fuse = self._plan_shortcut_fusion()
        # Whole forward pass compiled as one XLA program.
        self._jit_forward = jax.jit(self._forward_impl)

    # ---------------------------------------------------------------- build --
    def _create_network(self, blocks, key):
        models = []
        idx_blocks = []
        prev_filters = 3
        out_filters = []
        prev_stride = 1
        out_strides = []
        ind = -2
        for block in blocks:
            ind += 1
            t = block['type']
            if t == 'net':
                prev_filters = int(block['channels'])
                continue
            idx_blocks.append((ind, block))
            if t == 'convolutional':
                bn = int(block['batch_normalize'])
                filters = int(block['filters'])
                ks = int(block['size'])
                stride = int(block['stride'])
                is_pad = int(block['pad'])
                pad = (ks - 1) // 2 if is_pad else 0
                act = block['activation']
                key, k1, k2, k3, k4, k5, k6 = jax.random.split(key, 7)
                w = 0.1 * jax.random.normal(
                    k1, (filters, prev_filters, ks, ks), jnp.float32)
                if bn:
                    # eval-mode BatchNorm folded into the conv (conv has no bias)
                    gamma = 1.0 + 0.1 * jax.random.normal(k2, (filters,), jnp.float32)
                    beta = 0.05 * jax.random.normal(k3, (filters,), jnp.float32)
                    mean = 0.1 * jax.random.normal(k4, (filters,), jnp.float32)
                    var = jax.random.uniform(k5, (filters,), jnp.float32, 0.5, 1.5)
                    inv = gamma / jnp.sqrt(var + 1e-5)
                    b = beta - mean * inv
                    w = w * inv[:, None, None, None]
                else:
                    b = 0.05 * jax.random.normal(k6, (filters,), jnp.float32)
                # GEMM operands stored bf16 (f32 accumulate in-kernel); bias f32.
                w2 = w.reshape(filters, prev_filters * ks * ks).astype(jnp.bfloat16)
                models.append(dict(kind='conv', w=w2, b=b.reshape(filters, 1),
                                   stride=stride, pad=pad, act=act, size=ks))
                prev_filters = filters
                out_filters.append(prev_filters)
                prev_stride = stride * prev_stride
                out_strides.append(prev_stride)
            elif t == 'maxpool':
                pool = int(block['size'])
                stride = int(block['stride'])
                models.append(dict(kind='maxpool', size=pool, stride=stride))
                out_filters.append(prev_filters)
                prev_stride = stride * prev_stride
                out_strides.append(prev_stride)
            elif t == 'upsample':
                stride = int(block['stride'])
                models.append(dict(kind='upsample', stride=stride))
                out_filters.append(prev_filters)
                prev_stride = prev_stride // stride
                out_strides.append(prev_stride)
            elif t == 'route':
                layers = [int(i) for i in block['layers'].split(',')]
                cur = len(models)
                layers = [i if i > 0 else i + cur for i in layers]
                if len(layers) == 1:
                    if 'groups' not in block or int(block['groups']) == 1:
                        prev_filters = out_filters[layers[0]]
                        prev_stride = out_strides[layers[0]]
                    else:
                        prev_filters = out_filters[layers[0]] // int(block['groups'])
                        prev_stride = out_strides[layers[0]] // int(block['groups'])
                else:
                    prev_filters = sum(out_filters[i] for i in layers)
                    prev_stride = out_strides[layers[0]]
                models.append(dict(kind='identity'))
                out_filters.append(prev_filters)
                out_strides.append(prev_stride)
            elif t == 'shortcut':
                cur = len(models)
                prev_filters = out_filters[cur - 1]
                prev_stride = out_strides[cur - 1]
                models.append(dict(kind='identity'))
                out_filters.append(prev_filters)
                out_strides.append(prev_stride)
            elif t == 'yolo':
                anchors = [float(i) for i in block['anchors'].split(',')]
                mask = [int(i) for i in block['mask'].split(',')]
                models.append(dict(kind='yolo', mask=mask, anchors=anchors,
                                   num=int(block['num']),
                                   classes=int(block['classes']),
                                   stride=prev_stride,
                                   scale_x_y=float(block['scale_x_y']),
                                   new_coords=int(block['new_coords'])))
                self.num_classes = int(block['classes'])
                out_filters.append(prev_filters)
                out_strides.append(prev_stride)
        return models, idx_blocks

    # -------------------------------------------------- shortcut fusion plan --
    def _plan_shortcut_fusion(self):
        """Conv i can absorb shortcut i+1 iff conv i's output feeds only it."""
        consumers = {}
        last_out = None
        for ind, blk in self._idx_blocks:
            t = blk['type']
            if t in ('convolutional', 'maxpool', 'upsample', 'yolo'):
                if last_out is not None:
                    consumers.setdefault(last_out, set()).add(ind)
            elif t == 'shortcut':
                fr = int(blk['from'])
                fr = fr if fr > 0 else fr + ind
                consumers.setdefault(fr, set()).add(ind)
                consumers.setdefault(ind - 1, set()).add(ind)
            elif t == 'route':
                layers = [int(i) for i in blk['layers'].split(',')]
                layers = [l if l > 0 else l + ind for l in layers]
                for l in layers:
                    consumers.setdefault(l, set()).add(ind)
            if t != 'yolo':
                last_out = ind
        fuse = {}
        for ind, blk in self._idx_blocks:
            if blk['type'] != 'convolutional':
                continue
            nxt = self._block_at.get(ind + 1)
            if nxt is None or nxt['type'] != 'shortcut':
                continue
            fr = int(nxt['from'])
            fr = fr if fr > 0 else fr + ind + 1
            if fr == ind:
                continue
            if consumers.get(ind, set()) == {ind + 1}:
                fuse[ind] = True
        return fuse

    # -------------------------------------------------------------- forward --
    def _forward_impl(self, x):
        outputs = {}
        final_outputs = []
        skip = set()
        for ind, blk in self._idx_blocks:
            if ind in skip:
                continue
            t = blk['type']
            if t == 'convolutional':
                m = self.models[ind]
                if self._fuse.get(ind, False):
                    sc = self._block_at[ind + 1]
                    fr = int(sc['from'])
                    fr = fr if fr > 0 else fr + ind + 1
                    res_act = sc['activation']
                    res_act = res_act if res_act in ('leaky', 'relu') else 'linear'
                    x = pallas_conv2d(x, m['w'], m['b'], m['stride'], m['pad'],
                                      m['act'], m['size'],
                                      residual=outputs[fr], res_act=res_act)
                    outputs[ind + 1] = x
                    skip.add(ind + 1)
                else:
                    x = pallas_conv2d(x, m['w'], m['b'], m['stride'], m['pad'],
                                      m['act'], m['size'])
                    outputs[ind] = x
            elif t == 'maxpool':
                m = self.models[ind]
                x = pallas_maxpool(x, m['size'], m['stride'])
                outputs[ind] = x
            elif t == 'upsample':
                x = upsample_nearest(x, self.models[ind]['stride'])
                outputs[ind] = x
            elif t == 'route':
                layers = [int(i) for i in blk['layers'].split(',')]
                layers = [i if i > 0 else i + ind for i in layers]
                if len(layers) == 1:
                    if 'groups' not in blk or int(blk['groups']) == 1:
                        x = outputs[layers[0]]
                    else:
                        groups = int(blk['groups'])
                        gid = int(blk['group_id'])
                        c = outputs[layers[0]].shape[1]
                        x = outputs[layers[0]][:, c // groups * gid:
                                               c // groups * (gid + 1)]
                else:
                    x = jnp.concatenate([outputs[i] for i in layers], axis=1)
                outputs[ind] = x
            elif t == 'shortcut':
                fr = int(blk['from'])
                fr = fr if fr > 0 else fr + ind
                act = blk['activation']
                act = act if act in ('leaky', 'relu') else 'linear'
                x = pallas_shortcut(outputs[fr], outputs[ind - 1], act)
                outputs[ind] = x
            elif t == 'yolo':
                m = self.models[ind]
                out = pallas_yolo(x, m['mask'], m['anchors'], m['num'],
                                  m['classes'], m['stride'], m['scale_x_y'],
                                  m['new_coords'])
                final_outputs.append(out)
        # TODO(synk): load_weights / fuse() are host-side checkpoint utilities
        # with no kernel equivalent; weights are synthesized deterministically.
        return jnp.concatenate(final_outputs, axis=1)

    def forward(self, x):
        return self._jit_forward(x)


# -----------------------------------------------------------------------------
if __name__ == "__main__":
    key = jax.random.PRNGKey(0)
    k_params, k_input = jax.random.split(key)
    net = DarknetPallas(CFG, k_params)
    x = jax.random.normal(k_input, (2, 3, net.height, net.width), jnp.float32)
    preds = net.forward(x)
    preds = jax.block_until_ready(preds)
    # two yolo heads: 2 anchors * (4*4 + 8*8) cells = 160 boxes, 4 + 3 classes
    assert preds.shape == (2, 160, 4 + net.num_classes), preds.shape
    assert bool(jnp.all(jnp.isfinite(preds)))
    print("KERNEL_OK")
</pallas_src>

<mosaic_0001>
module attributes {stable_mosaic.version = 11 : i64} {
  func.func @_conv_gemm_kernel(%arg0: i32, %arg1: memref<8x27xbf16, #tpu.memory_space<vmem>>, %arg2: memref<1x27x256xbf16, #tpu.memory_space<vmem>>, %arg3: memref<8x1xf32, #tpu.memory_space<vmem>>, %arg4: memref<1x8x256xf32, #tpu.memory_space<vmem>>) attributes {dimension_semantics = [#tpu.dimension_semantics<parallel>], iteration_bounds = array<i64: 2>, scalar_prefetch = 0 : i64, scratch_operands = 0 : i64, tpu.core_type = #tpu.core_type<tc>, window_params = [{pipeline_mode = #tpu.pipeline_mode<synchronous>, transform_indices = @transform_0, window_bounds = array<i64: 8, 27>}, {transform_indices = @transform_1, window_bounds = array<i64: 1, 27, 256>}, {pipeline_mode = #tpu.pipeline_mode<synchronous>, transform_indices = @transform_2, window_bounds = array<i64: 8, 1>}, {transform_indices = @transform_3, window_bounds = array<i64: 1, 8, 256>}]} {
    %c0 = arith.constant 0 : index
    %c0_0 = arith.constant 0 : index
    %0 = vector.load %arg1[%c0, %c0_0] : memref<8x27xbf16, #tpu.memory_space<vmem>>, vector<8x27xbf16>
    %c0_1 = arith.constant 0 : index
    %c0_2 = arith.constant 0 : index
    %c0_3 = arith.constant 0 : index
    %1 = vector.load %arg2[%c0_1, %c0_2, %c0_3] : memref<1x27x256xbf16, #tpu.memory_space<vmem>>, vector<1x27x256xbf16>
    %2 = vector.shape_cast %1 : vector<1x27x256xbf16> to vector<27x256xbf16>
    %cst = arith.constant dense<0.000000e+00> : vector<8x256xf32>
    %3 = tpu.matmul %0, %2, %cst {dimension_numbers = #tpu.dot_dimension_numbers<[1], [0], [0], [1], [0, 0, 1, 1], [], []>} : vector<8x27xbf16>, vector<27x256xbf16>, vector<8x256xf32> -> vector<8x256xf32>
    %c0_4 = arith.constant 0 : index
    %c0_5 = arith.constant 0 : index
    %4 = vector.load %arg3[%c0_4, %c0_5] : memref<8x1xf32, #tpu.memory_space<vmem>>, vector<8x1xf32>
    %5 = vector.broadcast %4 : vector<8x1xf32> to vector<8x256xf32>
    %6 = arith.addf %3, %5 : vector<8x256xf32>
    %cst_6 = arith.constant 0.000000e+00 : f32
    %7 = vector.broadcast %cst_6 : f32 to vector<8x256xf32>
    %8 = arith.cmpf ogt, %6, %7 : vector<8x256xf32>
    %cst_7 = arith.constant 1.000000e-01 : f32
    %9 = vector.broadcast %cst_7 : f32 to vector<8x256xf32>
    %10 = arith.mulf %9, %6 : vector<8x256xf32>
    %11 = arith.select %8, %6, %10 : vector<8x256xi1>, vector<8x256xf32>
    %c0_8 = arith.constant 0 : index
    %c0_9 = arith.constant 0 : index
    %c0_10 = arith.constant 0 : index
    %12 = vector.load %arg4[%c0_8, %c0_9, %c0_10] : memref<1x8x256xf32, #tpu.memory_space<vmem>>, vector<1x8x256xf32>
    %13 = vector.shape_cast %12 : vector<1x8x256xf32> to vector<8x256xf32>
    %14 = vector.shape_cast %11 : vector<8x256xf32> to vector<1x8x256xf32>
    tpu.vector_store %arg4[%c0_8, %c0_9, %c0_10], %14 {strides = array<i32>} : memref<1x8x256xf32, #tpu.memory_space<vmem>>, vector<1x8x256xf32>,
    return
  }
  func.func @transform_0(%arg0: i32) -> (i32, i32) {
    %c0_i32 = arith.constant 0 : i32
    %c0_i32_0 = arith.constant 0 : i32
    %c0_i32_1 = arith.constant 0 : i32
    return %c0_i32, %c0_i32_0 : i32, i32
  }
  func.func @transform_1(%arg0: i32) -> (i32, i32, i32) {
    %c0_i32 = arith.constant 0 : i32
    %c0_i32_0 = arith.constant 0 : i32
    %c0_i32_1 = arith.constant 0 : i32
    return %arg0, %c0_i32, %c0_i32_0 : i32, i32, i32
  }
  func.func @transform_2(%arg0: i32) -> (i32, i32) {
    %c0_i32 = arith.constant 0 : i32
    %c0_i32_0 = arith.constant 0 : i32
    %c0_i32_1 = arith.constant 0 : i32
    return %c0_i32, %c0_i32_0 : i32, i32
  }
  func.func @transform_3(%arg0: i32) -> (i32, i32, i32) {
    %c0_i32 = arith.constant 0 : i32
    %c0_i32_0 = arith.constant 0 : i32
    %c0_i32_1 = arith.constant 0 : i32
    return %arg0, %c0_i32, %c0_i32_0 : i32, i32, i32
  }
}

module attributes {stable_mosaic.version = 11 : i64} {
  func.func @_conv_gemm_kernel(%arg0: i32, %arg1: memref<16x72xbf16, #tpu.memory_space<vmem>>, %arg2: memref<1x72x64xbf16, #tpu.memory_space<vmem>>, %arg3: memref<16x1xf32, #tpu.memory_space<vmem>>, %arg4: memref<1x16x64xf32, #tpu.memory_space<vmem>>) attributes {dimension_semantics = [#tpu.dimension_semantics<parallel>], iteration_bounds = array<i64: 2>, scalar_prefetch = 0 : i64, scratch_operands = 0 : i64, tpu.core_type = #tpu.core_type<tc>, window_params = [{pipeline_mode = #tpu.pipeline_mode<synchronous>, transform_indices = @transform_0, window_bounds = array<i64: 16, 72>}, {transform_indices = @transform_1, window_bounds = array<i64: 1, 72, 64>}, {pipeline_mode = #tpu.pipeline_mode<synchronous>, transform_indices = @transform_2, window_bounds = array<i64: 16, 1>}, {transform_indices = @transform_3, window_bounds = array<i64: 1, 16, 64>}]} {
    %c0 = arith.constant 0 : index
    %c0_0 = arith.constant 0 : index
    %0 = vector.load %arg1[%c0, %c0_0] : memref<16x72xbf16, #tpu.memory_space<vmem>>, vector<16x72xbf16>
    %c0_1 = arith.constant 0 : index
    %c0_2 = arith.constant 0 : index
    %c0_3 = arith.constant 0 : index
    %1 = vector.load %arg2[%c0_1, %c0_2, %c0_3] : memref<1x72x64xbf16, #tpu.memory_space<vmem>>, vector<1x72x64xbf16>
    %2 = vector.shape_cast %1 : vector<1x72x64xbf16> to vector<72x64xbf16>
    %cst = arith.constant dense<0.000000e+00> : vector<16x64xf32>
    %3 = tpu.matmul %0, %2, %cst {dimension_numbers = #tpu.dot_dimension_numbers<[1], [0], [0], [1], [0, 0, 1, 1], [], []>} : vector<16x72xbf16>, vector<72x64xbf16>, vector<16x64xf32> -> vector<16x64xf32>
    %c0_4 = arith.constant 0 : index
    %c0_5 = arith.constant 0 : index
    %4 = vector.load %arg3[%c0_4, %c0_5] : memref<16x1xf32, #tpu.memory_space<vmem>>, vector<16x1xf32>
    %5 = vector.broadcast %4 : vector<16x1xf32> to vector<16x64xf32>
    %6 = arith.addf %3, %5 : vector<16x64xf32>
    %cst_6 = arith.constant 2.000000e+01 : f32
    %7 = vector.broadcast %cst_6 : f32 to vector<16x64xf32>
    %8 = arith.cmpf ogt, %6, %7 : vector<16x64xf32>
    %cst_7 = arith.constant 2.000000e+01 : f32
    %9 = vector.broadcast %cst_7 : f32 to vector<16x64xf32>
    %10 = arith.minimumf %6, %9 : vector<16x64xf32>
    %11 = math.exp %10 : vector<16x64xf32>
    %12 = math.log1p %11 : vector<16x64xf32>
    %13 = arith.select %8, %6, %12 : vector<16x64xi1>, vector<16x64xf32>
    %14 = math.tanh %13 : vector<16x64xf32>
    %15 = arith.mulf %6, %14 : vector<16x64xf32>
    %c0_8 = arith.constant 0 : index
    %c0_9 = arith.constant 0 : index
    %c0_10 = arith.constant 0 : index
    %16 = vector.load %arg4[%c0_8, %c0_9, %c0_10] : memref<1x16x64xf32, #tpu.memory_space<vmem>>, vector<1x16x64xf32>
    %17 = vector.shape_cast %16 : vector<1x16x64xf32> to vector<16x64xf32>
    %18 = vector.shape_cast %15 : vector<16x64xf32> to vector<1x16x64xf32>
    tpu.vector_store %arg4[%c0_8, %c0_9, %c0_10], %18 {strides = array<i32>} : memref<1x16x64xf32, #tpu.memory_space<vmem>>, vector<1x16x64xf32>,
    return
  }
  func.func @transform_0(%arg0: i32) -> (i32, i32) {
    %c0_i32 = arith.constant 0 : i32
    %c0_i32_0 = arith.constant 0 : i32
    %c0_i32_1 = arith.constant 0 : i32
    return %c0_i32, %c0_i32_0 : i32, i32
  }
  func.func @transform_1(%arg0: i32) -> (i32, i32, i32) {
    %c0_i32 = arith.constant 0 : i32
    %c0_i32_0 = arith.constant 0 : i32
    %c0_i32_1 = arith.constant 0 : i32
    return %arg0, %c0_i32, %c0_i32_0 : i32, i32, i32
  }
  func.func @transform_2(%arg0: i32) -> (i32, i32) {
    %c0_i32 = arith.constant 0 : i32
    %c0_i32_0 = arith.constant 0 : i32
    %c0_i32_1 = arith.constant 0 : i32
    return %c0_i32, %c0_i32_0 : i32, i32
  }
  func.func @transform_3(%arg0: i32) -> (i32, i32, i32) {
    %c0_i32 = arith.constant 0 : i32
    %c0_i32_0 = arith.constant 0 : i32
    %c0_i32_1 = arith.constant 0 : i32
    return %arg0, %c0_i32, %c0_i32_0 : i32, i32, i32
  }
}

module attributes {stable_mosaic.version = 11 : i64} {
  func.func @_conv_gemm_res_kernel(%arg0: i32, %arg1: memref<16x16xbf16, #tpu.memory_space<vmem>>, %arg2: memref<1x16x64xbf16, #tpu.memory_space<vmem>>, %arg3: memref<16x1xf32, #tpu.memory_space<vmem>>, %arg4: memref<1x16x64xf32, #tpu.memory_space<vmem>>, %arg5: memref<1x16x64xf32, #tpu.memory_space<vmem>>) attributes {dimension_semantics = [#tpu.dimension_semantics<parallel>], iteration_bounds = array<i64: 2>, scalar_prefetch = 0 : i64, scratch_operands = 0 : i64, tpu.core_type = #tpu.core_type<tc>, window_params = [{pipeline_mode = #tpu.pipeline_mode<synchronous>, transform_indices = @transform_0, window_bounds = array<i64: 16, 16>}, {transform_indices = @transform_1, window_bounds = array<i64: 1, 16, 64>}, {pipeline_mode = #tpu.pipeline_mode<synchronous>, transform_indices = @transform_2, window_bounds = array<i64: 16, 1>}, {transform_indices = @transform_3, window_bounds = array<i64: 1, 16, 64>}, {transform_indices = @transform_4, window_bounds = array<i64: 1, 16, 64>}]} {
    %c0 = arith.constant 0 : index
    %c0_0 = arith.constant 0 : index
    %0 = vector.load %arg1[%c0, %c0_0] : memref<16x16xbf16, #tpu.memory_space<vmem>>, vector<16x16xbf16>
    %c0_1 = arith.constant 0 : index
    %c0_2 = arith.constant 0 : index
    %c0_3 = arith.constant 0 : index
    %1 = vector.load %arg2[%c0_1, %c0_2, %c0_3] : memref<1x16x64xbf16, #tpu.memory_space<vmem>>, vector<1x16x64xbf16>
    %2 = vector.shape_cast %1 : vector<1x16x64xbf16> to vector<16x64xbf16>
    %cst = arith.constant dense<0.000000e+00> : vector<16x64xf32>
    %3 = tpu.matmul %0, %2, %cst {dimension_numbers = #tpu.dot_dimension_numbers<[1], [0], [0], [1], [0, 0, 1, 1], [], []>} : vector<16x16xbf16>, vector<16x64xbf16>, vector<16x64xf32> -> vector<16x64xf32>
    %c0_4 = arith.constant 0 : index
    %c0_5 = arith.constant 0 : index
    %4 = vector.load %arg3[%c0_4, %c0_5] : memref<16x1xf32, #tpu.memory_space<vmem>>, vector<16x1xf32>
    %5 = vector.broadcast %4 : vector<16x1xf32> to vector<16x64xf32>
    %6 = arith.addf %3, %5 : vector<16x64xf32>
    %cst_6 = arith.constant 0.000000e+00 : f32
    %7 = vector.broadcast %cst_6 : f32 to vector<16x64xf32>
    %8 = arith.cmpf ogt, %6, %7 : vector<16x64xf32>
    %cst_7 = arith.constant 1.000000e-01 : f32
    %9 = vector.broadcast %cst_7 : f32 to vector<16x64xf32>
    %10 = arith.mulf %9, %6 : vector<16x64xf32>
    %11 = arith.select %8, %6, %10 : vector<16x64xi1>, vector<16x64xf32>
    %c0_8 = arith.constant 0 : index
    %c0_9 = arith.constant 0 : index
    %c0_10 = arith.constant 0 : index
    %12 = vector.load %arg4[%c0_8, %c0_9, %c0_10] : memref<1x16x64xf32, #tpu.memory_space<vmem>>, vector<1x16x64xf32>
    %13 = vector.shape_cast %12 : vector<1x16x64xf32> to vector<16x64xf32>
    %14 = arith.addf %11, %13 : vector<16x64xf32>
    %cst_11 = arith.constant 0.000000e+00 : f32
    %15 = vector.broadcast %cst_11 : f32 to vector<16x64xf32>
    %16 = arith.cmpf ogt, %14, %15 : vector<16x64xf32>
    %cst_12 = arith.constant 1.000000e-01 : f32
    %17 = vector.broadcast %cst_12 : f32 to vector<16x64xf32>
    %18 = arith.mulf %17, %14 : vector<16x64xf32>
    %19 = arith.select %16, %14, %18 : vector<16x64xi1>, vector<16x64xf32>
    %c0_13 = arith.constant 0 : index
    %c0_14 = arith.constant 0 : index
    %c0_15 = arith.constant 0 : index
    %20 = vector.load %arg5[%c0_13, %c0_14, %c0_15] : memref<1x16x64xf32, #tpu.memory_space<vmem>>, vector<1x16x64xf32>
    %21 = vector.shape_cast %20 : vector<1x16x64xf32> to vector<16x64xf32>
    %22 = vector.shape_cast %19 : vector<16x64xf32> to vector<1x16x64xf32>
    tpu.vector_store %arg5[%c0_13, %c0_14, %c0_15], %22 {strides = array<i32>} : memref<1x16x64xf32, #tpu.memory_space<vmem>>, vector<1x16x64xf32>,
    return
  }
  func.func @transform_0(%arg0: i32) -> (i32, i32) {
    %c0_i32 = arith.constant 0 : i32
    %c0_i32_0 = arith.constant 0 : i32
    %c0_i32_1 = arith.constant 0 : i32
    return %c0_i32, %c0_i32_0 : i32, i32
  }
  func.func @transform_1(%arg0: i32) -> (i32, i32, i32) {
    %c0_i32 = arith.constant 0 : i32
    %c0_i32_0 = arith.constant 0 : i32
    %c0_i32_1 = arith.constant 0 : i32
    return %arg0, %c0_i32, %c0_i32_0 : i32, i32, i32
  }
  func.func @transform_2(%arg0: i32) -> (i32, i32) {
    %c0_i32 = arith.constant 0 : i32
    %c0_i32_0 = arith.constant 0 : i32
    %c0_i32_1 = arith.constant 0 : i32
    return %c0_i32, %c0_i32_0 : i32, i32
  }
  func.func @transform_3(%arg0: i32) -> (i32, i32, i32) {
    %c0_i32 = arith.constant 0 : i32
    %c0_i32_0 = arith.constant 0 : i32
    %c0_i32_1 = arith.constant 0 : i32
    return %arg0, %c0_i32, %c0_i32_0 : i32, i32, i32
  }
  func.func @transform_4(%arg0: i32) -> (i32, i32, i32) {
    %c0_i32 = arith.constant 0 : i32
    %c0_i32_0 = arith.constant 0 : i32
    %c0_i32_1 = arith.constant 0 : i32
    return %arg0, %c0_i32, %c0_i32_0 : i32, i32, i32
  }
}

module attributes {stable_mosaic.version = 11 : i64} {
  func.func @_max_windows_kernel(%arg0: memref<32x16xf32, #tpu.memory_space<vmem>>, %arg1: memref<32x16xf32, #tpu.memory_space<vmem>>, %arg2: memref<32x16xf32, #tpu.memory_space<vmem>>, %arg3: memref<32x16xf32, #tpu.memory_space<vmem>>, %arg4: memref<32x16xf32, #tpu.memory_space<vmem>>) attributes {dimension_semantics = [], scalar_prefetch = 0 : i64, scratch_operands = 0 : i64, tpu.core_type = #tpu.core_type<tc>} {
    %c0 = arith.constant 0 : index
    %c0_0 = arith.constant 0 : index
    %0 = vector.load %arg0[%c0, %c0_0] : memref<32x16xf32, #tpu.memory_space<vmem>>, vector<32x16xf32>
    %c0_1 = arith.constant 0 : index
    %c0_2 = arith.constant 0 : index
    %1 = vector.load %arg1[%c0_1, %c0_2] : memref<32x16xf32, #tpu.memory_space<vmem>>, vector<32x16xf32>
    %2 = arith.maximumf %0, %1 : vector<32x16xf32>
    %c0_3 = arith.constant 0 : index
    %c0_4 = arith.constant 0 : index
    %3 = vector.load %arg2[%c0_3, %c0_4] : memref<32x16xf32, #tpu.memory_space<vmem>>, vector<32x16xf32>
    %4 = arith.maximumf %2, %3 : vector<32x16xf32>
    %c0_5 = arith.constant 0 : index
    %c0_6 = arith.constant 0 : index
    %5 = vector.load %arg3[%c0_5, %c0_6] : memref<32x16xf32, #tpu.memory_space<vmem>>, vector<32x16xf32>
    %6 = arith.maximumf %4, %5 : vector<32x16xf32>
    %c0_7 = arith.constant 0 : index
    %c0_8 = arith.constant 0 : index
    %7 = vector.load %arg4[%c0_7, %c0_8] : memref<32x16xf32, #tpu.memory_space<vmem>>, vector<32x16xf32>
    tpu.vector_store %arg4[%c0_7, %c0_8], %6 {strides = array<i32>} : memref<32x16xf32, #tpu.memory_space<vmem>>, vector<32x16xf32>,
    return
  }
}

module attributes {stable_mosaic.version = 11 : i64} {
  func.func @_conv_gemm_kernel(%arg0: i32, %arg1: memref<32x144xbf16, #tpu.memory_space<vmem>>, %arg2: memref<1x144x16xbf16, #tpu.memory_space<vmem>>, %arg3: memref<32x1xf32, #tpu.memory_space<vmem>>, %arg4: memref<1x32x16xf32, #tpu.memory_space<vmem>>) attributes {dimension_semantics = [#tpu.dimension_semantics<parallel>], iteration_bounds = array<i64: 2>, scalar_prefetch = 0 : i64, scratch_operands = 0 : i64, tpu.core_type = #tpu.core_type<tc>, window_params = [{pipeline_mode = #tpu.pipeline_mode<synchronous>, transform_indices = @transform_0, window_bounds = array<i64: 32, 144>}, {transform_indices = @transform_1, window_bounds = array<i64: 1, 144, 16>}, {pipeline_mode = #tpu.pipeline_mode<synchronous>, transform_indices = @transform_2, window_bounds = array<i64: 32, 1>}, {transform_indices = @transform_3, window_bounds = array<i64: 1, 32, 16>}]} {
    %c0 = arith.constant 0 : index
    %c0_0 = arith.constant 0 : index
    %0 = vector.load %arg1[%c0, %c0_0] : memref<32x144xbf16, #tpu.memory_space<vmem>>, vector<32x144xbf16>
    %c0_1 = arith.constant 0 : index
    %c0_2 = arith.constant 0 : index
    %c0_3 = arith.constant 0 : index
    %1 = vector.load %arg2[%c0_1, %c0_2, %c0_3] : memref<1x144x16xbf16, #tpu.memory_space<vmem>>, vector<1x144x16xbf16>
    %2 = vector.shape_cast %1 : vector<1x144x16xbf16> to vector<144x16xbf16>
    %cst = arith.constant dense<0.000000e+00> : vector<32x16xf32>
    %3 = tpu.matmul %0, %2, %cst {dimension_numbers = #tpu.dot_dimension_numbers<[1], [0], [0], [1], [0, 0, 1, 1], [], []>} : vector<32x144xbf16>, vector<144x16xbf16>, vector<32x16xf32> -> vector<32x16xf32>
    %c0_4 = arith.constant 0 : index
    %c0_5 = arith.constant 0 : index
    %4 = vector.load %arg3[%c0_4, %c0_5] : memref<32x1xf32, #tpu.memory_space<vmem>>, vector<32x1xf32>
    %5 = vector.broadcast %4 : vector<32x1xf32> to vector<32x16xf32>
    %6 = arith.addf %3, %5 : vector<32x16xf32>
    %cst_6 = arith.constant 0.000000e+00 : f32
    %7 = vector.broadcast %cst_6 : f32 to vector<32x16xf32>
    %8 = arith.cmpf ogt, %6, %7 : vector<32x16xf32>
    %cst_7 = arith.constant 1.000000e-01 : f32
    %9 = vector.broadcast %cst_7 : f32 to vector<32x16xf32>
    %10 = arith.mulf %9, %6 : vector<32x16xf32>
    %11 = arith.select %8, %6, %10 : vector<32x16xi1>, vector<32x16xf32>
    %c0_8 = arith.constant 0 : index
    %c0_9 = arith.constant 0 : index
    %c0_10 = arith.constant 0 : index
    %12 = vector.load %arg4[%c0_8, %c0_9, %c0_10] : memref<1x32x16xf32, #tpu.memory_space<vmem>>, vector<1x32x16xf32>
    %13 = vector.shape_cast %12 : vector<1x32x16xf32> to vector<32x16xf32>
    %14 = vector.shape_cast %11 : vector<32x16xf32> to vector<1x32x16xf32>
    tpu.vector_store %arg4[%c0_8, %c0_9, %c0_10], %14 {strides = array<i32>} : memref<1x32x16xf32, #tpu.memory_space<vmem>>, vector<1x32x16xf32>,
    return
  }
  func.func @transform_0(%arg0: i32) -> (i32, i32) {
    %c0_i32 = arith.constant 0 : i32
    %c0_i32_0 = arith.constant 0 : i32
    %c0_i32_1 = arith.constant 0 : i32
    return %c0_i32, %c0_i32_0 : i32, i32
  }
  func.func @transform_1(%arg0: i32) -> (i32, i32, i32) {
    %c0_i32 = arith.constant 0 : i32
    %c0_i32_0 = arith.constant 0 : i32
    %c0_i32_1 = arith.constant 0 : i32
    return %arg0, %c0_i32, %c0_i32_0 : i32, i32, i32
  }
  func.func @transform_2(%arg0: i32) -> (i32, i32) {
    %c0_i32 = arith.constant 0 : i32
    %c0_i32_0 = arith.constant 0 : i32
    %c0_i32_1 = arith.constant 0 : i32
    return %c0_i32, %c0_i32_0 : i32, i32
  }
  func.func @transform_3(%arg0: i32) -> (i32, i32, i32) {
    %c0_i32 = arith.constant 0 : i32
    %c0_i32_0 = arith.constant 0 : i32
    %c0_i32_1 = arith.constant 0 : i32
    return %arg0, %c0_i32, %c0_i32_0 : i32, i32, i32
  }
}

module attributes {stable_mosaic.version = 11 : i64} {
  func.func @_conv_gemm_kernel(%arg0: i32, %arg1: memref<8x32xbf16, #tpu.memory_space<vmem>>, %arg2: memref<1x32x16xbf16, #tpu.memory_space<vmem>>, %arg3: memref<8x1xf32, #tpu.memory_space<vmem>>, %arg4: memref<1x8x16xf32, #tpu.memory_space<vmem>>) attributes {dimension_semantics = [#tpu.dimension_semantics<parallel>], iteration_bounds = array<i64: 2>, scalar_prefetch = 0 : i64, scratch_operands = 0 : i64, tpu.core_type = #tpu.core_type<tc>, window_params = [{pipeline_mode = #tpu.pipeline_mode<synchronous>, transform_indices = @transform_0, window_bounds = array<i64: 8, 32>}, {transform_indices = @transform_1, window_bounds = array<i64: 1, 32, 16>}, {pipeline_mode = #tpu.pipeline_mode<synchronous>, transform_indices = @transform_2, window_bounds = array<i64: 8, 1>}, {transform_indices = @transform_3, window_bounds = array<i64: 1, 8, 16>}]} {
    %c0 = arith.constant 0 : index
    %c0_0 = arith.constant 0 : index
    %0 = vector.load %arg1[%c0, %c0_0] : memref<8x32xbf16, #tpu.memory_space<vmem>>, vector<8x32xbf16>
    %c0_1 = arith.constant 0 : index
    %c0_2 = arith.constant 0 : index
    %c0_3 = arith.constant 0 : index
    %1 = vector.load %arg2[%c0_1, %c0_2, %c0_3] : memref<1x32x16xbf16, #tpu.memory_space<vmem>>, vector<1x32x16xbf16>
    %2 = vector.shape_cast %1 : vector<1x32x16xbf16> to vector<32x16xbf16>
    %cst = arith.constant dense<0.000000e+00> : vector<8x16xf32>
    %3 = tpu.matmul %0, %2, %cst {dimension_numbers = #tpu.dot_dimension_numbers<[1], [0], [0], [1], [0, 0, 1, 1], [], []>} : vector<8x32xbf16>, vector<32x16xbf16>, vector<8x16xf32> -> vector<8x16xf32>
    %c0_4 = arith.constant 0 : index
    %c0_5 = arith.constant 0 : index
    %4 = vector.load %arg3[%c0_4, %c0_5] : memref<8x1xf32, #tpu.memory_space<vmem>>, vector<8x1xf32>
    %5 = vector.broadcast %4 : vector<8x1xf32> to vector<8x16xf32>
    %6 = arith.addf %3, %5 : vector<8x16xf32>
    %cst_6 = arith.constant 0.000000e+00 : f32
    %7 = vector.broadcast %cst_6 : f32 to vector<8x16xf32>
    %8 = arith.cmpf ogt, %6, %7 : vector<8x16xf32>
    %cst_7 = arith.constant 1.000000e-01 : f32
    %9 = vector.broadcast %cst_7 : f32 to vector<8x16xf32>
    %10 = arith.mulf %9, %6 : vector<8x16xf32>
    %11 = arith.select %8, %6, %10 : vector<8x16xi1>, vector<8x16xf32>
    %c0_8 = arith.constant 0 : index
    %c0_9 = arith.constant 0 : index
    %c0_10 = arith.constant 0 : index
    %12 = vector.load %arg4[%c0_8, %c0_9, %c0_10] : memref<1x8x16xf32, #tpu.memory_space<vmem>>, vector<1x8x16xf32>
    %13 = vector.shape_cast %12 : vector<1x8x16xf32> to vector<8x16xf32>
    %14 = vector.shape_cast %11 : vector<8x16xf32> to vector<1x8x16xf32>
    tpu.vector_store %arg4[%c0_8, %c0_9, %c0_10], %14 {strides = array<i32>} : memref<1x8x16xf32, #tpu.memory_space<vmem>>, vector<1x8x16xf32>,
    return
  }
  func.func @transform_0(%arg0: i32) -> (i32, i32) {
    %c0_i32 = arith.constant 0 : i32
    %c0_i32_0 = arith.constant 0 : i32
    %c0_i32_1 = arith.constant 0 : i32
    return %c0_i32, %c0_i32_0 : i32, i32
  }
  func.func @transform_1(%arg0: i32) -> (i32, i32, i32) {
    %c0_i32 = arith.constant 0 : i32
    %c0_i32_0 = arith.constant 0 : i32
    %c0_i32_1 = arith.constant 0 : i32
    return %arg0, %c0_i32, %c0_i32_0 : i32, i32, i32
  }
  func.func @transform_2(%arg0: i32) -> (i32, i32) {
    %c0_i32 = arith.constant 0 : i32
    %c0_i32_0 = arith.constant 0 : i32
    %c0_i32_1 = arith.constant 0 : i32
    return %c0_i32, %c0_i32_0 : i32, i32
  }
  func.func @transform_3(%arg0: i32) -> (i32, i32, i32) {
    %c0_i32 = arith.constant 0 : i32
    %c0_i32_0 = arith.constant 0 : i32
    %c0_i32_1 = arith.constant 0 : i32
    return %arg0, %c0_i32, %c0_i32_0 : i32, i32, i32
  }
}

module attributes {stable_mosaic.version = 11 : i64} {
  func.func @_conv_gemm_kernel(%arg0: i32, %arg1: memref<16x216xbf16, #tpu.memory_space<vmem>>, %arg2: memref<1x216x64xbf16, #tpu.memory_space<vmem>>, %arg3: memref<16x1xf32, #tpu.memory_space<vmem>>, %arg4: memref<1x16x64xf32, #tpu.memory_space<vmem>>) attributes {dimension_semantics = [#tpu.dimension_semantics<parallel>], iteration_bounds = array<i64: 2>, scalar_prefetch = 0 : i64, scratch_operands = 0 : i64, tpu.core_type = #tpu.core_type<tc>, window_params = [{pipeline_mode = #tpu.pipeline_mode<synchronous>, transform_indices = @transform_0, window_bounds = array<i64: 16, 216>}, {transform_indices = @transform_1, window_bounds = array<i64: 1, 216, 64>}, {pipeline_mode = #tpu.pipeline_mode<synchronous>, transform_indices = @transform_2, window_bounds = array<i64: 16, 1>}, {transform_indices = @transform_3, window_bounds = array<i64: 1, 16, 64>}]} {
    %c0 = arith.constant 0 : index
    %c0_0 = arith.constant 0 : index
    %0 = vector.load %arg1[%c0, %c0_0] : memref<16x216xbf16, #tpu.memory_space<vmem>>, vector<16x216xbf16>
    %c0_1 = arith.constant 0 : index
    %c0_2 = arith.constant 0 : index
    %c0_3 = arith.constant 0 : index
    %1 = vector.load %arg2[%c0_1, %c0_2, %c0_3] : memref<1x216x64xbf16, #tpu.memory_space<vmem>>, vector<1x216x64xbf16>
    %2 = vector.shape_cast %1 : vector<1x216x64xbf16> to vector<216x64xbf16>
    %cst = arith.constant dense<0.000000e+00> : vector<16x64xf32>
    %3 = tpu.matmul %0, %2, %cst {dimension_numbers = #tpu.dot_dimension_numbers<[1], [0], [0], [1], [0, 0, 1, 1], [], []>} : vector<16x216xbf16>, vector<216x64xbf16>, vector<16x64xf32> -> vector<16x64xf32>
    %c0_4 = arith.constant 0 : index
    %c0_5 = arith.constant 0 : index
    %4 = vector.load %arg3[%c0_4, %c0_5] : memref<16x1xf32, #tpu.memory_space<vmem>>, vector<16x1xf32>
    %5 = vector.broadcast %4 : vector<16x1xf32> to vector<16x64xf32>
    %6 = arith.addf %3, %5 : vector<16x64xf32>
    %cst_6 = arith.constant 0.000000e+00 : f32
    %7 = vector.broadcast %cst_6 : f32 to vector<16x64xf32>
    %8 = arith.cmpf ogt, %6, %7 : vector<16x64xf32>
    %cst_7 = arith.constant 1.000000e-01 : f32
    %9 = vector.broadcast %cst_7 : f32 to vector<16x64xf32>
    %10 = arith.mulf %9, %6 : vector<16x64xf32>
    %11 = arith.select %8, %6, %10 : vector<16x64xi1>, vector<16x64xf32>
    %c0_8 = arith.constant 0 : index
    %c0_9 = arith.constant 0 : index
    %c0_10 = arith.constant 0 : index
    %12 = vector.load %arg4[%c0_8, %c0_9, %c0_10] : memref<1x16x64xf32, #tpu.memory_space<vmem>>, vector<1x16x64xf32>
    %13 = vector.shape_cast %12 : vector<1x16x64xf32> to vector<16x64xf32>
    %14 = vector.shape_cast %11 : vector<16x64xf32> to vector<1x16x64xf32>
    tpu.vector_store %arg4[%c0_8, %c0_9, %c0_10], %14 {strides = array<i32>} : memref<1x16x64xf32, #tpu.memory_space<vmem>>, vector<1x16x64xf32>,
    return
  }
  func.func @transform_0(%arg0: i32) -> (i32, i32) {
    %c0_i32 = arith.constant 0 : i32
    %c0_i32_0 = arith.constant 0 : i32
    %c0_i32_1 = arith.constant 0 : i32
    return %c0_i32, %c0_i32_0 : i32, i32
  }
  func.func @transform_1(%arg0: i32) -> (i32, i32, i32) {
    %c0_i32 = arith.constant 0 : i32
    %c0_i32_0 = arith.constant 0 : i32
    %c0_i32_1 = arith.constant 0 : i32
    return %arg0, %c0_i32, %c0_i32_0 : i32, i32, i32
  }
  func.func @transform_2(%arg0: i32) -> (i32, i32) {
    %c0_i32 = arith.constant 0 : i32
    %c0_i32_0 = arith.constant 0 : i32
    %c0_i32_1 = arith.constant 0 : i32
    return %c0_i32, %c0_i32_0 : i32, i32
  }
  func.func @transform_3(%arg0: i32) -> (i32, i32, i32) {
    %c0_i32 = arith.constant 0 : i32
    %c0_i32_0 = arith.constant 0 : i32
    %c0_i32_1 = arith.constant 0 : i32
    return %arg0, %c0_i32, %c0_i32_0 : i32, i32, i32
  }
}

module attributes {stable_mosaic.version = 11 : i64} {
  func.func @_conv_gemm_kernel(%arg0: i32, %arg1: memref<16x16xbf16, #tpu.memory_space<vmem>>, %arg2: memref<1x16x64xbf16, #tpu.memory_space<vmem>>, %arg3: memref<16x1xf32, #tpu.memory_space<vmem>>, %arg4: memref<1x16x64xf32, #tpu.memory_space<vmem>>) attributes {dimension_semantics = [#tpu.dimension_semantics<parallel>], iteration_bounds = array<i64: 2>, scalar_prefetch = 0 : i64, scratch_operands = 0 : i64, tpu.core_type = #tpu.core_type<tc>, window_params = [{pipeline_mode = #tpu.pipeline_mode<synchronous>, transform_indices = @transform_0, window_bounds = array<i64: 16, 16>}, {transform_indices = @transform_1, window_bounds = array<i64: 1, 16, 64>}, {pipeline_mode = #tpu.pipeline_mode<synchronous>, transform_indices = @transform_2, window_bounds = array<i64: 16, 1>}, {transform_indices = @transform_3, window_bounds = array<i64: 1, 16, 64>}]} {
    %c0 = arith.constant 0 : index
    %c0_0 = arith.constant 0 : index
    %0 = vector.load %arg1[%c0, %c0_0] : memref<16x16xbf16, #tpu.memory_space<vmem>>, vector<16x16xbf16>
    %c0_1 = arith.constant 0 : index
    %c0_2 = arith.constant 0 : index
    %c0_3 = arith.constant 0 : index
    %1 = vector.load %arg2[%c0_1, %c0_2, %c0_3] : memref<1x16x64xbf16, #tpu.memory_space<vmem>>, vector<1x16x64xbf16>
    %2 = vector.shape_cast %1 : vector<1x16x64xbf16> to vector<16x64xbf16>
    %cst = arith.constant dense<0.000000e+00> : vector<16x64xf32>
    %3 = tpu.matmul %0, %2, %cst {dimension_numbers = #tpu.dot_dimension_numbers<[1], [0], [0], [1], [0, 0, 1, 1], [], []>} : vector<16x16xbf16>, vector<16x64xbf16>, vector<16x64xf32> -> vector<16x64xf32>
    %c0_4 = arith.constant 0 : index
    %c0_5 = arith.constant 0 : index
    %4 = vector.load %arg3[%c0_4, %c0_5] : memref<16x1xf32, #tpu.memory_space<vmem>>, vector<16x1xf32>
    %5 = vector.broadcast %4 : vector<16x1xf32> to vector<16x64xf32>
    %6 = arith.addf %3, %5 : vector<16x64xf32>
    %c0_6 = arith.constant 0 : index
    %c0_7 = arith.constant 0 : index
    %c0_8 = arith.constant 0 : index
    %7 = vector.load %arg4[%c0_6, %c0_7, %c0_8] : memref<1x16x64xf32, #tpu.memory_space<vmem>>, vector<1x16x64xf32>
    %8 = vector.shape_cast %7 : vector<1x16x64xf32> to vector<16x64xf32>
    %9 = vector.shape_cast %6 : vector<16x64xf32> to vector<1x16x64xf32>
    tpu.vector_store %arg4[%c0_6, %c0_7, %c0_8], %9 {strides = array<i32>} : memref<1x16x64xf32, #tpu.memory_space<vmem>>, vector<1x16x64xf32>,
    return
  }
  func.func @transform_0(%arg0: i32) -> (i32, i32) {
    %c0_i32 = arith.constant 0 : i32
    %c0_i32_0 = arith.constant 0 : i32
    %c0_i32_1 = arith.constant 0 : i32
    return %c0_i32, %c0_i32_0 : i32, i32
  }
  func.func @transform_1(%arg0: i32) -> (i32, i32, i32) {
    %c0_i32 = arith.constant 0 : i32
    %c0_i32_0 = arith.constant 0 : i32
    %c0_i32_1 = arith.constant 0 : i32
    return %arg0, %c0_i32, %c0_i32_0 : i32, i32, i32
  }
  func.func @transform_2(%arg0: i32) -> (i32, i32) {
    %c0_i32 = arith.constant 0 : i32
    %c0_i32_0 = arith.constant 0 : i32
    %c0_i32_1 = arith.constant 0 : i32
    return %c0_i32, %c0_i32_0 : i32, i32
  }
  func.func @transform_3(%arg0: i32) -> (i32, i32, i32) {
    %c0_i32 = arith.constant 0 : i32
    %c0_i32_0 = arith.constant 0 : i32
    %c0_i32_1 = arith.constant 0 : i32
    return %arg0, %c0_i32, %c0_i32_0 : i32, i32, i32
  }
}

module attributes {stable_mosaic.version = 11 : i64} {
  func.func @_conv_gemm_kernel(%arg0: i32, %arg1: memref<16x32xbf16, #tpu.memory_space<vmem>>, %arg2: memref<1x32x16xbf16, #tpu.memory_space<vmem>>, %arg3: memref<16x1xf32, #tpu.memory_space<vmem>>, %arg4: memref<1x16x16xf32, #tpu.memory_space<vmem>>) attributes {dimension_semantics = [#tpu.dimension_semantics<parallel>], iteration_bounds = array<i64: 2>, scalar_prefetch = 0 : i64, scratch_operands = 0 : i64, tpu.core_type = #tpu.core_type<tc>, window_params = [{pipeline_mode = #tpu.pipeline_mode<synchronous>, transform_indices = @transform_0, window_bounds = array<i64: 16, 32>}, {transform_indices = @transform_1, window_bounds = array<i64: 1, 32, 16>}, {pipeline_mode = #tpu.pipeline_mode<synchronous>, transform_indices = @transform_2, window_bounds = array<i64: 16, 1>}, {transform_indices = @transform_3, window_bounds = array<i64: 1, 16, 16>}]} {
    %c0 = arith.constant 0 : index
    %c0_0 = arith.constant 0 : index
    %0 = vector.load %arg1[%c0, %c0_0] : memref<16x32xbf16, #tpu.memory_space<vmem>>, vector<16x32xbf16>
    %c0_1 = arith.constant 0 : index
    %c0_2 = arith.constant 0 : index
    %c0_3 = arith.constant 0 : index
    %1 = vector.load %arg2[%c0_1, %c0_2, %c0_3] : memref<1x32x16xbf16, #tpu.memory_space<vmem>>, vector<1x32x16xbf16>
    %2 = vector.shape_cast %1 : vector<1x32x16xbf16> to vector<32x16xbf16>
    %cst = arith.constant dense<0.000000e+00> : vector<16x16xf32>
    %3 = tpu.matmul %0, %2, %cst {dimension_numbers = #tpu.dot_dimension_numbers<[1], [0], [0], [1], [0, 0, 1, 1], [], []>} : vector<16x32xbf16>, vector<32x16xbf16>, vector<16x16xf32> -> vector<16x16xf32>
    %c0_4 = arith.constant 0 : index
    %c0_5 = arith.constant 0 : index
    %4 = vector.load %arg3[%c0_4, %c0_5] : memref<16x1xf32, #tpu.memory_space<vmem>>, vector<16x1xf32>
    %5 = vector.broadcast %4 : vector<16x1xf32> to vector<16x16xf32>
    %6 = arith.addf %3, %5 : vector<16x16xf32>
    %c0_6 = arith.constant 0 : index
    %c0_7 = arith.constant 0 : index
    %c0_8 = arith.constant 0 : index
    %7 = vector.load %arg4[%c0_6, %c0_7, %c0_8] : memref<1x16x16xf32, #tpu.memory_space<vmem>>, vector<1x16x16xf32>
    %8 = vector.shape_cast %7 : vector<1x16x16xf32> to vector<16x16xf32>
    %9 = vector.shape_cast %6 : vector<16x16xf32> to vector<1x16x16xf32>
    tpu.vector_store %arg4[%c0_6, %c0_7, %c0_8], %9 {strides = array<i32>} : memref<1x16x16xf32, #tpu.memory_space<vmem>>, vector<1x16x16xf32>,
    return
  }
  func.func @transform_0(%arg0: i32) -> (i32, i32) {
    %c0_i32 = arith.constant 0 : i32
    %c0_i32_0 = arith.constant 0 : i32
    %c0_i32_1 = arith.constant 0 : i32
    return %c0_i32, %c0_i32_0 : i32, i32
  }
  func.func @transform_1(%arg0: i32) -> (i32, i32, i32) {
    %c0_i32 = arith.constant 0 : i32
    %c0_i32_0 = arith.constant 0 : i32
    %c0_i32_1 = arith.constant 0 : i32
    return %arg0, %c0_i32, %c0_i32_0 : i32, i32, i32
  }
  func.func @transform_2(%arg0: i32) -> (i32, i32) {
    %c0_i32 = arith.constant 0 : i32
    %c0_i32_0 = arith.constant 0 : i32
    %c0_i32_1 = arith.constant 0 : i32
    return %c0_i32, %c0_i32_0 : i32, i32
  }
  func.func @transform_3(%arg0: i32) -> (i32, i32, i32) {
    %c0_i32 = arith.constant 0 : i32
    %c0_i32_0 = arith.constant 0 : i32
    %c0_i32_1 = arith.constant 0 : i32
    return %arg0, %c0_i32, %c0_i32_0 : i32, i32, i32
  }
}

module attributes {stable_mosaic.version = 11 : i64} {
  func.func @_yolo_kernel(%arg0: i32, %arg1: memref<1x2x8x64xf32, #tpu.memory_space<vmem>>, %arg2: memref<2x64xf32, #tpu.memory_space<vmem>>, %arg3: memref<1x7x128xf32, #tpu.memory_space<vmem>>) attributes {dimension_semantics = [#tpu.dimension_semantics<parallel>], iteration_bounds = array<i64: 2>, scalar_prefetch = 0 : i64, scratch_operands = 0 : i64, tpu.core_type = #tpu.core_type<tc>, window_params = [{transform_indices = @transform_0, window_bounds = array<i64: 1, 2, 8, 64>}, {pipeline_mode = #tpu.pipeline_mode<synchronous>, transform_indices = @transform_1, window_bounds = array<i64: 2, 64>}, {transform_indices = @transform_2, window_bounds = array<i64: 1, 7, 128>}]} {
    %c0 = arith.constant 0 : index
    %c0_0 = arith.constant 0 : index
    %0 = vector.load %arg2[%c0, %c0_0] : memref<2x64xf32, #tpu.memory_space<vmem>>, vector<1x64xf32>
    %c1 = arith.constant 1 : index
    %c0_1 = arith.constant 0 : index
    %1 = vector.load %arg2[%c1, %c0_1] : memref<2x64xf32, #tpu.memory_space<vmem>>, vector<1x64xf32>
    %c0_2 = arith.constant 0 : index
    %c0_3 = arith.constant 0 : index
    %c0_4 = arith.constant 0 : index
    %c0_5 = arith.constant 0 : index
    %2 = vector.load %arg1[%c0_2, %c0_3, %c0_4, %c0_5] : memref<1x2x8x64xf32, #tpu.memory_space<vmem>>, vector<1x1x8x64xf32>
    %3 = vector.shape_cast %2 : vector<1x1x8x64xf32> to vector<8x64xf32>
    %4 = vector.extract_strided_slice %3 {offsets = [0, 0], sizes = [1, 64], strides = [1, 1]} : vector<8x64xf32> to vector<1x64xf32>
    %5 = vector.extract_strided_slice %3 {offsets = [1, 0], sizes = [1, 64], strides = [1, 1]} : vector<8x64xf32> to vector<1x64xf32>
    %6 = vector.extract_strided_slice %3 {offsets = [2, 0], sizes = [1, 64], strides = [1, 1]} : vector<8x64xf32> to vector<1x64xf32>
    %7 = vector.extract_strided_slice %3 {offsets = [3, 0], sizes = [1, 64], strides = [1, 1]} : vector<8x64xf32> to vector<1x64xf32>
    %8 = vector.extract_strided_slice %3 {offsets = [4, 0], sizes = [1, 64], strides = [1, 1]} : vector<8x64xf32> to vector<1x64xf32>
    %9 = vector.extract_strided_slice %3 {offsets = [5, 0], sizes = [3, 64], strides = [1, 1]} : vector<8x64xf32> to vector<3x64xf32>
    %cst = arith.constant 0.000000e+00 : f32
    %10 = vector.broadcast %cst : f32 to vector<1x64xf32>
    %11 = arith.subf %10, %4 : vector<1x64xf32>
    %12 = math.exp %11 : vector<1x64xf32>
    %cst_6 = arith.constant 1.000000e+00 : f32
    %13 = vector.broadcast %cst_6 : f32 to vector<1x64xf32>
    %14 = arith.addf %13, %12 : vector<1x64xf32>
    %cst_7 = arith.constant 1.000000e+00 : f32
    %15 = vector.broadcast %cst_7 : f32 to vector<1x64xf32>
    %16 = arith.divf %15, %14 : vector<1x64xf32>
    %cst_8 = arith.constant 1.100000e+00 : f32
    %17 = vector.broadcast %cst_8 : f32 to vector<1x64xf32>
    %18 = arith.mulf %16, %17 : vector<1x64xf32>
    %cst_9 = arith.constant 5.000000e-02 : f32
    %19 = vector.broadcast %cst_9 : f32 to vector<1x64xf32>
    %20 = arith.subf %18, %19 : vector<1x64xf32>
    %21 = arith.addf %20, %0 : vector<1x64xf32>
    %cst_10 = arith.constant 8.000000e+00 : f32
    %22 = vector.broadcast %cst_10 : f32 to vector<1x64xf32>
    %23 = arith.divf %21, %22 : vector<1x64xf32>
    %cst_11 = arith.constant 0.000000e+00 : f32
    %24 = vector.broadcast %cst_11 : f32 to vector<1x64xf32>
    %25 = arith.subf %24, %5 : vector<1x64xf32>
    %26 = math.exp %25 : vector<1x64xf32>
    %cst_12 = arith.constant 1.000000e+00 : f32
    %27 = vector.broadcast %cst_12 : f32 to vector<1x64xf32>
    %28 = arith.addf %27, %26 : vector<1x64xf32>
    %cst_13 = arith.constant 1.000000e+00 : f32
    %29 = vector.broadcast %cst_13 : f32 to vector<1x64xf32>
    %30 = arith.divf %29, %28 : vector<1x64xf32>
    %cst_14 = arith.constant 1.100000e+00 : f32
    %31 = vector.broadcast %cst_14 : f32 to vector<1x64xf32>
    %32 = arith.mulf %30, %31 : vector<1x64xf32>
    %cst_15 = arith.constant 5.000000e-02 : f32
    %33 = vector.broadcast %cst_15 : f32 to vector<1x64xf32>
    %34 = arith.subf %32, %33 : vector<1x64xf32>
    %35 = arith.addf %34, %1 : vector<1x64xf32>
    %cst_16 = arith.constant 8.000000e+00 : f32
    %36 = vector.broadcast %cst_16 : f32 to vector<1x64xf32>
    %37 = arith.divf %35, %36 : vector<1x64xf32>
    %cst_17 = arith.constant 8.000000e+01 : f32
    %38 = vector.broadcast %cst_17 : f32 to vector<1x64xf32>
    %39 = arith.minimumf %6, %38 : vector<1x64xf32>
    %40 = math.exp %39 : vector<1x64xf32>
    %cst_18 = arith.constant 8.000000e+00 : f32
    %41 = vector.broadcast %cst_18 : f32 to vector<1x64xf32>
    %42 = arith.mulf %40, %41 : vector<1x64xf32>
    %cst_19 = arith.constant 8.000000e+00 : f32
    %43 = vector.broadcast %cst_19 : f32 to vector<1x64xf32>
    %44 = arith.divf %42, %43 : vector<1x64xf32>
    %cst_20 = arith.constant 8.000000e+01 : f32
    %45 = vector.broadcast %cst_20 : f32 to vector<1x64xf32>
    %46 = arith.minimumf %7, %45 : vector<1x64xf32>
    %47 = math.exp %46 : vector<1x64xf32>
    %cst_21 = arith.constant 1.200000e+01 : f32
    %48 = vector.broadcast %cst_21 : f32 to vector<1x64xf32>
    %49 = arith.mulf %47, %48 : vector<1x64xf32>
    %cst_22 = arith.constant 8.000000e+00 : f32
    %50 = vector.broadcast %cst_22 : f32 to vector<1x64xf32>
    %51 = arith.divf %49, %50 : vector<1x64xf32>
    %cst_23 = arith.constant 0.000000e+00 : f32
    %52 = vector.broadcast %cst_23 : f32 to vector<1x64xf32>
    %53 = arith.subf %52, %8 : vector<1x64xf32>
    %54 = math.exp %53 : vector<1x64xf32>
    %cst_24 = arith.constant 1.000000e+00 : f32
    %55 = vector.broadcast %cst_24 : f32 to vector<1x64xf32>
    %56 = arith.addf %55, %54 : vector<1x64xf32>
    %cst_25 = arith.constant 1.000000e+00 : f32
    %57 = vector.broadcast %cst_25 : f32 to vector<1x64xf32>
    %58 = arith.divf %57, %56 : vector<1x64xf32>
    %cst_26 = arith.constant 0.000000e+00 : f32
    %59 = vector.broadcast %cst_26 : f32 to vector<3x64xf32>
    %60 = arith.subf %59, %9 : vector<3x64xf32>
    %61 = math.exp %60 : vector<3x64xf32>
    %cst_27 = arith.constant 1.000000e+00 : f32
    %62 = vector.broadcast %cst_27 : f32 to vector<3x64xf32>
    %63 = arith.addf %62, %61 : vector<3x64xf32>
    %cst_28 = arith.constant 1.000000e+00 : f32
    %64 = vector.broadcast %cst_28 : f32 to vector<3x64xf32>
    %65 = arith.divf %64, %63 : vector<3x64xf32>
    %cst_29 = arith.constant 5.000000e-01 : f32
    %66 = vector.broadcast %cst_29 : f32 to vector<1x64xf32>
    %67 = arith.mulf %66, %44 : vector<1x64xf32>
    %68 = arith.subf %23, %67 : vector<1x64xf32>
    %cst_30 = arith.constant 5.000000e-01 : f32
    %69 = vector.broadcast %cst_30 : f32 to vector<1x64xf32>
    %70 = arith.mulf %69, %51 : vector<1x64xf32>
    %71 = arith.subf %37, %70 : vector<1x64xf32>
    %72 = arith.addf %68, %44 : vector<1x64xf32>
    %73 = arith.addf %71, %51 : vector<1x64xf32>
    %74 = vector.broadcast %58 : vector<1x64xf32> to vector<3x64xf32>
    %75 = arith.mulf %65, %74 : vector<3x64xf32>
    %76 = tpu.concatenate %68, %71, %72, %73, %75 in 0 : vector<1x64xf32>, vector<1x64xf32>, vector<1x64xf32>, vector<1x64xf32>, vector<3x64xf32> -> vector<7x64xf32>
    %c0_31 = arith.constant 0 : index
    %c1_32 = arith.constant 1 : index
    %c0_33 = arith.constant 0 : index
    %c0_34 = arith.constant 0 : index
    %77 = vector.load %arg1[%c0_31, %c1_32, %c0_33, %c0_34] : memref<1x2x8x64xf32, #tpu.memory_space<vmem>>, vector<1x1x8x64xf32>
    %78 = vector.shape_cast %77 : vector<1x1x8x64xf32> to vector<8x64xf32>
    %79 = vector.extract_strided_slice %78 {offsets = [0, 0], sizes = [1, 64], strides = [1, 1]} : vector<8x64xf32> to vector<1x64xf32>
    %80 = vector.extract_strided_slice %78 {offsets = [1, 0], sizes = [1, 64], strides = [1, 1]} : vector<8x64xf32> to vector<1x64xf32>
    %81 = vector.extract_strided_slice %78 {offsets = [2, 0], sizes = [1, 64], strides = [1, 1]} : vector<8x64xf32> to vector<1x64xf32>
    %82 = vector.extract_strided_slice %78 {offsets = [3, 0], sizes = [1, 64], strides = [1, 1]} : vector<8x64xf32> to vector<1x64xf32>
    %83 = vector.extract_strided_slice %78 {offsets = [4, 0], sizes = [1, 64], strides = [1, 1]} : vector<8x64xf32> to vector<1x64xf32>
    %84 = vector.extract_strided_slice %78 {offsets = [5, 0], sizes = [3, 64], strides = [1, 1]} : vector<8x64xf32> to vector<3x64xf32>
    %cst_35 = arith.constant 0.000000e+00 : f32
    %85 = vector.broadcast %cst_35 : f32 to vector<1x64xf32>
    %86 = arith.subf %85, %79 : vector<1x64xf32>
    %87 = math.exp %86 : vector<1x64xf32>
    %cst_36 = arith.constant 1.000000e+00 : f32
    %88 = vector.broadcast %cst_36 : f32 to vector<1x64xf32>
    %89 = arith.addf %88, %87 : vector<1x64xf32>
    %cst_37 = arith.constant 1.000000e+00 : f32
    %90 = vector.broadcast %cst_37 : f32 to vector<1x64xf32>
    %91 = arith.divf %90, %89 : vector<1x64xf32>
    %cst_38 = arith.constant 1.100000e+00 : f32
    %92 = vector.broadcast %cst_38 : f32 to vector<1x64xf32>
    %93 = arith.mulf %91, %92 : vector<1x64xf32>
    %cst_39 = arith.constant 5.000000e-02 : f32
    %94 = vector.broadcast %cst_39 : f32 to vector<1x64xf32>
    %95 = arith.subf %93, %94 : vector<1x64xf32>
    %96 = arith.addf %95, %0 : vector<1x64xf32>
    %cst_40 = arith.constant 8.000000e+00 : f32
    %97 = vector.broadcast %cst_40 : f32 to vector<1x64xf32>
    %98 = arith.divf %96, %97 : vector<1x64xf32>
    %cst_41 = arith.constant 0.000000e+00 : f32
    %99 = vector.broadcast %cst_41 : f32 to vector<1x64xf32>
    %100 = arith.subf %99, %80 : vector<1x64xf32>
    %101 = math.exp %100 : vector<1x64xf32>
    %cst_42 = arith.constant 1.000000e+00 : f32
    %102 = vector.broadcast %cst_42 : f32 to vector<1x64xf32>
    %103 = arith.addf %102, %101 : vector<1x64xf32>
    %cst_43 = arith.constant 1.000000e+00 : f32
    %104 = vector.broadcast %cst_43 : f32 to vector<1x64xf32>
    %105 = arith.divf %104, %103 : vector<1x64xf32>
    %cst_44 = arith.constant 1.100000e+00 : f32
    %106 = vector.broadcast %cst_44 : f32 to vector<1x64xf32>
    %107 = arith.mulf %105, %106 : vector<1x64xf32>
    %cst_45 = arith.constant 5.000000e-02 : f32
    %108 = vector.broadcast %cst_45 : f32 to vector<1x64xf32>
    %109 = arith.subf %107, %108 : vector<1x64xf32>
    %110 = arith.addf %109, %1 : vector<1x64xf32>
    %cst_46 = arith.constant 8.000000e+00 : f32
    %111 = vector.broadcast %cst_46 : f32 to vector<1x64xf32>
    %112 = arith.divf %110, %111 : vector<1x64xf32>
    %cst_47 = arith.constant 8.000000e+01 : f32
    %113 = vector.broadcast %cst_47 : f32 to vector<1x64xf32>
    %114 = arith.minimumf %81, %113 : vector<1x64xf32>
    %115 = math.exp %114 : vector<1x64xf32>
    %cst_48 = arith.constant 1.600000e+01 : f32
    %116 = vector.broadcast %cst_48 : f32 to vector<1x64xf32>
    %117 = arith.mulf %115, %116 : vector<1x64xf32>
    %cst_49 = arith.constant 8.000000e+00 : f32
    %118 = vector.broadcast %cst_49 : f32 to vector<1x64xf32>
    %119 = arith.divf %117, %118 : vector<1x64xf32>
    %cst_50 = arith.constant 8.000000e+01 : f32
    %120 = vector.broadcast %cst_50 : f32 to vector<1x64xf32>
    %121 = arith.minimumf %82, %120 : vector<1x64xf32>
    %122 = math.exp %121 : vector<1x64xf32>
    %cst_51 = arith.constant 2.400000e+01 : f32
    %123 = vector.broadcast %cst_51 : f32 to vector<1x64xf32>
    %124 = arith.mulf %122, %123 : vector<1x64xf32>
    %cst_52 = arith.constant 8.000000e+00 : f32
    %125 = vector.broadcast %cst_52 : f32 to vector<1x64xf32>
    %126 = arith.divf %124, %125 : vector<1x64xf32>
    %cst_53 = arith.constant 0.000000e+00 : f32
    %127 = vector.broadcast %cst_53 : f32 to vector<1x64xf32>
    %128 = arith.subf %127, %83 : vector<1x64xf32>
    %129 = math.exp %128 : vector<1x64xf32>
    %cst_54 = arith.constant 1.000000e+00 : f32
    %130 = vector.broadcast %cst_54 : f32 to vector<1x64xf32>
    %131 = arith.addf %130, %129 : vector<1x64xf32>
    %cst_55 = arith.constant 1.000000e+00 : f32
    %132 = vector.broadcast %cst_55 : f32 to vector<1x64xf32>
    %133 = arith.divf %132, %131 : vector<1x64xf32>
    %cst_56 = arith.constant 0.000000e+00 : f32
    %134 = vector.broadcast %cst_56 : f32 to vector<3x64xf32>
    %135 = arith.subf %134, %84 : vector<3x64xf32>
    %136 = math.exp %135 : vector<3x64xf32>
    %cst_57 = arith.constant 1.000000e+00 : f32
    %137 = vector.broadcast %cst_57 : f32 to vector<3x64xf32>
    %138 = arith.addf %137, %136 : vector<3x64xf32>
    %cst_58 = arith.constant 1.000000e+00 : f32
    %139 = vector.broadcast %cst_58 : f32 to vector<3x64xf32>
    %140 = arith.divf %139, %138 : vector<3x64xf32>
    %cst_59 = arith.constant 5.000000e-01 : f32
    %141 = vector.broadcast %cst_59 : f32 to vector<1x64xf32>
    %142 = arith.mulf %141, %119 : vector<1x64xf32>
    %143 = arith.subf %98, %142 : vector<1x64xf32>
    %cst_60 = arith.constant 5.000000e-01 : f32
    %144 = vector.broadcast %cst_60 : f32 to vector<1x64xf32>
    %145 = arith.mulf %144, %126 : vector<1x64xf32>
    %146 = arith.subf %112, %145 : vector<1x64xf32>
    %147 = arith.addf %143, %119 : vector<1x64xf32>
    %148 = arith.addf %146, %126 : vector<1x64xf32>
    %149 = vector.broadcast %133 : vector<1x64xf32> to vector<3x64xf32>
    %150 = arith.mulf %140, %149 : vector<3x64xf32>
    %151 = tpu.concatenate %143, %146, %147, %148, %150 in 0 : vector<1x64xf32>, vector<1x64xf32>, vector<1x64xf32>, vector<1x64xf32>, vector<3x64xf32> -> vector<7x64xf32>
    %152 = tpu.concatenate %76, %151 in 1 : vector<7x64xf32>, vector<7x64xf32> -> vector<7x128xf32>
    %c0_61 = arith.constant 0 : index
    %c0_62 = arith.constant 0 : index
    %c0_63 = arith.constant 0 : index
    %153 = vector.load %arg3[%c0_61, %c0_62, %c0_63] : memref<1x7x128xf32, #tpu.memory_space<vmem>>, vector<1x7x128xf32>
    %154 = vector.shape_cast %153 : vector<1x7x128xf32> to vector<7x128xf32>
    %155 = vector.shape_cast %152 : vector<7x128xf32> to vector<1x7x128xf32>
    tpu.vector_store %arg3[%c0_61, %c0_62, %c0_63], %155 {strides = array<i32>} : memref<1x7x128xf32, #tpu.memory_space<vmem>>, vector<1x7x128xf32>,
    return
  }
  func.func @transform_0(%arg0: i32) -> (i32, i32, i32, i32) {
    %c0_i32 = arith.constant 0 : i32
    %c0_i32_0 = arith.constant 0 : i32
    %c0_i32_1 = arith.constant 0 : i32
    %c0_i32_2 = arith.constant 0 : i32
    return %arg0, %c0_i32, %c0_i32_0, %c0_i32_1 : i32, i32, i32, i32
  }
  func.func @transform_1(%arg0: i32) -> (i32, i32) {
    %c0_i32 = arith.constant 0 : i32
    %c0_i32_0 = arith.constant 0 : i32
    %c0_i32_1 = arith.constant 0 : i32
    return %c0_i32, %c0_i32_0 : i32, i32
  }
  func.func @transform_2(%arg0: i32) -> (i32, i32, i32) {
    %c0_i32 = arith.constant 0 : i32
    %c0_i32_0 = arith.constant 0 : i32
    %c0_i32_1 = arith.constant 0 : i32
    return %arg0, %c0_i32, %c0_i32_0 : i32, i32, i32
  }
}

module attributes {stable_mosaic.version = 11 : i64} {
  func.func @_yolo_kernel(%arg0: i32, %arg1: memref<1x2x8x16xf32, #tpu.memory_space<vmem>>, %arg2: memref<2x16xf32, #tpu.memory_space<vmem>>, %arg3: memref<1x7x32xf32, #tpu.memory_space<vmem>>) attributes {dimension_semantics = [#tpu.dimension_semantics<parallel>], iteration_bounds = array<i64: 2>, scalar_prefetch = 0 : i64, scratch_operands = 0 : i64, tpu.core_type = #tpu.core_type<tc>, window_params = [{transform_indices = @transform_0, window_bounds = array<i64: 1, 2, 8, 16>}, {pipeline_mode = #tpu.pipeline_mode<synchronous>, transform_indices = @transform_1, window_bounds = array<i64: 2, 16>}, {transform_indices = @transform_2, window_bounds = array<i64: 1, 7, 32>}]} {
    %c0 = arith.constant 0 : index
    %c0_0 = arith.constant 0 : index
    %0 = vector.load %arg2[%c0, %c0_0] : memref<2x16xf32, #tpu.memory_space<vmem>>, vector<1x16xf32>
    %c1 = arith.constant 1 : index
    %c0_1 = arith.constant 0 : index
    %1 = vector.load %arg2[%c1, %c0_1] : memref<2x16xf32, #tpu.memory_space<vmem>>, vector<1x16xf32>
    %c0_2 = arith.constant 0 : index
    %c0_3 = arith.constant 0 : index
    %c0_4 = arith.constant 0 : index
    %c0_5 = arith.constant 0 : index
    %2 = vector.load %arg1[%c0_2, %c0_3, %c0_4, %c0_5] : memref<1x2x8x16xf32, #tpu.memory_space<vmem>>, vector<1x1x8x16xf32>
    %3 = vector.shape_cast %2 : vector<1x1x8x16xf32> to vector<8x16xf32>
    %4 = vector.extract_strided_slice %3 {offsets = [0, 0], sizes = [1, 16], strides = [1, 1]} : vector<8x16xf32> to vector<1x16xf32>
    %5 = vector.extract_strided_slice %3 {offsets = [1, 0], sizes = [1, 16], strides = [1, 1]} : vector<8x16xf32> to vector<1x16xf32>
    %6 = vector.extract_strided_slice %3 {offsets = [2, 0], sizes = [1, 16], strides = [1, 1]} : vector<8x16xf32> to vector<1x16xf32>
    %7 = vector.extract_strided_slice %3 {offsets = [3, 0], sizes = [1, 16], strides = [1, 1]} : vector<8x16xf32> to vector<1x16xf32>
    %8 = vector.extract_strided_slice %3 {offsets = [4, 0], sizes = [1, 16], strides = [1, 1]} : vector<8x16xf32> to vector<1x16xf32>
    %9 = vector.extract_strided_slice %3 {offsets = [5, 0], sizes = [3, 16], strides = [1, 1]} : vector<8x16xf32> to vector<3x16xf32>
    %cst = arith.constant 0.000000e+00 : f32
    %10 = vector.broadcast %cst : f32 to vector<1x16xf32>
    %11 = arith.subf %10, %4 : vector<1x16xf32>
    %12 = math.exp %11 : vector<1x16xf32>
    %cst_6 = arith.constant 1.000000e+00 : f32
    %13 = vector.broadcast %cst_6 : f32 to vector<1x16xf32>
    %14 = arith.addf %13, %12 : vector<1x16xf32>
    %cst_7 = arith.constant 1.000000e+00 : f32
    %15 = vector.broadcast %cst_7 : f32 to vector<1x16xf32>
    %16 = arith.divf %15, %14 : vector<1x16xf32>
    %cst_8 = arith.constant 1.050000e+00 : f32
    %17 = vector.broadcast %cst_8 : f32 to vector<1x16xf32>
    %18 = arith.mulf %16, %17 : vector<1x16xf32>
    %cst_9 = arith.constant 2.500000e-02 : f32
    %19 = vector.broadcast %cst_9 : f32 to vector<1x16xf32>
    %20 = arith.subf %18, %19 : vector<1x16xf32>
    %21 = arith.addf %20, %0 : vector<1x16xf32>
    %cst_10 = arith.constant 4.000000e+00 : f32
    %22 = vector.broadcast %cst_10 : f32 to vector<1x16xf32>
    %23 = arith.divf %21, %22 : vector<1x16xf32>
    %cst_11 = arith.constant 0.000000e+00 : f32
    %24 = vector.broadcast %cst_11 : f32 to vector<1x16xf32>
    %25 = arith.subf %24, %5 : vector<1x16xf32>
    %26 = math.exp %25 : vector<1x16xf32>
    %cst_12 = arith.constant 1.000000e+00 : f32
    %27 = vector.broadcast %cst_12 : f32 to vector<1x16xf32>
    %28 = arith.addf %27, %26 : vector<1x16xf32>
    %cst_13 = arith.constant 1.000000e+00 : f32
    %29 = vector.broadcast %cst_13 : f32 to vector<1x16xf32>
    %30 = arith.divf %29, %28 : vector<1x16xf32>
    %cst_14 = arith.constant 1.050000e+00 : f32
    %31 = vector.broadcast %cst_14 : f32 to vector<1x16xf32>
    %32 = arith.mulf %30, %31 : vector<1x16xf32>
    %cst_15 = arith.constant 2.500000e-02 : f32
    %33 = vector.broadcast %cst_15 : f32 to vector<1x16xf32>
    %34 = arith.subf %32, %33 : vector<1x16xf32>
    %35 = arith.addf %34, %1 : vector<1x16xf32>
    %cst_16 = arith.constant 4.000000e+00 : f32
    %36 = vector.broadcast %cst_16 : f32 to vector<1x16xf32>
    %37 = arith.divf %35, %36 : vector<1x16xf32>
    %cst_17 = arith.constant 8.000000e+01 : f32
    %38 = vector.broadcast %cst_17 : f32 to vector<1x16xf32>
    %39 = arith.minimumf %6, %38 : vector<1x16xf32>
    %40 = math.exp %39 : vector<1x16xf32>
    %cst_18 = arith.constant 1.000000e+00 : f32
    %41 = vector.broadcast %cst_18 : f32 to vector<1x16xf32>
    %42 = arith.mulf %40, %41 : vector<1x16xf32>
    %cst_19 = arith.constant 4.000000e+00 : f32
    %43 = vector.broadcast %cst_19 : f32 to vector<1x16xf32>
    %44 = arith.divf %42, %43 : vector<1x16xf32>
    %cst_20 = arith.constant 8.000000e+01 : f32
    %45 = vector.broadcast %cst_20 : f32 to vector<1x16xf32>
    %46 = arith.minimumf %7, %45 : vector<1x16xf32>
    %47 = math.exp %46 : vector<1x16xf32>
    %cst_21 = arith.constant 1.500000e+00 : f32
    %48 = vector.broadcast %cst_21 : f32 to vector<1x16xf32>
    %49 = arith.mulf %47, %48 : vector<1x16xf32>
    %cst_22 = arith.constant 4.000000e+00 : f32
    %50 = vector.broadcast %cst_22 : f32 to vector<1x16xf32>
    %51 = arith.divf %49, %50 : vector<1x16xf32>
    %cst_23 = arith.constant 0.000000e+00 : f32
    %52 = vector.broadcast %cst_23 : f32 to vector<1x16xf32>
    %53 = arith.subf %52, %8 : vector<1x16xf32>
    %54 = math.exp %53 : vector<1x16xf32>
    %cst_24 = arith.constant 1.000000e+00 : f32
    %55 = vector.broadcast %cst_24 : f32 to vector<1x16xf32>
    %56 = arith.addf %55, %54 : vector<1x16xf32>
    %cst_25 = arith.constant 1.000000e+00 : f32
    %57 = vector.broadcast %cst_25 : f32 to vector<1x16xf32>
    %58 = arith.divf %57, %56 : vector<1x16xf32>
    %cst_26 = arith.constant 0.000000e+00 : f32
    %59 = vector.broadcast %cst_26 : f32 to vector<3x16xf32>
    %60 = arith.subf %59, %9 : vector<3x16xf32>
    %61 = math.exp %60 : vector<3x16xf32>
    %cst_27 = arith.constant 1.000000e+00 : f32
    %62 = vector.broadcast %cst_27 : f32 to vector<3x16xf32>
    %63 = arith.addf %62, %61 : vector<3x16xf32>
    %cst_28 = arith.constant 1.000000e+00 : f32
    %64 = vector.broadcast %cst_28 : f32 to vector<3x16xf32>
    %65 = arith.divf %64, %63 : vector<3x16xf32>
    %cst_29 = arith.constant 5.000000e-01 : f32
    %66 = vector.broadcast %cst_29 : f32 to vector<1x16xf32>
    %67 = arith.mulf %66, %44 : vector<1x16xf32>
    %68 = arith.subf %23, %67 : vector<1x16xf32>
    %cst_30 = arith.constant 5.000000e-01 : f32
    %69 = vector.broadcast %cst_30 : f32 to vector<1x16xf32>
    %70 = arith.mulf %69, %51 : vector<1x16xf32>
    %71 = arith.subf %37, %70 : vector<1x16xf32>
    %72 = arith.addf %68, %44 : vector<1x16xf32>
    %73 = arith.addf %71, %51 : vector<1x16xf32>
    %74 = vector.broadcast %58 : vector<1x16xf32> to vector<3x16xf32>
    %75 = arith.mulf %65, %74 : vector<3x16xf32>
    %76 = tpu.concatenate %68, %71, %72, %73, %75 in 0 : vector<1x16xf32>, vector<1x16xf32>, vector<1x16xf32>, vector<1x16xf32>, vector<3x16xf32> -> vector<7x16xf32>
    %c0_31 = arith.constant 0 : index
    %c1_32 = arith.constant 1 : index
    %c0_33 = arith.constant 0 : index
    %c0_34 = arith.constant 0 : index
    %77 = vector.load %arg1[%c0_31, %c1_32, %c0_33, %c0_34] : memref<1x2x8x16xf32, #tpu.memory_space<vmem>>, vector<1x1x8x16xf32>
    %78 = vector.shape_cast %77 : vector<1x1x8x16xf32> to vector<8x16xf32>
    %79 = vector.extract_strided_slice %78 {offsets = [0, 0], sizes = [1, 16], strides = [1, 1]} : vector<8x16xf32> to vector<1x16xf32>
    %80 = vector.extract_strided_slice %78 {offsets = [1, 0], sizes = [1, 16], strides = [1, 1]} : vector<8x16xf32> to vector<1x16xf32>
    %81 = vector.extract_strided_slice %78 {offsets = [2, 0], sizes = [1, 16], strides = [1, 1]} : vector<8x16xf32> to vector<1x16xf32>
    %82 = vector.extract_strided_slice %78 {offsets = [3, 0], sizes = [1, 16], strides = [1, 1]} : vector<8x16xf32> to vector<1x16xf32>
    %83 = vector.extract_strided_slice %78 {offsets = [4, 0], sizes = [1, 16], strides = [1, 1]} : vector<8x16xf32> to vector<1x16xf32>
    %84 = vector.extract_strided_slice %78 {offsets = [5, 0], sizes = [3, 16], strides = [1, 1]} : vector<8x16xf32> to vector<3x16xf32>
    %cst_35 = arith.constant 0.000000e+00 : f32
    %85 = vector.broadcast %cst_35 : f32 to vector<1x16xf32>
    %86 = arith.subf %85, %79 : vector<1x16xf32>
    %87 = math.exp %86 : vector<1x16xf32>
    %cst_36 = arith.constant 1.000000e+00 : f32
    %88 = vector.broadcast %cst_36 : f32 to vector<1x16xf32>
    %89 = arith.addf %88, %87 : vector<1x16xf32>
    %cst_37 = arith.constant 1.000000e+00 : f32
    %90 = vector.broadcast %cst_37 : f32 to vector<1x16xf32>
    %91 = arith.divf %90, %89 : vector<1x16xf32>
    %cst_38 = arith.constant 1.050000e+00 : f32
    %92 = vector.broadcast %cst_38 : f32 to vector<1x16xf32>
    %93 = arith.mulf %91, %92 : vector<1x16xf32>
    %cst_39 = arith.constant 2.500000e-02 : f32
    %94 = vector.broadcast %cst_39 : f32 to vector<1x16xf32>
    %95 = arith.subf %93, %94 : vector<1x16xf32>
    %96 = arith.addf %95, %0 : vector<1x16xf32>
    %cst_40 = arith.constant 4.000000e+00 : f32
    %97 = vector.broadcast %cst_40 : f32 to vector<1x16xf32>
    %98 = arith.divf %96, %97 : vector<1x16xf32>
    %cst_41 = arith.constant 0.000000e+00 : f32
    %99 = vector.broadcast %cst_41 : f32 to vector<1x16xf32>
    %100 = arith.subf %99, %80 : vector<1x16xf32>
    %101 = math.exp %100 : vector<1x16xf32>
    %cst_42 = arith.constant 1.000000e+00 : f32
    %102 = vector.broadcast %cst_42 : f32 to vector<1x16xf32>
    %103 = arith.addf %102, %101 : vector<1x16xf32>
    %cst_43 = arith.constant 1.000000e+00 : f32
    %104 = vector.broadcast %cst_43 : f32 to vector<1x16xf32>
    %105 = arith.divf %104, %103 : vector<1x16xf32>
    %cst_44 = arith.constant 1.050000e+00 : f32
    %106 = vector.broadcast %cst_44 : f32 to vector<1x16xf32>
    %107 = arith.mulf %105, %106 : vector<1x16xf32>
    %cst_45 = arith.constant 2.500000e-02 : f32
    %108 = vector.broadcast %cst_45 : f32 to vector<1x16xf32>
    %109 = arith.subf %107, %108 : vector<1x16xf32>
    %110 = arith.addf %109, %1 : vector<1x16xf32>
    %cst_46 = arith.constant 4.000000e+00 : f32
    %111 = vector.broadcast %cst_46 : f32 to vector<1x16xf32>
    %112 = arith.divf %110, %111 : vector<1x16xf32>
    %cst_47 = arith.constant 8.000000e+01 : f32
    %113 = vector.broadcast %cst_47 : f32 to vector<1x16xf32>
    %114 = arith.minimumf %81, %113 : vector<1x16xf32>
    %115 = math.exp %114 : vector<1x16xf32>
    %cst_48 = arith.constant 2.000000e+00 : f32
    %116 = vector.broadcast %cst_48 : f32 to vector<1x16xf32>
    %117 = arith.mulf %115, %116 : vector<1x16xf32>
    %cst_49 = arith.constant 4.000000e+00 : f32
    %118 = vector.broadcast %cst_49 : f32 to vector<1x16xf32>
    %119 = arith.divf %117, %118 : vector<1x16xf32>
    %cst_50 = arith.constant 8.000000e+01 : f32
    %120 = vector.broadcast %cst_50 : f32 to vector<1x16xf32>
    %121 = arith.minimumf %82, %120 : vector<1x16xf32>
    %122 = math.exp %121 : vector<1x16xf32>
    %cst_51 = arith.constant 3.000000e+00 : f32
    %123 = vector.broadcast %cst_51 : f32 to vector<1x16xf32>
    %124 = arith.mulf %122, %123 : vector<1x16xf32>
    %cst_52 = arith.constant 4.000000e+00 : f32
    %125 = vector.broadcast %cst_52 : f32 to vector<1x16xf32>
    %126 = arith.divf %124, %125 : vector<1x16xf32>
    %cst_53 = arith.constant 0.000000e+00 : f32
    %127 = vector.broadcast %cst_53 : f32 to vector<1x16xf32>
    %128 = arith.subf %127, %83 : vector<1x16xf32>
    %129 = math.exp %128 : vector<1x16xf32>
    %cst_54 = arith.constant 1.000000e+00 : f32
    %130 = vector.broadcast %cst_54 : f32 to vector<1x16xf32>
    %131 = arith.addf %130, %129 : vector<1x16xf32>
    %cst_55 = arith.constant 1.000000e+00 : f32
    %132 = vector.broadcast %cst_55 : f32 to vector<1x16xf32>
    %133 = arith.divf %132, %131 : vector<1x16xf32>
    %cst_56 = arith.constant 0.000000e+00 : f32
    %134 = vector.broadcast %cst_56 : f32 to vector<3x16xf32>
    %135 = arith.subf %134, %84 : vector<3x16xf32>
    %136 = math.exp %135 : vector<3x16xf32>
    %cst_57 = arith.constant 1.000000e+00 : f32
    %137 = vector.broadcast %cst_57 : f32 to vector<3x16xf32>
    %138 = arith.addf %137, %136 : vector<3x16xf32>
    %cst_58 = arith.constant 1.000000e+00 : f32
    %139 = vector.broadcast %cst_58 : f32 to vector<3x16xf32>
    %140 = arith.divf %139, %138 : vector<3x16xf32>
    %cst_59 = arith.constant 5.000000e-01 : f32
    %141 = vector.broadcast %cst_59 : f32 to vector<1x16xf32>
    %142 = arith.mulf %141, %119 : vector<1x16xf32>
    %143 = arith.subf %98, %142 : vector<1x16xf32>
    %cst_60 = arith.constant 5.000000e-01 : f32
    %144 = vector.broadcast %cst_60 : f32 to vector<1x16xf32>
    %145 = arith.mulf %144, %126 : vector<1x16xf32>
    %146 = arith.subf %112, %145 : vector<1x16xf32>
    %147 = arith.addf %143, %119 : vector<1x16xf32>
    %148 = arith.addf %146, %126 : vector<1x16xf32>
    %149 = vector.broadcast %133 : vector<1x16xf32> to vector<3x16xf32>
    %150 = arith.mulf %140, %149 : vector<3x16xf32>
    %151 = tpu.concatenate %143, %146, %147, %148, %150 in 0 : vector<1x16xf32>, vector<1x16xf32>, vector<1x16xf32>, vector<1x16xf32>, vector<3x16xf32> -> vector<7x16xf32>
    %152 = tpu.concatenate %76, %151 in 1 : vector<7x16xf32>, vector<7x16xf32> -> vector<7x32xf32>
    %c0_61 = arith.constant 0 : index
    %c0_62 = arith.constant 0 : index
    %c0_63 = arith.constant 0 : index
    %153 = vector.load %arg3[%c0_61, %c0_62, %c0_63] : memref<1x7x32xf32, #tpu.memory_space<vmem>>, vector<1x7x32xf32>
    %154 = vector.shape_cast %153 : vector<1x7x32xf32> to vector<7x32xf32>
    %155 = vector.shape_cast %152 : vector<7x32xf32> to vector<1x7x32xf32>
    tpu.vector_store %arg3[%c0_61, %c0_62, %c0_63], %155 {strides = array<i32>} : memref<1x7x32xf32, #tpu.memory_space<vmem>>, vector<1x7x32xf32>,
    return
  }
  func.func @transform_0(%arg0: i32) -> (i32, i32, i32, i32) {
    %c0_i32 = arith.constant 0 : i32
    %c0_i32_0 = arith.constant 0 : i32
    %c0_i32_1 = arith.constant 0 : i32
    %c0_i32_2 = arith.constant 0 : i32
    return %arg0, %c0_i32, %c0_i32_0, %c0_i32_1 : i32, i32, i32, i32
  }
  func.func @transform_1(%arg0: i32) -> (i32, i32) {
    %c0_i32 = arith.constant 0 : i32
    %c0_i32_0 = arith.constant 0 : i32
    %c0_i32_1 = arith.constant 0 : i32
    return %c0_i32, %c0_i32_0 : i32, i32
  }
  func.func @transform_2(%arg0: i32) -> (i32, i32, i32) {
    %c0_i32 = arith.constant 0 : i32
    %c0_i32_0 = arith.constant 0 : i32
    %c0_i32_1 = arith.constant 0 : i32
    return %arg0, %c0_i32, %c0_i32_0 : i32, i32, i32
  }
}

</mosaic_0001>

<llo_original>
// kernel: _forward_impl.11
$region0: #{_forward_impl.11}
  #allocation0 [shape = 'u32[]', space=smem, size = 0x4, offset = 0x4, fixed_abs, tag = 'smem constant byte address 0x4 - core index']
  #allocation1 [shape = 'u32[144,128]{1,0:T(1,128)}', space=vmem, size = 0x12000, scoped, tag = 'internal scratch']
  %s0 = inlined_call_operand.vmem [shape: bf16[8,27], index: 0, kind: input, shape index: {}]
  %s1 = inlined_call_operand.vmem [shape: bf16[2,27,256], index: 1, kind: input, shape index: {}]
  %s2 = inlined_call_operand.vmem [shape: f32[8,1], index: 2, kind: input, shape index: {}]
  %s3 = inlined_call_operand.vmem [shape: f32[2,8,256], index: 3, kind: output, shape index: {}]
  %s4 = sld [smem:[#allocation0]]
  $region45: #{_forward_impl.11} parent=0
    _
  %s6 = ssub.s32 1, %s4
  %s7 = scalar_select 0, %s6, %s4
  loop: start=0, step=1, limit=4
  $region2: #{_forward_impl.11} parent=0 // loop_pre_header
    _
  $region3: #{_forward_impl.11} parent=0 // loop_header
    %s9 = sphi 0, %s13
    %p10 = scmp.ge.s32.totalorder %s9, 4
    %s17 = sphi 0, %s17
    %s19 = sphi 0, %s17
    %s20 = sphi 0, %s19
    %s34 = sphi 0, %s20
    %s40 = sphi 0, %s42
    %s43 = sphi 0, %s40
    %s44 = sphi 0, %s43
    %s60 = sphi 0, %s44
    %s64 = sphi 0, %s64
    %s66 = sphi 0, %s64
    %s67 = sphi 0, %s66
    %s81 = sphi 0, %s67
    %s87 = sphi 0, %s89
    %s90 = sphi 0, %s87
    %s91 = sphi 0, %s90
    %s107 = sphi 0, %s91
  $region4: #{_forward_impl.11} parent=0 // loop_header_branch
    %12 = sbr.rel (%p10) target = $region8
  $region5: #{_forward_impl.11} parent=0 // loop_body
    %s14 = ssub.s32 %s9, 1
    %s15 = ssub.s32 %s9, 2
    %s16 = sadd.s32 %s9, 1
    %s18 = sadd.s32 %s17, 1
    %p21 = scmp.eq.s32.totalorder %s9, 1
    %p22 = scmp.ne.s32.totalorder %s17, %s19
    %p23 = scmp.eq.s32.totalorder %s9, 0
    %p24 = por %p22, %p23
    %p25 = scmp.ne.s32.totalorder %s17, %s19
    %p26 = scmp.eq.s32.totalorder %s14, 1
    %p27 = por %p25, %p26
    %p28 = scmp.ne.s32.totalorder %s19, %s20
    %p29 = scmp.eq.s32.totalorder %s14, 0
    %p30 = por %p28, %p29
    %p31 = scmp.ne.s32.totalorder %s19, %s20
    %p32 = scmp.eq.s32.totalorder %s15, 1
    %p33 = por %p31, %p32
    %p35 = scmp.ne.s32.totalorder %s20, %s34
    %p36 = scmp.eq.s32.totalorder %s15, 0
    %p37 = por %p35, %p36
    %s38 = ssub.s32 %s9, %s16
    %p39 = scmp.eq.s32.totalorder %s38, 0
    %s41 = sadd.s32 %s40, 1
    %s42 = scalar_select %p39, %s40, %s41
    %p45 = pneg %p39
    %p46 = scmp.eq.s32.totalorder %s9, 1
    %p47 = por %p45, %p46
    %p48 = scmp.ne.s32.totalorder %s40, %s43
    %p49 = scmp.eq.s32.totalorder %s9, 0
    %p50 = por %p48, %p49
    %p51 = scmp.ne.s32.totalorder %s40, %s43
    %p52 = scmp.eq.s32.totalorder %s14, 1
    %p53 = por %p51, %p52
    %p54 = scmp.ne.s32.totalorder %s43, %s44
    %p55 = scmp.eq.s32.totalorder %s14, 0
    %p56 = por %p54, %p55
    %p57 = scmp.ne.s32.totalorder %s43, %s44
    %p58 = scmp.eq.s32.totalorder %s15, 1
    %p59 = por %p57, %p58
    %p61 = scmp.ne.s32.totalorder %s44, %s60
    %p62 = scmp.eq.s32.totalorder %s15, 0
    %p63 = por %p61, %p62
    %s65 = sadd.s32 %s64, 1
    %p68 = scmp.eq.s32.totalorder %s9, 1
    %p69 = scmp.ne.s32.totalorder %s64, %s66
    %p70 = scmp.eq.s32.totalorder %s9, 0
    %p71 = por %p69, %p70
    %p72 = scmp.ne.s32.totalorder %s64, %s66
    %p73 = scmp.eq.s32.totalorder %s14, 1
    %p74 = por %p72, %p73
    %p75 = scmp.ne.s32.totalorder %s66, %s67
    %p76 = scmp.eq.s32.totalorder %s14, 0
    %p77 = por %p75, %p76
    %p78 = scmp.ne.s32.totalorder %s66, %s67
    %p79 = scmp.eq.s32.totalorder %s15, 1
    %p80 = por %p78, %p79
    %p82 = scmp.ne.s32.totalorder %s67, %s81
    %p83 = scmp.eq.s32.totalorder %s15, 0
    %p84 = por %p82, %p83
    %s85 = ssub.s32 %s9, %s16
    %p86 = scmp.eq.s32.totalorder %s85, 0
    %s88 = sadd.s32 %s87, 1
    %s89 = scalar_select %p86, %s87, %s88
    %p92 = pneg %p86
    %p93 = scmp.eq.s32.totalorder %s9, 1
    %p94 = por %p92, %p93
    %p95 = scmp.ne.s32.totalorder %s87, %s90
    %p96 = scmp.eq.s32.totalorder %s9, 0
    %p97 = por %p95, %p96
    %p98 = scmp.ne.s32.totalorder %s87, %s90
    %p99 = scmp.eq.s32.totalorder %s14, 1
    %p100 = por %p98, %p99
    %p101 = scmp.ne.s32.totalorder %s90, %s91
    %p102 = scmp.eq.s32.totalorder %s14, 0
    %p103 = por %p101, %p102
    %p104 = scmp.ne.s32.totalorder %s90, %s91
    %p105 = scmp.eq.s32.totalorder %s15, 1
    %p106 = por %p104, %p105
    %p108 = scmp.ne.s32.totalorder %s91, %s107
    %p109 = scmp.eq.s32.totalorder %s15, 0
    %p110 = por %p108, %p109
    %p111 = scmp.le.s32.totalorder 1, %s9
    %p112 = scmp.lt.s32.totalorder %s9, 3
    %p113 = pnand %p111, %p112
    %p114 = pneg %p113
    // Predicated region
    $region9: #{_forward_impl.11} parent=5 // pred_check
      _
    $region10: #{_forward_impl.11} parent=5 // pred_check_branch
      %116 = sbr.rel (%p113) target = $region12
    $region11: #{_forward_impl.11} parent=5 // pred_region
      %s117 = ssub.s32 %s9, 1
      // Predicated region
      $region13: #{_forward_impl.11} parent=11 // pred_check
        %p118 = pneg %p30
      $region14: #{_forward_impl.11} parent=11 // pred_check_branch
        %120 = sbr.rel (%p118) target = $region16
      $region15: #{_forward_impl.11} parent=11 // pred_region
        _
      $region16: #{_forward_impl.11} parent=11 // pred_fallthru
        _
      // Predicated region
      $region17: #{_forward_impl.11} parent=11 // pred_check
        %p121 = pneg %p77
      $region18: #{_forward_impl.11} parent=11 // pred_check_branch
        %123 = sbr.rel (%p121) target = $region20
      $region19: #{_forward_impl.11} parent=11 // pred_region
        _
      $region20: #{_forward_impl.11} parent=11 // pred_fallthru
        _
    $region12: #{_forward_impl.11} parent=5 // pred_fallthru
      _
    %p124 = scmp.lt.s32.totalorder %s9, 2
    // Predicated region
    $region21: #{_forward_impl.11} parent=5 // pred_check
      %p125 = pneg %p124
    $region22: #{_forward_impl.11} parent=5 // pred_check_branch
      %127 = sbr.rel (%p125) target = $region24
    $region23: #{_forward_impl.11} parent=5 // pred_region
      // Predicated region
      $region25: #{_forward_impl.11} parent=23 // pred_check
        %p128 = pneg %p50
      $region26: #{_forward_impl.11} parent=23 // pred_check_branch
        %130 = sbr.rel (%p128) target = $region28
      $region27: #{_forward_impl.11} parent=23 // pred_region
        %p131 = scmp.lt.s32.totalorder %s9, 1
        %s132 = scalar_select %p131, %s9, 1
        %s133 = smul.addr %s132, 8
        %s134 = smul.addr %s133, 4
        %s135 = scalar_lea.vmem %s1, %s134
      $region28: #{_forward_impl.11} parent=23 // pred_fallthru
        _
    $region24: #{_forward_impl.11} parent=5 // pred_fallthru
      _
    %p136 = scmp.le.s32.totalorder 1, %s9
    %p137 = scmp.lt.s32.totalorder %s9, 3
    %p138 = pnand %p136, %p137
    %p139 = pneg %p138
    // Predicated region
    $region29: #{_forward_impl.11} parent=5 // pred_check
      _
    $region30: #{_forward_impl.11} parent=5 // pred_check_branch
      %141 = sbr.rel (%p138) target = $region32
    $region31: #{_forward_impl.11} parent=5 // pred_region
      %s142 = ssub.s32 %s9, 1
      %p143 = pneg %p30
      %p144 = pneg %p27
      %p145 = scmp.lt.s32.totalorder %s14, 1
      %s146 = scalar_select %p145, %s14, 1
      %s147 = smul.addr %s146, 8
      %s148 = smul.addr %s147, 4
      %s149 = scalar_lea.vmem %s1, %s148
      %p150 = pneg %p56
      %p151 = pneg %p53
      %p152 = pneg %p77
      %p153 = pneg %p74
      %p154 = pneg %p103
      %p155 = pneg %p100
      %p156 = scmp.lt.s32.totalorder %s14, 1
      %s157 = scalar_select %p156, %s14, 1
      %s158 = smul.addr %s157, 2
      %s159 = smul.addr %s158, 8
      %s160 = scalar_lea.vmem %s3, %s159
      %p161 = scmp.lt.s32.totalorder %s14, 1
      %s162 = scalar_select %p161, %s14, 1
      %s163 = smul.addr %s162, 8
      %s164 = smul.addr %s163, 4
      %s165 = scalar_lea.vmem %s1, %s164
      %p166 = scmp.lt.s32.totalorder %s14, 1
      %s167 = scalar_select %p166, %s14, 1
      %s168 = smul.addr %s167, 2
      %s169 = smul.addr %s168, 8
      %s170 = scalar_lea.vmem %s3, %s169
      %v172 = vld [vmem:[%s0] sm:$0xf]
      %v173 = vld [vmem:[%s165] sm:$0xff]
      %v174 = vld [vmem:[%s165 + $0x8] sm:$0xff]
      %v175 = vld [vmem:[%s165 + $0x10] sm:$0xff]
      %v176 = vld [vmem:[%s165 + $0x18] sm:$0x33]
      %v177 = vld [vmem:[%s2] sm:$0xff]
      %179 = vset.pattern.permute.xlu0 0
      %180 = vperm.xlu0 %179, %v177
      %v181 = vpop.permute.xlu0 %180
      %v187 = vunpack.c.l.b16 %v173
      %v188 = vunpack.c.h.b16 %v173
      %v189 = vunpack.c.l.b16 %v174
      %v190 = vunpack.c.h.b16 %v174
      %v191 = vunpack.c.l.b16 %v175
      %v192 = vunpack.c.h.b16 %v175
      %v193 = vunpack.c.l.b16 %v176
      %v194 = vunpack.c.h.b16 %v176
      %v195 = vpack.c.b16 %v189, %v187
      %v196 = vpack.c.b16 %v190, %v188
      %v197 = vpack.c.b16 %v193, %v191
      %v198 = vpack.c.b16 %v194, %v192
      %vm201 = vcmask 220160
      %v203 = vsel %vm201, %v172, 0
      %vm205 = vcmask 1044480
      %vm206 = vcmask 1045504
      %v207 = vsel %vm205, 4294967295, 65535
      %v208 = vsel %vm206, %v207, 0
      %v210 = vand.u32 %v197, %v208
      %v213 = vand.u32 %v198, %v208
      %215 = vmatprep.subr.bf16.mxu0 %v196
      %216 = vmatpush1.bf16.msra.mxu0 %v195
      %217 = vmatprep.subr.bf16.mxu0 %v213
      %218 = vmatpush1.bf16.msra.mxu0 %v210
      %219 = vmatprep.subr.bf16.mxu0 0
      %220 = vmatpush1.bf16.msra.mxu0 0
      %221 = vmatprep.subr.bf16.mxu0 0
      %222 = vmatpush1.bf16.msra.mxu0 0
      %223 = vmatprep.subr.bf16.mxu0 0
      %224 = vmatpush1.bf16.msra.mxu0 0
      %225 = vmatprep.subr.bf16.mxu0 0
      %226 = vmatpush1.bf16.msra.mxu0 0
      %227 = vmatprep.subr.bf16.mxu0 0
      %228 = vmatpush1.bf16.msra.mxu0 0
      %229 = vmatprep.subr.bf16.mxu0 0
      %230 = vmatpush1.bf16.msra.mxu0 0
      %231 = vmatprep.subr.bf16.mxu0 0
      %232 = vmatpush1.bf16.msra.mxu0 0
      %233 = vmatprep.subr.bf16.mxu0 0
      %234 = vmatpush1.bf16.msra.mxu0 0
      %235 = vmatprep.subr.bf16.mxu0 0
      %236 = vmatpush1.bf16.msra.mxu0 0
      %237 = vmatprep.subr.bf16.mxu0 0
      %238 = vmatpush1.bf16.msra.mxu0 0
      %239 = vmatprep.subr.bf16.mxu0 0
      %240 = vmatpush1.bf16.msra.mxu0 0
      %241 = vmatprep.subr.bf16.mxu0 0
      %242 = vmatpush1.bf16.msra.mxu0 0
      %243 = vmatprep.subr.bf16.mxu0 0
      %244 = vmatpush1.bf16.msra.mxu0 0
      %245 = vmatprep.subr.bf16.mxu0 0
      %246 = vmatpush1.bf16.msra.mxu0 0
      %247 = vmatprep.mubr.bf16.mxu0 0
      %248 = vmatmul.mubr.bf16.gmra.mrb[0].mxu0 %v203
      %v249 = vpop.f32.mrb[0].mxu0
      %v250 = vadd.f32 %v181, %v249
      %v251 = vpop.f32.mrb[0].mxu0
      %v252 = vadd.f32 %v181, %v251
      %v253 = vpop.f32.mrb[0].mxu0
      %v254 = vpop.f32.mrb[0].mxu0
      %255 = vdwg.mxu0
      %vm256 = vcmp.gt.f32.partialorder %v250, 0.0
      %vm257 = vcmp.gt.f32.partialorder %v252, 0.0
      %v258 = vmul.f32 %v250, 0.1
      %v259 = vmul.f32 %v252, 0.1
      %v260 = vsel %vm256, %v250, %v258
      %v261 = vsel %vm257, %v252, %v259
      %262 = vst [vmem:[%s170] sm:$0xff] %v260
      %263 = vst [vmem:[%s170 + $0x8] sm:$0xff] %v261
      %p264 = scmp.lt.s32.totalorder %s14, 1
      %s265 = scalar_select %p264, %s14, 1
      %s266 = smul.addr %s265, 2
      %s267 = smul.addr %s266, 8
      %s268 = scalar_lea.vmem %s3, %s267
      // Predicated region
      $region33: #{_forward_impl.11} parent=31 // pred_check
        %p269 = pneg %p100
      $region34: #{_forward_impl.11} parent=31 // pred_check_branch
        %271 = sbr.rel (%p269) target = $region36
      $region35: #{_forward_impl.11} parent=31 // pred_region
        _
      $region36: #{_forward_impl.11} parent=31 // pred_fallthru
        _
    $region32: #{_forward_impl.11} parent=5 // pred_fallthru
      _
    %p272 = scmp.le.s32.totalorder 2, %s9
    // Predicated region
    $region37: #{_forward_impl.11} parent=5 // pred_check
      %p273 = pneg %p272
    $region38: #{_forward_impl.11} parent=5 // pred_check_branch
      %275 = sbr.rel (%p273) target = $region40
    $region39: #{_forward_impl.11} parent=5 // pred_region
      %s276 = ssub.s32 %s9, 2
      // Predicated region
      $region41: #{_forward_impl.11} parent=39 // pred_check
        %p277 = pneg %p106
      $region42: #{_forward_impl.11} parent=39 // pred_check_branch
        %279 = sbr.rel (%p277) target = $region44
      $region43: #{_forward_impl.11} parent=39 // pred_region
        %p280 = scmp.lt.s32.totalorder %s15, 1
        %s281 = scalar_select %p280, %s15, 1
        %s282 = smul.addr %s281, 2
        %s283 = smul.addr %s282, 8
        %s284 = scalar_lea.vmem %s3, %s283
      $region44: #{_forward_impl.11} parent=39 // pred_fallthru
        _
    $region40: #{_forward_impl.11} parent=5 // pred_fallthru
      _
  $region6: #{_forward_impl.11} parent=0 // loop_footer
    %s13 = sadd.s32 1, %s9
  $region7: #{_forward_impl.11} parent=0 // loop_footer_branch
    %8 = sbr.rel target = $region3
  $region8: #{_forward_impl.11} parent=0 // loop_exit
    _

// kernel: _forward_impl.12
$region0: #{_forward_impl.12}
  #allocation0 [shape = 'u32[]', space=smem, size = 0x4, offset = 0x4, fixed_abs, tag = 'smem constant byte address 0x4 - core index']
  #allocation1 [shape = 'u32[144,128]{1,0:T(1,128)}', space=vmem, size = 0x12000, scoped, tag = 'internal scratch']
  %s0 = inlined_call_operand.vmem [shape: bf16[16,72], index: 0, kind: input, shape index: {}]
  %s1 = inlined_call_operand.vmem [shape: bf16[2,72,64], index: 1, kind: input, shape index: {}]
  %s2 = inlined_call_operand.vmem [shape: f32[16,1], index: 2, kind: input, shape index: {}]
  %s3 = inlined_call_operand.vmem [shape: f32[2,16,64], index: 3, kind: output, shape index: {}]
  %s4 = sld [smem:[#allocation0]]
  $region45: #{_forward_impl.12} parent=0
    _
  %s6 = ssub.s32 1, %s4
  %s7 = scalar_select 0, %s6, %s4
  loop: start=0, step=1, limit=4
  $region2: #{_forward_impl.12} parent=0 // loop_pre_header
    _
  $region3: #{_forward_impl.12} parent=0 // loop_header
    %s9 = sphi 0, %s13
    %p10 = scmp.ge.s32.totalorder %s9, 4
    %s17 = sphi 0, %s17
    %s19 = sphi 0, %s17
    %s20 = sphi 0, %s19
    %s34 = sphi 0, %s20
    %s40 = sphi 0, %s42
    %s43 = sphi 0, %s40
    %s44 = sphi 0, %s43
    %s60 = sphi 0, %s44
    %s64 = sphi 0, %s64
    %s66 = sphi 0, %s64
    %s67 = sphi 0, %s66
    %s81 = sphi 0, %s67
    %s87 = sphi 0, %s89
    %s90 = sphi 0, %s87
    %s91 = sphi 0, %s90
    %s107 = sphi 0, %s91
  $region4: #{_forward_impl.12} parent=0 // loop_header_branch
    %12 = sbr.rel (%p10) target = $region8
  $region5: #{_forward_impl.12} parent=0 // loop_body
    %s14 = ssub.s32 %s9, 1
    %s15 = ssub.s32 %s9, 2
    %s16 = sadd.s32 %s9, 1
    %s18 = sadd.s32 %s17, 1
    %p21 = scmp.eq.s32.totalorder %s9, 1
    %p22 = scmp.ne.s32.totalorder %s17, %s19
    %p23 = scmp.eq.s32.totalorder %s9, 0
    %p24 = por %p22, %p23
    %p25 = scmp.ne.s32.totalorder %s17, %s19
    %p26 = scmp.eq.s32.totalorder %s14, 1
    %p27 = por %p25, %p26
    %p28 = scmp.ne.s32.totalorder %s19, %s20
    %p29 = scmp.eq.s32.totalorder %s14, 0
    %p30 = por %p28, %p29
    %p31 = scmp.ne.s32.totalorder %s19, %s20
    %p32 = scmp.eq.s32.totalorder %s15, 1
    %p33 = por %p31, %p32
    %p35 = scmp.ne.s32.totalorder %s20, %s34
    %p36 = scmp.eq.s32.totalorder %s15, 0
    %p37 = por %p35, %p36
    %s38 = ssub.s32 %s9, %s16
    %p39 = scmp.eq.s32.totalorder %s38, 0
    %s41 = sadd.s32 %s40, 1
    %s42 = scalar_select %p39, %s40, %s41
    %p45 = pneg %p39
    %p46 = scmp.eq.s32.totalorder %s9, 1
    %p47 = por %p45, %p46
    %p48 = scmp.ne.s32.totalorder %s40, %s43
    %p49 = scmp.eq.s32.totalorder %s9, 0
    %p50 = por %p48, %p49
    %p51 = scmp.ne.s32.totalorder %s40, %s43
    %p52 = scmp.eq.s32.totalorder %s14, 1
    %p53 = por %p51, %p52
    %p54 = scmp.ne.s32.totalorder %s43, %s44
    %p55 = scmp.eq.s32.totalorder %s14, 0
    %p56 = por %p54, %p55
    %p57 = scmp.ne.s32.totalorder %s43, %s44
    %p58 = scmp.eq.s32.totalorder %s15, 1
    %p59 = por %p57, %p58
    %p61 = scmp.ne.s32.totalorder %s44, %s60
    %p62 = scmp.eq.s32.totalorder %s15, 0
    %p63 = por %p61, %p62
    %s65 = sadd.s32 %s64, 1
    %p68 = scmp.eq.s32.totalorder %s9, 1
    %p69 = scmp.ne.s32.totalorder %s64, %s66
    %p70 = scmp.eq.s32.totalorder %s9, 0
    %p71 = por %p69, %p70
    %p72 = scmp.ne.s32.totalorder %s64, %s66
    %p73 = scmp.eq.s32.totalorder %s14, 1
    %p74 = por %p72, %p73
    %p75 = scmp.ne.s32.totalorder %s66, %s67
    %p76 = scmp.eq.s32.totalorder %s14, 0
    %p77 = por %p75, %p76
    %p78 = scmp.ne.s32.totalorder %s66, %s67
    %p79 = scmp.eq.s32.totalorder %s15, 1
    %p80 = por %p78, %p79
    %p82 = scmp.ne.s32.totalorder %s67, %s81
    %p83 = scmp.eq.s32.totalorder %s15, 0
    %p84 = por %p82, %p83
    %s85 = ssub.s32 %s9, %s16
    %p86 = scmp.eq.s32.totalorder %s85, 0
    %s88 = sadd.s32 %s87, 1
    %s89 = scalar_select %p86, %s87, %s88
    %p92 = pneg %p86
    %p93 = scmp.eq.s32.totalorder %s9, 1
    %p94 = por %p92, %p93
    %p95 = scmp.ne.s32.totalorder %s87, %s90
    %p96 = scmp.eq.s32.totalorder %s9, 0
    %p97 = por %p95, %p96
    %p98 = scmp.ne.s32.totalorder %s87, %s90
    %p99 = scmp.eq.s32.totalorder %s14, 1
    %p100 = por %p98, %p99
    %p101 = scmp.ne.s32.totalorder %s90, %s91
    %p102 = scmp.eq.s32.totalorder %s14, 0
    %p103 = por %p101, %p102
    %p104 = scmp.ne.s32.totalorder %s90, %s91
    %p105 = scmp.eq.s32.totalorder %s15, 1
    %p106 = por %p104, %p105
    %p108 = scmp.ne.s32.totalorder %s91, %s107
    %p109 = scmp.eq.s32.totalorder %s15, 0
    %p110 = por %p108, %p109
    %p111 = scmp.le.s32.totalorder 1, %s9
    %p112 = scmp.lt.s32.totalorder %s9, 3
    %p113 = pnand %p111, %p112
    %p114 = pneg %p113
    // Predicated region
    $region9: #{_forward_impl.12} parent=5 // pred_check
      _
    $region10: #{_forward_impl.12} parent=5 // pred_check_branch
      %116 = sbr.rel (%p113) target = $region12
    $region11: #{_forward_impl.12} parent=5 // pred_region
      %s117 = ssub.s32 %s9, 1
      // Predicated region
      $region13: #{_forward_impl.12} parent=11 // pred_check
        %p118 = pneg %p30
      $region14: #{_forward_impl.12} parent=11 // pred_check_branch
        %120 = sbr.rel (%p118) target = $region16
      $region15: #{_forward_impl.12} parent=11 // pred_region
        _
      $region16: #{_forward_impl.12} parent=11 // pred_fallthru
        _
      // Predicated region
      $region17: #{_forward_impl.12} parent=11 // pred_check
        %p121 = pneg %p77
      $region18: #{_forward_impl.12} parent=11 // pred_check_branch
        %123 = sbr.rel (%p121) target = $region20
      $region19: #{_forward_impl.12} parent=11 // pred_region
        _
      $region20: #{_forward_impl.12} parent=11 // pred_fallthru
        _
    $region12: #{_forward_impl.12} parent=5 // pred_fallthru
      _
    %p124 = scmp.lt.s32.totalorder %s9, 2
    // Predicated region
    $region21: #{_forward_impl.12} parent=5 // pred_check
      %p125 = pneg %p124
    $region22: #{_forward_impl.12} parent=5 // pred_check_branch
      %127 = sbr.rel (%p125) target = $region24
    $region23: #{_forward_impl.12} parent=5 // pred_region
      // Predicated region
      $region25: #{_forward_impl.12} parent=23 // pred_check
        %p128 = pneg %p50
      $region26: #{_forward_impl.12} parent=23 // pred_check_branch
        %130 = sbr.rel (%p128) target = $region28
      $region27: #{_forward_impl.12} parent=23 // pred_region
        %p131 = scmp.lt.s32.totalorder %s9, 1
        %s132 = scalar_select %p131, %s9, 1
        %s133 = smul.addr %s132, 9
        %s134 = smul.addr %s133, 4
        %s135 = scalar_lea.vmem %s1, %s134
      $region28: #{_forward_impl.12} parent=23 // pred_fallthru
        _
    $region24: #{_forward_impl.12} parent=5 // pred_fallthru
      _
    %p136 = scmp.le.s32.totalorder 1, %s9
    %p137 = scmp.lt.s32.totalorder %s9, 3
    %p138 = pnand %p136, %p137
    %p139 = pneg %p138
    // Predicated region
    $region29: #{_forward_impl.12} parent=5 // pred_check
      _
    $region30: #{_forward_impl.12} parent=5 // pred_check_branch
      %141 = sbr.rel (%p138) target = $region32
    $region31: #{_forward_impl.12} parent=5 // pred_region
      %s142 = ssub.s32 %s9, 1
      %p143 = pneg %p30
      %p144 = pneg %p27
      %p145 = scmp.lt.s32.totalorder %s14, 1
      %s146 = scalar_select %p145, %s14, 1
      %s147 = smul.addr %s146, 9
      %s148 = smul.addr %s147, 4
      %s149 = scalar_lea.vmem %s1, %s148
      %p150 = pneg %p56
      %p151 = pneg %p53
      %p152 = pneg %p77
      %p153 = pneg %p74
      %p154 = pneg %p103
      %p155 = pneg %p100
      %p156 = scmp.lt.s32.totalorder %s14, 1
      %s157 = scalar_select %p156, %s14, 1
      %s158 = smul.addr %s157, 2
      %s159 = smul.addr %s158, 8
      %s160 = scalar_lea.vmem %s3, %s159
      %p161 = scmp.lt.s32.totalorder %s14, 1
      %s162 = scalar_select %p161, %s14, 1
      %s163 = smul.addr %s162, 9
      %s164 = smul.addr %s163, 4
      %s165 = scalar_lea.vmem %s1, %s164
      %p166 = scmp.lt.s32.totalorder %s14, 1
      %s167 = scalar_select %p166, %s14, 1
      %s168 = smul.addr %s167, 2
      %s169 = smul.addr %s168, 8
      %s170 = scalar_lea.vmem %s3, %s169
      %v172 = vld [vmem:[%s0] sm:$0xf]
      %v173 = vld [vmem:[%s0 + $0x4] sm:$0xf]
      %v174 = vld [vmem:[%s165] sm:$0xf]
      %v175 = vld [vmem:[%s165 + $0x4] sm:$0xf]
      %v176 = vld [vmem:[%s165 + $0x8] sm:$0xf]
      %v177 = vld [vmem:[%s165 + $0xc] sm:$0xf]
      %v178 = vld [vmem:[%s165 + $0x10] sm:$0xf]
      %v179 = vld [vmem:[%s165 + $0x14] sm:$0xf]
      %v180 = vld [vmem:[%s165 + $0x18] sm:$0xf]
      %v181 = vld [vmem:[%s165 + $0x1c] sm:$0xf]
      %v182 = vld [vmem:[%s165 + $0x20] sm:$0xf]
      %v183 = vld [vmem:[%s2] sm:$0xff]
      %v184 = vld [vmem:[%s2 + $0x8] sm:$0xff]
      %186 = vset.pattern.permute.xlu0 0
      %187 = vperm.xlu0 %186, %v183
      %v188 = vpop.permute.xlu0 %187
      %191 = vset.pattern.permute.xlu0 0
      %192 = vperm.xlu0 %191, %v184
      %v193 = vpop.permute.xlu0 %192
      %v197 = vunpack.c.l.b16 %v172
      %v198 = vunpack.c.l.b16 %v173
      %v199 = vpack.c.b16 %v198, %v197
      %v209 = vunpack.c.l.b16 %v174
      %v210 = vunpack.c.l.b16 %v175
      %v211 = vunpack.c.l.b16 %v176
      %v212 = vunpack.c.l.b16 %v177
      %v213 = vunpack.c.l.b16 %v178
      %v214 = vunpack.c.l.b16 %v179
      %v215 = vunpack.c.l.b16 %v180
      %v216 = vunpack.c.l.b16 %v181
      %v217 = vunpack.c.l.b16 %v182
      %v218 = vpack.c.b16 %v210, %v209
      %v219 = vpack.c.b16 %v212, %v211
      %v220 = vpack.c.b16 %v214, %v213
      %v221 = vpack.c.b16 %v216, %v215
      %v222 = vpack.c.b16 %v217, %v217
      %vm227 = vcmask 588800
      %v229 = vsel %vm227, %v199, 0
      %vm231 = vcmask 1043456
      %v233 = vsel %vm231, %v222, 0
      %235 = vmatprep.subr.bf16.mxu0 0
      %236 = vmatpush1.bf16.msra.mxu0 %v218
      %237 = vmatprep.subr.bf16.mxu0 0
      %238 = vmatpush1.bf16.msra.mxu0 %v219
      %239 = vmatprep.subr.bf16.mxu0 0
      %240 = vmatpush1.bf16.msra.mxu0 %v220
      %241 = vmatprep.subr.bf16.mxu0 0
      %242 = vmatpush1.bf16.msra.mxu0 %v221
      %243 = vmatprep.subr.bf16.mxu0 0
      %244 = vmatpush1.bf16.msra.mxu0 %v233
      %245 = vmatprep.subr.bf16.mxu0 0
      %246 = vmatpush1.bf16.msra.mxu0 0
      %247 = vmatprep.subr.bf16.mxu0 0
      %248 = vmatpush1.bf16.msra.mxu0 0
      %249 = vmatprep.subr.bf16.mxu0 0
      %250 = vmatpush1.bf16.msra.mxu0 0
      %251 = vmatprep.subr.bf16.mxu0 0
      %252 = vmatpush1.bf16.msra.mxu0 0
      %253 = vmatprep.subr.bf16.mxu0 0
      %254 = vmatpush1.bf16.msra.mxu0 0
      %255 = vmatprep.subr.bf16.mxu0 0
      %256 = vmatpush1.bf16.msra.mxu0 0
      %257 = vmatprep.subr.bf16.mxu0 0
      %258 = vmatpush1.bf16.msra.mxu0 0
      %259 = vmatprep.subr.bf16.mxu0 0
      %260 = vmatpush1.bf16.msra.mxu0 0
      %261 = vmatprep.subr.bf16.mxu0 0
      %262 = vmatpush1.bf16.msra.mxu0 0
      %263 = vmatprep.subr.bf16.mxu0 0
      %264 = vmatpush1.bf16.msra.mxu0 0
      %265 = vmatprep.subr.bf16.mxu0 0
      %266 = vmatpush1.bf16.msra.mxu0 0
      %267 = vmatprep.mubr.bf16.mxu0 0
      %268 = vmatmul.mubr.bf16.gmra.mrb[0].mxu0 %v229
      %v269 = vpop.f32.mrb[0].mxu0
      %v270 = vadd.f32 %v188, %v269
      %v271 = vpop.f32.mrb[0].mxu0
      %v272 = vpop.f32.mrb[0].mxu0
      %v273 = vadd.f32 %v193, %v272
      %v274 = vpop.f32.mrb[0].mxu0
      %275 = vdwg.mxu0
      %vm276 = vcmp.gt.f32.partialorder %v270, 20.0
      %vm277 = vcmp.gt.f32.partialorder %v273, 20.0
      %v278 = vmin.f32 %v270, 20.0
      %v279 = vmin.f32 %v273, 20.0
      %v280 = vmul.f32 %v278, 1.442695
      %v281 = vpow.pop %v280
      %v282 = vmul.f32 %v279, 1.442695
      %v283 = vpow.pop %v282
      %v284 = vadd.f32 %v281, 1.0
      %v285 = vlog2.pop %v284
      %v286 = vmul.f32 %v285, 0.6931472
      %v287 = vmul.f32 -0.5, %v281
      %v288 = vadd.f32 %v287, 1.0
      %v289 = vmul.f32 %v288, %v281
      %v290 = vand.u32 2147483647, %v281
      %vm291 = vcmp.lt.f32.partialorder %v290, 0.0004427343
      %v292 = vsel %vm291, %v289, %v286
      %v293 = vadd.f32 %v283, 1.0
      %v294 = vlog2.pop %v293
      %v295 = vmul.f32 %v294, 0.6931472
      %v296 = vmul.f32 -0.5, %v283
      %v297 = vadd.f32 %v296, 1.0
      %v298 = vmul.f32 %v297, %v283
      %v299 = vand.u32 2147483647, %v283
      %vm300 = vcmp.lt.f32.partialorder %v299, 0.0004427343
      %v301 = vsel %vm300, %v298, %v295
      %v302 = vsel %vm276, %v270, %v292
      %v303 = vsel %vm277, %v273, %v301
      %v304 = vtanh.pop %v302
      %v305 = vtanh.pop %v303
      %v306 = vmul.f32 %v270, %v304
      %v307 = vmul.f32 %v273, %v305
      %vm308 = vcmask 523264
      %309 = vst.msk [vmem:[%s170] sm:$0xff] %vm308, %v306
      %310 = vst.msk [vmem:[%s170 + $0x8] sm:$0xff] %vm308, %v307
      %p311 = scmp.lt.s32.totalorder %s14, 1
      %s312 = scalar_select %p311, %s14, 1
      %s313 = smul.addr %s312, 2
      %s314 = smul.addr %s313, 8
      %s315 = scalar_lea.vmem %s3, %s314
      // Predicated region
      $region33: #{_forward_impl.12} parent=31 // pred_check
        %p316 = pneg %p100
      $region34: #{_forward_impl.12} parent=31 // pred_check_branch
        %318 = sbr.rel (%p316) target = $region36
      $region35: #{_forward_impl.12} parent=31 // pred_region
        _
      $region36: #{_forward_impl.12} parent=31 // pred_fallthru
        _
    $region32: #{_forward_impl.12} parent=5 // pred_fallthru
      _
    %p319 = scmp.le.s32.totalorder 2, %s9
    // Predicated region
    $region37: #{_forward_impl.12} parent=5 // pred_check
      %p320 = pneg %p319
    $region38: #{_forward_impl.12} parent=5 // pred_check_branch
      %322 = sbr.rel (%p320) target = $region40
    $region39: #{_forward_impl.12} parent=5 // pred_region
      %s323 = ssub.s32 %s9, 2
      // Predicated region
      $region41: #{_forward_impl.12} parent=39 // pred_check
        %p324 = pneg %p106
      $region42: #{_forward_impl.12} parent=39 // pred_check_branch
        %326 = sbr.rel (%p324) target = $region44
      $region43: #{_forward_impl.12} parent=39 // pred_region
        %p327 = scmp.lt.s32.totalorder %s15, 1
        %s328 = scalar_select %p327, %s15, 1
        %s329 = smul.addr %s328, 2
        %s330 = smul.addr %s329, 8
        %s331 = scalar_lea.vmem %s3, %s330
      $region44: #{_forward_impl.12} parent=39 // pred_fallthru
        _
    $region40: #{_forward_impl.12} parent=5 // pred_fallthru
      _
  $region6: #{_forward_impl.12} parent=0 // loop_footer
    %s13 = sadd.s32 1, %s9
  $region7: #{_forward_impl.12} parent=0 // loop_footer_branch
    %8 = sbr.rel target = $region3
  $region8: #{_forward_impl.12} parent=0 // loop_exit
    _

// kernel: _forward_impl.13
$region0: #{_forward_impl.13}
  #allocation0 [shape = 'u32[]', space=smem, size = 0x4, offset = 0x4, fixed_abs, tag = 'smem constant byte address 0x4 - core index']
  #allocation1 [shape = 'u32[144,128]{1,0:T(1,128)}', space=vmem, size = 0x12000, scoped, tag = 'internal scratch']
  %s0 = inlined_call_operand.vmem [shape: bf16[16,16], index: 0, kind: input, shape index: {}]
  %s1 = inlined_call_operand.vmem [shape: bf16[2,16,64], index: 1, kind: input, shape index: {}]
  %s2 = inlined_call_operand.vmem [shape: f32[16,1], index: 2, kind: input, shape index: {}]
  %s3 = inlined_call_operand.vmem [shape: f32[2,16,64], index: 3, kind: input, shape index: {}]
  %s4 = inlined_call_operand.vmem [shape: f32[2,16,64], index: 4, kind: output, shape index: {}]
  %s5 = sld [smem:[#allocation0]]
  $region49: #{_forward_impl.13} parent=0
    _
  %s7 = ssub.s32 1, %s5
  %s8 = scalar_select 0, %s7, %s5
  loop: start=0, step=1, limit=4
  $region2: #{_forward_impl.13} parent=0 // loop_pre_header
    _
  $region3: #{_forward_impl.13} parent=0 // loop_header
    %s10 = sphi 0, %s14
    %p11 = scmp.ge.s32.totalorder %s10, 4
    %s18 = sphi 0, %s18
    %s20 = sphi 0, %s18
    %s21 = sphi 0, %s20
    %s35 = sphi 0, %s21
    %s41 = sphi 0, %s43
    %s44 = sphi 0, %s41
    %s45 = sphi 0, %s44
    %s61 = sphi 0, %s45
    %s65 = sphi 0, %s65
    %s67 = sphi 0, %s65
    %s68 = sphi 0, %s67
    %s82 = sphi 0, %s68
    %s88 = sphi 0, %s90
    %s91 = sphi 0, %s88
    %s92 = sphi 0, %s91
    %s108 = sphi 0, %s92
    %s114 = sphi 0, %s116
    %s117 = sphi 0, %s114
    %s118 = sphi 0, %s117
    %s134 = sphi 0, %s118
  $region4: #{_forward_impl.13} parent=0 // loop_header_branch
    %13 = sbr.rel (%p11) target = $region8
  $region5: #{_forward_impl.13} parent=0 // loop_body
    %s15 = ssub.s32 %s10, 1
    %s16 = ssub.s32 %s10, 2
    %s17 = sadd.s32 %s10, 1
    %s19 = sadd.s32 %s18, 1
    %p22 = scmp.eq.s32.totalorder %s10, 1
    %p23 = scmp.ne.s32.totalorder %s18, %s20
    %p24 = scmp.eq.s32.totalorder %s10, 0
    %p25 = por %p23, %p24
    %p26 = scmp.ne.s32.totalorder %s18, %s20
    %p27 = scmp.eq.s32.totalorder %s15, 1
    %p28 = por %p26, %p27
    %p29 = scmp.ne.s32.totalorder %s20, %s21
    %p30 = scmp.eq.s32.totalorder %s15, 0
    %p31 = por %p29, %p30
    %p32 = scmp.ne.s32.totalorder %s20, %s21
    %p33 = scmp.eq.s32.totalorder %s16, 1
    %p34 = por %p32, %p33
    %p36 = scmp.ne.s32.totalorder %s21, %s35
    %p37 = scmp.eq.s32.totalorder %s16, 0
    %p38 = por %p36, %p37
    %s39 = ssub.s32 %s10, %s17
    %p40 = scmp.eq.s32.totalorder %s39, 0
    %s42 = sadd.s32 %s41, 1
    %s43 = scalar_select %p40, %s41, %s42
    %p46 = pneg %p40
    %p47 = scmp.eq.s32.totalorder %s10, 1
    %p48 = por %p46, %p47
    %p49 = scmp.ne.s32.totalorder %s41, %s44
    %p50 = scmp.eq.s32.totalorder %s10, 0
    %p51 = por %p49, %p50
    %p52 = scmp.ne.s32.totalorder %s41, %s44
    %p53 = scmp.eq.s32.totalorder %s15, 1
    %p54 = por %p52, %p53
    %p55 = scmp.ne.s32.totalorder %s44, %s45
    %p56 = scmp.eq.s32.totalorder %s15, 0
    %p57 = por %p55, %p56
    %p58 = scmp.ne.s32.totalorder %s44, %s45
    %p59 = scmp.eq.s32.totalorder %s16, 1
    %p60 = por %p58, %p59
    %p62 = scmp.ne.s32.totalorder %s45, %s61
    %p63 = scmp.eq.s32.totalorder %s16, 0
    %p64 = por %p62, %p63
    %s66 = sadd.s32 %s65, 1
    %p69 = scmp.eq.s32.totalorder %s10, 1
    %p70 = scmp.ne.s32.totalorder %s65, %s67
    %p71 = scmp.eq.s32.totalorder %s10, 0
    %p72 = por %p70, %p71
    %p73 = scmp.ne.s32.totalorder %s65, %s67
    %p74 = scmp.eq.s32.totalorder %s15, 1
    %p75 = por %p73, %p74
    %p76 = scmp.ne.s32.totalorder %s67, %s68
    %p77 = scmp.eq.s32.totalorder %s15, 0
    %p78 = por %p76, %p77
    %p79 = scmp.ne.s32.totalorder %s67, %s68
    %p80 = scmp.eq.s32.totalorder %s16, 1
    %p81 = por %p79, %p80
    %p83 = scmp.ne.s32.totalorder %s68, %s82
    %p84 = scmp.eq.s32.totalorder %s16, 0
    %p85 = por %p83, %p84
    %s86 = ssub.s32 %s10, %s17
    %p87 = scmp.eq.s32.totalorder %s86, 0
    %s89 = sadd.s32 %s88, 1
    %s90 = scalar_select %p87, %s88, %s89
    %p93 = pneg %p87
    %p94 = scmp.eq.s32.totalorder %s10, 1
    %p95 = por %p93, %p94
    %p96 = scmp.ne.s32.totalorder %s88, %s91
    %p97 = scmp.eq.s32.totalorder %s10, 0
    %p98 = por %p96, %p97
    %p99 = scmp.ne.s32.totalorder %s88, %s91
    %p100 = scmp.eq.s32.totalorder %s15, 1
    %p101 = por %p99, %p100
    %p102 = scmp.ne.s32.totalorder %s91, %s92
    %p103 = scmp.eq.s32.totalorder %s15, 0
    %p104 = por %p102, %p103
    %p105 = scmp.ne.s32.totalorder %s91, %s92
    %p106 = scmp.eq.s32.totalorder %s16, 1
    %p107 = por %p105, %p106
    %p109 = scmp.ne.s32.totalorder %s92, %s108
    %p110 = scmp.eq.s32.totalorder %s16, 0
    %p111 = por %p109, %p110
    %s112 = ssub.s32 %s10, %s17
    %p113 = scmp.eq.s32.totalorder %s112, 0
    %s115 = sadd.s32 %s114, 1
    %s116 = scalar_select %p113, %s114, %s115
    %p119 = pneg %p113
    %p120 = scmp.eq.s32.totalorder %s10, 1
    %p121 = por %p119, %p120
    %p122 = scmp.ne.s32.totalorder %s114, %s117
    %p123 = scmp.eq.s32.totalorder %s10, 0
    %p124 = por %p122, %p123
    %p125 = scmp.ne.s32.totalorder %s114, %s117
    %p126 = scmp.eq.s32.totalorder %s15, 1
    %p127 = por %p125, %p126
    %p128 = scmp.ne.s32.totalorder %s117, %s118
    %p129 = scmp.eq.s32.totalorder %s15, 0
    %p130 = por %p128, %p129
    %p131 = scmp.ne.s32.totalorder %s117, %s118
    %p132 = scmp.eq.s32.totalorder %s16, 1
    %p133 = por %p131, %p132
    %p135 = scmp.ne.s32.totalorder %s118, %s134
    %p136 = scmp.eq.s32.totalorder %s16, 0
    %p137 = por %p135, %p136
    %p138 = scmp.le.s32.totalorder 1, %s10
    %p139 = scmp.lt.s32.totalorder %s10, 3
    %p140 = pnand %p138, %p139
    %p141 = pneg %p140
    // Predicated region
    $region9: #{_forward_impl.13} parent=5 // pred_check
      _
    $region10: #{_forward_impl.13} parent=5 // pred_check_branch
      %143 = sbr.rel (%p140) target = $region12
    $region11: #{_forward_impl.13} parent=5 // pred_region
      %s144 = ssub.s32 %s10, 1
      // Predicated region
      $region13: #{_forward_impl.13} parent=11 // pred_check
        %p145 = pneg %p31
      $region14: #{_forward_impl.13} parent=11 // pred_check_branch
        %147 = sbr.rel (%p145) target = $region16
      $region15: #{_forward_impl.13} parent=11 // pred_region
        _
      $region16: #{_forward_impl.13} parent=11 // pred_fallthru
        _
      // Predicated region
      $region17: #{_forward_impl.13} parent=11 // pred_check
        %p148 = pneg %p78
      $region18: #{_forward_impl.13} parent=11 // pred_check_branch
        %150 = sbr.rel (%p148) target = $region20
      $region19: #{_forward_impl.13} parent=11 // pred_region
        _
      $region20: #{_forward_impl.13} parent=11 // pred_fallthru
        _
    $region12: #{_forward_impl.13} parent=5 // pred_fallthru
      _
    %p151 = scmp.lt.s32.totalorder %s10, 2
    // Predicated region
    $region21: #{_forward_impl.13} parent=5 // pred_check
      %p152 = pneg %p151
    $region22: #{_forward_impl.13} parent=5 // pred_check_branch
      %154 = sbr.rel (%p152) target = $region24
    $region23: #{_forward_impl.13} parent=5 // pred_region
      // Predicated region
      $region25: #{_forward_impl.13} parent=23 // pred_check
        %p155 = pneg %p51
      $region26: #{_forward_impl.13} parent=23 // pred_check_branch
        %157 = sbr.rel (%p155) target = $region28
      $region27: #{_forward_impl.13} parent=23 // pred_region
        %p158 = scmp.lt.s32.totalorder %s10, 1
        %s159 = scalar_select %p158, %s10, 1
        %s160 = smul.addr %s159, 2
        %s161 = smul.addr %s160, 4
        %s162 = scalar_lea.vmem %s1, %s161
      $region28: #{_forward_impl.13} parent=23 // pred_fallthru
        _
      // Predicated region
      $region29: #{_forward_impl.13} parent=23 // pred_check
        %p163 = pneg %p98
      $region30: #{_forward_impl.13} parent=23 // pred_check_branch
        %165 = sbr.rel (%p163) target = $region32
      $region31: #{_forward_impl.13} parent=23 // pred_region
        %p166 = scmp.lt.s32.totalorder %s10, 1
        %s167 = scalar_select %p166, %s10, 1
        %s168 = smul.addr %s167, 2
        %s169 = smul.addr %s168, 8
        %s170 = scalar_lea.vmem %s3, %s169
      $region32: #{_forward_impl.13} parent=23 // pred_fallthru
        _
    $region24: #{_forward_impl.13} parent=5 // pred_fallthru
      _
    %p171 = scmp.le.s32.totalorder 1, %s10
    %p172 = scmp.lt.s32.totalorder %s10, 3
    %p173 = pnand %p171, %p172
    %p174 = pneg %p173
    // Predicated region
    $region33: #{_forward_impl.13} parent=5 // pred_check
      _
    $region34: #{_forward_impl.13} parent=5 // pred_check_branch
      %176 = sbr.rel (%p173) target = $region36
    $region35: #{_forward_impl.13} parent=5 // pred_region
      %s177 = ssub.s32 %s10, 1
      %p178 = pneg %p31
      %p179 = pneg %p28
      %p180 = scmp.lt.s32.totalorder %s15, 1
      %s181 = scalar_select %p180, %s15, 1
      %s182 = smul.addr %s181, 2
      %s183 = smul.addr %s182, 4
      %s184 = scalar_lea.vmem %s1, %s183
      %p185 = pneg %p57
      %p186 = pneg %p54
      %p187 = pneg %p78
      %p188 = pneg %p75
      %p189 = scmp.lt.s32.totalorder %s15, 1
      %s190 = scalar_select %p189, %s15, 1
      %s191 = smul.addr %s190, 2
      %s192 = smul.addr %s191, 8
      %s193 = scalar_lea.vmem %s3, %s192
      %p194 = pneg %p104
      %p195 = pneg %p101
      %p196 = pneg %p130
      %p197 = pneg %p127
      %p198 = scmp.lt.s32.totalorder %s15, 1
      %s199 = scalar_select %p198, %s15, 1
      %s200 = smul.addr %s199, 2
      %s201 = smul.addr %s200, 8
      %s202 = scalar_lea.vmem %s4, %s201
      %p203 = scmp.lt.s32.totalorder %s15, 1
      %s204 = scalar_select %p203, %s15, 1
      %s205 = smul.addr %s204, 2
      %s206 = smul.addr %s205, 4
      %s207 = scalar_lea.vmem %s1, %s206
      %p208 = scmp.lt.s32.totalorder %s15, 1
      %s209 = scalar_select %p208, %s15, 1
      %s210 = smul.addr %s209, 2
      %s211 = smul.addr %s210, 8
      %s212 = scalar_lea.vmem %s3, %s211
      %p213 = scmp.lt.s32.totalorder %s15, 1
      %s214 = scalar_select %p213, %s15, 1
      %s215 = smul.addr %s214, 2
      %s216 = smul.addr %s215, 8
      %s217 = scalar_lea.vmem %s4, %s216
      %v219 = vld [vmem:[%s0] sm:$0xf]
      %v220 = vld [vmem:[%s0 + $0x4] sm:$0xf]
      %v221 = vld [vmem:[%s207] sm:$0xf]
      %v222 = vld [vmem:[%s207 + $0x4] sm:$0xf]
      %v223 = vld [vmem:[%s2] sm:$0xff]
      %v224 = vld [vmem:[%s2 + $0x8] sm:$0xff]
      %226 = vset.pattern.permute.xlu0 0
      %227 = vperm.xlu0 %226, %v223
      %v228 = vpop.permute.xlu0 %227
      %231 = vset.pattern.permute.xlu0 0
      %232 = vperm.xlu0 %231, %v224
      %v233 = vpop.permute.xlu0 %232
      %v237 = vunpack.c.l.b16 %v219
      %v238 = vunpack.c.l.b16 %v220
      %v239 = vpack.c.b16 %v238, %v237
      %v242 = vunpack.c.l.b16 %v221
      %v243 = vunpack.c.l.b16 %v222
      %v244 = vpack.c.b16 %v243, %v242
      %vm246 = vcmask 130048
      %v248 = vsel %vm246, %v239, 0
      %250 = vmatprep.subr.bf16.mxu0 0
      %251 = vmatpush1.bf16.msra.mxu0 %v244
      %252 = vmatprep.subr.bf16.mxu0 0
      %253 = vmatpush1.bf16.msra.mxu0 0
      %254 = vmatprep.subr.bf16.mxu0 0
      %255 = vmatpush1.bf16.msra.mxu0 0
      %256 = vmatprep.subr.bf16.mxu0 0
      %257 = vmatpush1.bf16.msra.mxu0 0
      %258 = vmatprep.subr.bf16.mxu0 0
      %259 = vmatpush1.bf16.msra.mxu0 0
      %260 = vmatprep.subr.bf16.mxu0 0
      %261 = vmatpush1.bf16.msra.mxu0 0
      %262 = vmatprep.subr.bf16.mxu0 0
      %263 = vmatpush1.bf16.msra.mxu0 0
      %264 = vmatprep.subr.bf16.mxu0 0
      %265 = vmatpush1.bf16.msra.mxu0 0
      %266 = vmatprep.subr.bf16.mxu0 0
      %267 = vmatpush1.bf16.msra.mxu0 0
      %268 = vmatprep.subr.bf16.mxu0 0
      %269 = vmatpush1.bf16.msra.mxu0 0
      %270 = vmatprep.subr.bf16.mxu0 0
      %271 = vmatpush1.bf16.msra.mxu0 0
      %272 = vmatprep.subr.bf16.mxu0 0
      %273 = vmatpush1.bf16.msra.mxu0 0
      %274 = vmatprep.subr.bf16.mxu0 0
      %275 = vmatpush1.bf16.msra.mxu0 0
      %276 = vmatprep.subr.bf16.mxu0 0
      %277 = vmatpush1.bf16.msra.mxu0 0
      %278 = vmatprep.subr.bf16.mxu0 0
      %279 = vmatpush1.bf16.msra.mxu0 0
      %280 = vmatprep.subr.bf16.mxu0 0
      %281 = vmatpush1.bf16.msra.mxu0 0
      %282 = vmatprep.mubr.bf16.mxu0 0
      %283 = vmatmul.mubr.bf16.gmra.mrb[0].mxu0 %v248
      %v284 = vpop.f32.mrb[0].mxu0
      %v285 = vadd.f32 %v228, %v284
      %v286 = vpop.f32.mrb[0].mxu0
      %v287 = vpop.f32.mrb[0].mxu0
      %v288 = vadd.f32 %v233, %v287
      %v289 = vpop.f32.mrb[0].mxu0
      %290 = vdwg.mxu0
      %vm291 = vcmp.gt.f32.partialorder %v285, 0.0
      %vm292 = vcmp.gt.f32.partialorder %v288, 0.0
      %v293 = vmul.f32 %v285, 0.1
      %v294 = vmul.f32 %v288, 0.1
      %v295 = vsel %vm291, %v285, %v293
      %v296 = vsel %vm292, %v288, %v294
      %v297 = vld [vmem:[%s212] sm:$0xff]
      %v298 = vld [vmem:[%s212 + $0x8] sm:$0xff]
      %v299 = vadd.f32 %v295, %v297
      %v300 = vadd.f32 %v296, %v298
      %vm301 = vcmp.gt.f32.partialorder %v299, 0.0
      %vm302 = vcmp.gt.f32.partialorder %v300, 0.0
      %v303 = vmul.f32 %v299, 0.1
      %v304 = vmul.f32 %v300, 0.1
      %v305 = vsel %vm301, %v299, %v303
      %v306 = vsel %vm302, %v300, %v304
      %vm307 = vcmask 523264
      %308 = vst.msk [vmem:[%s217] sm:$0xff] %vm307, %v305
      %309 = vst.msk [vmem:[%s217 + $0x8] sm:$0xff] %vm307, %v306
      %p310 = scmp.lt.s32.totalorder %s15, 1
      %s311 = scalar_select %p310, %s15, 1
      %s312 = smul.addr %s311, 2
      %s313 = smul.addr %s312, 8
      %s314 = scalar_lea.vmem %s4, %s313
      // Predicated region
      $region37: #{_forward_impl.13} parent=35 // pred_check
        %p315 = pneg %p127
      $region38: #{_forward_impl.13} parent=35 // pred_check_branch
        %317 = sbr.rel (%p315) target = $region40
      $region39: #{_forward_impl.13} parent=35 // pred_region
        _
      $region40: #{_forward_impl.13} parent=35 // pred_fallthru
        _
    $region36: #{_forward_impl.13} parent=5 // pred_fallthru
      _
    %p318 = scmp.le.s32.totalorder 2, %s10
    // Predicated region
    $region41: #{_forward_impl.13} parent=5 // pred_check
      %p319 = pneg %p318
    $region42: #{_forward_impl.13} parent=5 // pred_check_branch
      %321 = sbr.rel (%p319) target = $region44
    $region43: #{_forward_impl.13} parent=5 // pred_region
      %s322 = ssub.s32 %s10, 2
      // Predicated region
      $region45: #{_forward_impl.13} parent=43 // pred_check
        %p323 = pneg %p133
      $region46: #{_forward_impl.13} parent=43 // pred_check_branch
        %325 = sbr.rel (%p323) target = $region48
      $region47: #{_forward_impl.13} parent=43 // pred_region
        %p326 = scmp.lt.s32.totalorder %s16, 1
        %s327 = scalar_select %p326, %s16, 1
        %s328 = smul.addr %s327, 2
        %s329 = smul.addr %s328, 8
        %s330 = scalar_lea.vmem %s4, %s329
      $region48: #{_forward_impl.13} parent=43 // pred_fallthru
        _
    $region44: #{_forward_impl.13} parent=5 // pred_fallthru
      _
  $region6: #{_forward_impl.13} parent=0 // loop_footer
    %s14 = sadd.s32 1, %s10
  $region7: #{_forward_impl.13} parent=0 // loop_footer_branch
    %9 = sbr.rel target = $region3
  $region8: #{_forward_impl.13} parent=0 // loop_exit
    _

// kernel: _forward_impl.14
$region0: #{_forward_impl.14}
  #allocation0 [shape = 'u32[]', space=smem, size = 0x4, offset = 0x4, fixed_abs, tag = 'smem constant byte address 0x4 - core index']
  #allocation1 [shape = 'u32[144,128]{1,0:T(1,128)}', space=vmem, size = 0x12000, scoped, tag = 'internal scratch']
  %s0 = inlined_call_operand.vmem [shape: f32[32,16], index: 0, kind: input, shape index: {}]
  %s1 = inlined_call_operand.vmem [shape: f32[32,16], index: 1, kind: input, shape index: {}]
  %s2 = inlined_call_operand.vmem [shape: f32[32,16], index: 2, kind: input, shape index: {}]
  %s3 = inlined_call_operand.vmem [shape: f32[32,16], index: 3, kind: input, shape index: {}]
  %s4 = inlined_call_operand.vmem [shape: f32[32,16], index: 4, kind: output, shape index: {}]
  %s5 = sld [smem:[#allocation0]]
  $region26: #{_forward_impl.14} parent=0
    _
  %s7 = ssub.s32 1, %s5
  %s8 = scalar_select 0, %s7, %s5
  // Predicated region
  $region2: #{_forward_impl.14} parent=0 // pred_check
    _
  $region3: #{_forward_impl.14} parent=0 // pred_check_branch
    %10 = sbr.rel (0) target = $region5
  $region4: #{_forward_impl.14} parent=0 // pred_region
    _
  $region5: #{_forward_impl.14} parent=0 // pred_fallthru
    _
  // Predicated region
  $region6: #{_forward_impl.14} parent=0 // pred_check
    _
  $region7: #{_forward_impl.14} parent=0 // pred_check_branch
    %12 = sbr.rel (0) target = $region9
  $region8: #{_forward_impl.14} parent=0 // pred_region
    _
  $region9: #{_forward_impl.14} parent=0 // pred_fallthru
    _
  // Predicated region
  $region10: #{_forward_impl.14} parent=0 // pred_check
    _
  $region11: #{_forward_impl.14} parent=0 // pred_check_branch
    %14 = sbr.rel (0) target = $region13
  $region12: #{_forward_impl.14} parent=0 // pred_region
    _
  $region13: #{_forward_impl.14} parent=0 // pred_fallthru
    _
  // Predicated region
  $region14: #{_forward_impl.14} parent=0 // pred_check
    _
  $region15: #{_forward_impl.14} parent=0 // pred_check_branch
    %16 = sbr.rel (0) target = $region17
  $region16: #{_forward_impl.14} parent=0 // pred_region
    _
  $region17: #{_forward_impl.14} parent=0 // pred_fallthru
    _
  %v17 = vld [vmem:[%s0] sm:$0xff]
  %v18 = vld [vmem:[%s0 + $0x8] sm:$0xff]
  %v19 = vld [vmem:[%s0 + $0x10] sm:$0xff]
  %v20 = vld [vmem:[%s0 + $0x18] sm:$0xff]
  %v21 = vld [vmem:[%s1] sm:$0xff]
  %v22 = vld [vmem:[%s1 + $0x8] sm:$0xff]
  %v23 = vld [vmem:[%s1 + $0x10] sm:$0xff]
  %v24 = vld [vmem:[%s1 + $0x18] sm:$0xff]
  %v25 = vmax.f32 %v17, %v21
  %v26 = vmax.f32 %v18, %v22
  %v27 = vmax.f32 %v19, %v23
  %v28 = vmax.f32 %v20, %v24
  %v29 = vld [vmem:[%s2] sm:$0xff]
  %v30 = vld [vmem:[%s2 + $0x8] sm:$0xff]
  %v31 = vld [vmem:[%s2 + $0x10] sm:$0xff]
  %v32 = vld [vmem:[%s2 + $0x18] sm:$0xff]
  %v33 = vmax.f32 %v25, %v29
  %v34 = vmax.f32 %v26, %v30
  %v35 = vmax.f32 %v27, %v31
  %v36 = vmax.f32 %v28, %v32
  %v37 = vld [vmem:[%s3] sm:$0xff]
  %v38 = vld [vmem:[%s3 + $0x8] sm:$0xff]
  %v39 = vld [vmem:[%s3 + $0x10] sm:$0xff]
  %v40 = vld [vmem:[%s3 + $0x18] sm:$0xff]
  %v41 = vmax.f32 %v33, %v37
  %v42 = vmax.f32 %v34, %v38
  %v43 = vmax.f32 %v35, %v39
  %v44 = vmax.f32 %v36, %v40
  %vm45 = vcmask 130048
  %46 = vst.msk [vmem:[%s4] sm:$0xff] %vm45, %v41
  %47 = vst.msk [vmem:[%s4 + $0x8] sm:$0xff] %vm45, %v42
  %48 = vst.msk [vmem:[%s4 + $0x10] sm:$0xff] %vm45, %v43
  %49 = vst.msk [vmem:[%s4 + $0x18] sm:$0xff] %vm45, %v44
  // Predicated region
  $region18: #{_forward_impl.14} parent=0 // pred_check
    _
  $region19: #{_forward_impl.14} parent=0 // pred_check_branch
    %51 = sbr.rel (0) target = $region21
  $region20: #{_forward_impl.14} parent=0 // pred_region
    _
  $region21: #{_forward_impl.14} parent=0 // pred_fallthru
    _
  // Predicated region
  $region22: #{_forward_impl.14} parent=0 // pred_check
    _
  $region23: #{_forward_impl.14} parent=0 // pred_check_branch
    %53 = sbr.rel (0) target = $region25
  $region24: #{_forward_impl.14} parent=0 // pred_region
    _
  $region25: #{_forward_impl.14} parent=0 // pred_fallthru
    _

// kernel: _forward_impl.15
$region0: #{_forward_impl.15}
  #allocation0 [shape = 'u32[]', space=smem, size = 0x4, offset = 0x4, fixed_abs, tag = 'smem constant byte address 0x4 - core index']
  #allocation1 [shape = 'u32[144,128]{1,0:T(1,128)}', space=vmem, size = 0x12000, scoped, tag = 'internal scratch']
  %s0 = inlined_call_operand.vmem [shape: bf16[32,144], index: 0, kind: input, shape index: {}]
  %s1 = inlined_call_operand.vmem [shape: bf16[2,144,16], index: 1, kind: input, shape index: {}]
  %s2 = inlined_call_operand.vmem [shape: f32[32,1], index: 2, kind: input, shape index: {}]
  %s3 = inlined_call_operand.vmem [shape: f32[2,32,16], index: 3, kind: output, shape index: {}]
  %s4 = sld [smem:[#allocation0]]
  $region45: #{_forward_impl.15} parent=0
    _
  %s6 = ssub.s32 1, %s4
  %s7 = scalar_select 0, %s6, %s4
  loop: start=0, step=1, limit=4
  $region2: #{_forward_impl.15} parent=0 // loop_pre_header
    _
  $region3: #{_forward_impl.15} parent=0 // loop_header
    %s9 = sphi 0, %s13
    %p10 = scmp.ge.s32.totalorder %s9, 4
    %s17 = sphi 0, %s17
    %s19 = sphi 0, %s17
    %s20 = sphi 0, %s19
    %s34 = sphi 0, %s20
    %s40 = sphi 0, %s42
    %s43 = sphi 0, %s40
    %s44 = sphi 0, %s43
    %s60 = sphi 0, %s44
    %s64 = sphi 0, %s64
    %s66 = sphi 0, %s64
    %s67 = sphi 0, %s66
    %s81 = sphi 0, %s67
    %s87 = sphi 0, %s89
    %s90 = sphi 0, %s87
    %s91 = sphi 0, %s90
    %s107 = sphi 0, %s91
  $region4: #{_forward_impl.15} parent=0 // loop_header_branch
    %12 = sbr.rel (%p10) target = $region8
  $region5: #{_forward_impl.15} parent=0 // loop_body
    %s14 = ssub.s32 %s9, 1
    %s15 = ssub.s32 %s9, 2
    %s16 = sadd.s32 %s9, 1
    %s18 = sadd.s32 %s17, 1
    %p21 = scmp.eq.s32.totalorder %s9, 1
    %p22 = scmp.ne.s32.totalorder %s17, %s19
    %p23 = scmp.eq.s32.totalorder %s9, 0
    %p24 = por %p22, %p23
    %p25 = scmp.ne.s32.totalorder %s17, %s19
    %p26 = scmp.eq.s32.totalorder %s14, 1
    %p27 = por %p25, %p26
    %p28 = scmp.ne.s32.totalorder %s19, %s20
    %p29 = scmp.eq.s32.totalorder %s14, 0
    %p30 = por %p28, %p29
    %p31 = scmp.ne.s32.totalorder %s19, %s20
    %p32 = scmp.eq.s32.totalorder %s15, 1
    %p33 = por %p31, %p32
    %p35 = scmp.ne.s32.totalorder %s20, %s34
    %p36 = scmp.eq.s32.totalorder %s15, 0
    %p37 = por %p35, %p36
    %s38 = ssub.s32 %s9, %s16
    %p39 = scmp.eq.s32.totalorder %s38, 0
    %s41 = sadd.s32 %s40, 1
    %s42 = scalar_select %p39, %s40, %s41
    %p45 = pneg %p39
    %p46 = scmp.eq.s32.totalorder %s9, 1
    %p47 = por %p45, %p46
    %p48 = scmp.ne.s32.totalorder %s40, %s43
    %p49 = scmp.eq.s32.totalorder %s9, 0
    %p50 = por %p48, %p49
    %p51 = scmp.ne.s32.totalorder %s40, %s43
    %p52 = scmp.eq.s32.totalorder %s14, 1
    %p53 = por %p51, %p52
    %p54 = scmp.ne.s32.totalorder %s43, %s44
    %p55 = scmp.eq.s32.totalorder %s14, 0
    %p56 = por %p54, %p55
    %p57 = scmp.ne.s32.totalorder %s43, %s44
    %p58 = scmp.eq.s32.totalorder %s15, 1
    %p59 = por %p57, %p58
    %p61 = scmp.ne.s32.totalorder %s44, %s60
    %p62 = scmp.eq.s32.totalorder %s15, 0
    %p63 = por %p61, %p62
    %s65 = sadd.s32 %s64, 1
    %p68 = scmp.eq.s32.totalorder %s9, 1
    %p69 = scmp.ne.s32.totalorder %s64, %s66
    %p70 = scmp.eq.s32.totalorder %s9, 0
    %p71 = por %p69, %p70
    %p72 = scmp.ne.s32.totalorder %s64, %s66
    %p73 = scmp.eq.s32.totalorder %s14, 1
    %p74 = por %p72, %p73
    %p75 = scmp.ne.s32.totalorder %s66, %s67
    %p76 = scmp.eq.s32.totalorder %s14, 0
    %p77 = por %p75, %p76
    %p78 = scmp.ne.s32.totalorder %s66, %s67
    %p79 = scmp.eq.s32.totalorder %s15, 1
    %p80 = por %p78, %p79
    %p82 = scmp.ne.s32.totalorder %s67, %s81
    %p83 = scmp.eq.s32.totalorder %s15, 0
    %p84 = por %p82, %p83
    %s85 = ssub.s32 %s9, %s16
    %p86 = scmp.eq.s32.totalorder %s85, 0
    %s88 = sadd.s32 %s87, 1
    %s89 = scalar_select %p86, %s87, %s88
    %p92 = pneg %p86
    %p93 = scmp.eq.s32.totalorder %s9, 1
    %p94 = por %p92, %p93
    %p95 = scmp.ne.s32.totalorder %s87, %s90
    %p96 = scmp.eq.s32.totalorder %s9, 0
    %p97 = por %p95, %p96
    %p98 = scmp.ne.s32.totalorder %s87, %s90
    %p99 = scmp.eq.s32.totalorder %s14, 1
    %p100 = por %p98, %p99
    %p101 = scmp.ne.s32.totalorder %s90, %s91
    %p102 = scmp.eq.s32.totalorder %s14, 0
    %p103 = por %p101, %p102
    %p104 = scmp.ne.s32.totalorder %s90, %s91
    %p105 = scmp.eq.s32.totalorder %s15, 1
    %p106 = por %p104, %p105
    %p108 = scmp.ne.s32.totalorder %s91, %s107
    %p109 = scmp.eq.s32.totalorder %s15, 0
    %p110 = por %p108, %p109
    %p111 = scmp.le.s32.totalorder 1, %s9
    %p112 = scmp.lt.s32.totalorder %s9, 3
    %p113 = pnand %p111, %p112
    %p114 = pneg %p113
    // Predicated region
    $region9: #{_forward_impl.15} parent=5 // pred_check
      _
    $region10: #{_forward_impl.15} parent=5 // pred_check_branch
      %116 = sbr.rel (%p113) target = $region12
    $region11: #{_forward_impl.15} parent=5 // pred_region
      %s117 = ssub.s32 %s9, 1
      // Predicated region
      $region13: #{_forward_impl.15} parent=11 // pred_check
        %p118 = pneg %p30
      $region14: #{_forward_impl.15} parent=11 // pred_check_branch
        %120 = sbr.rel (%p118) target = $region16
      $region15: #{_forward_impl.15} parent=11 // pred_region
        _
      $region16: #{_forward_impl.15} parent=11 // pred_fallthru
        _
      // Predicated region
      $region17: #{_forward_impl.15} parent=11 // pred_check
        %p121 = pneg %p77
      $region18: #{_forward_impl.15} parent=11 // pred_check_branch
        %123 = sbr.rel (%p121) target = $region20
      $region19: #{_forward_impl.15} parent=11 // pred_region
        _
      $region20: #{_forward_impl.15} parent=11 // pred_fallthru
        _
    $region12: #{_forward_impl.15} parent=5 // pred_fallthru
      _
    %p124 = scmp.lt.s32.totalorder %s9, 2
    // Predicated region
    $region21: #{_forward_impl.15} parent=5 // pred_check
      %p125 = pneg %p124
    $region22: #{_forward_impl.15} parent=5 // pred_check_branch
      %127 = sbr.rel (%p125) target = $region24
    $region23: #{_forward_impl.15} parent=5 // pred_region
      // Predicated region
      $region25: #{_forward_impl.15} parent=23 // pred_check
        %p128 = pneg %p50
      $region26: #{_forward_impl.15} parent=23 // pred_check_branch
        %130 = sbr.rel (%p128) target = $region28
      $region27: #{_forward_impl.15} parent=23 // pred_region
        %p131 = scmp.lt.s32.totalorder %s9, 1
        %s132 = scalar_select %p131, %s9, 1
        %s133 = smul.addr %s132, 18
        %s134 = smul.addr %s133, 4
        %s135 = scalar_lea.vmem %s1, %s134
      $region28: #{_forward_impl.15} parent=23 // pred_fallthru
        _
    $region24: #{_forward_impl.15} parent=5 // pred_fallthru
      _
    %p136 = scmp.le.s32.totalorder 1, %s9
    %p137 = scmp.lt.s32.totalorder %s9, 3
    %p138 = pnand %p136, %p137
    %p139 = pneg %p138
    // Predicated region
    $region29: #{_forward_impl.15} parent=5 // pred_check
      _
    $region30: #{_forward_impl.15} parent=5 // pred_check_branch
      %141 = sbr.rel (%p138) target = $region32
    $region31: #{_forward_impl.15} parent=5 // pred_region
      %s142 = ssub.s32 %s9, 1
      %p143 = pneg %p30
      %p144 = pneg %p27
      %p145 = scmp.lt.s32.totalorder %s14, 1
      %s146 = scalar_select %p145, %s14, 1
      %s147 = smul.addr %s146, 18
      %s148 = smul.addr %s147, 4
      %s149 = scalar_lea.vmem %s1, %s148
      %p150 = pneg %p56
      %p151 = pneg %p53
      %p152 = pneg %p77
      %p153 = pneg %p74
      %p154 = pneg %p103
      %p155 = pneg %p100
      %p156 = scmp.lt.s32.totalorder %s14, 1
      %s157 = scalar_select %p156, %s14, 1
      %s158 = smul.addr %s157, 4
      %s159 = smul.addr %s158, 8
      %s160 = scalar_lea.vmem %s3, %s159
      %p161 = scmp.lt.s32.totalorder %s14, 1
      %s162 = scalar_select %p161, %s14, 1
      %s163 = smul.addr %s162, 18
      %s164 = smul.addr %s163, 4
      %s165 = scalar_lea.vmem %s1, %s164
      %p166 = scmp.lt.s32.totalorder %s14, 1
      %s167 = scalar_select %p166, %s14, 1
      %s168 = smul.addr %s167, 4
      %s169 = smul.addr %s168, 8
      %s170 = scalar_lea.vmem %s3, %s169
      %v172 = vld [vmem:[%s0] sm:$0xff]
      %v173 = vld [vmem:[%s0 + $0x8] sm:$0xff]
      %v174 = vld [vmem:[%s0 + $0x10] sm:$0xff]
      %v175 = vld [vmem:[%s0 + $0x18] sm:$0xff]
      %v176 = vld [vmem:[%s165] sm:$0xf]
      %v177 = vld [vmem:[%s165 + $0x4] sm:$0xf]
      %v178 = vld [vmem:[%s165 + $0x8] sm:$0xf]
      %v179 = vld [vmem:[%s165 + $0xc] sm:$0xf]
      %v180 = vld [vmem:[%s165 + $0x10] sm:$0xf]
      %v181 = vld [vmem:[%s165 + $0x14] sm:$0xf]
      %v182 = vld [vmem:[%s165 + $0x18] sm:$0xf]
      %v183 = vld [vmem:[%s165 + $0x1c] sm:$0xf]
      %v184 = vld [vmem:[%s165 + $0x20] sm:$0xf]
      %v185 = vld [vmem:[%s165 + $0x24] sm:$0xf]
      %v186 = vld [vmem:[%s165 + $0x28] sm:$0xf]
      %v187 = vld [vmem:[%s165 + $0x2c] sm:$0xf]
      %v188 = vld [vmem:[%s165 + $0x30] sm:$0xf]
      %v189 = vld [vmem:[%s165 + $0x34] sm:$0xf]
      %v190 = vld [vmem:[%s165 + $0x38] sm:$0xf]
      %v191 = vld [vmem:[%s165 + $0x3c] sm:$0xf]
      %v192 = vld [vmem:[%s165 + $0x40] sm:$0xf]
      %v193 = vld [vmem:[%s165 + $0x44] sm:$0xf]
      %v194 = vld [vmem:[%s2] sm:$0xff]
      %v195 = vld [vmem:[%s2 + $0x8] sm:$0xff]
      %v196 = vld [vmem:[%s2 + $0x10] sm:$0xff]
      %v197 = vld [vmem:[%s2 + $0x18] sm:$0xff]
      %199 = vset.pattern.permute.xlu0 0
      %200 = vperm.xlu0 %199, %v194
      %v201 = vpop.permute.xlu0 %200
      %204 = vset.pattern.permute.xlu0 0
      %205 = vperm.xlu0 %204, %v195
      %v206 = vpop.permute.xlu0 %205
      %209 = vset.pattern.permute.xlu0 0
      %210 = vperm.xlu0 %209, %v196
      %v211 = vpop.permute.xlu0 %210
      %214 = vset.pattern.permute.xlu0 0
      %215 = vperm.xlu0 %214, %v197
      %v216 = vpop.permute.xlu0 %215
      %v222 = vunpack.c.l.b16 %v172
      %v223 = vunpack.c.h.b16 %v172
      %v224 = vunpack.c.l.b16 %v173
      %v225 = vunpack.c.h.b16 %v173
      %v226 = vunpack.c.l.b16 %v174
      %v227 = vunpack.c.h.b16 %v174
      %v228 = vunpack.c.l.b16 %v175
      %v229 = vunpack.c.h.b16 %v175
      %v230 = vpack.c.b16 %v224, %v222
      %v231 = vpack.c.b16 %v225, %v223
      %v232 = vpack.c.b16 %v228, %v226
      %v233 = vpack.c.b16 %v229, %v227
      %v254 = vunpack.c.l.b16 %v176
      %v255 = vunpack.c.l.b16 %v177
      %v256 = vunpack.c.l.b16 %v178
      %v257 = vunpack.c.l.b16 %v179
      %v258 = vunpack.c.l.b16 %v180
      %v259 = vunpack.c.l.b16 %v181
      %v260 = vunpack.c.l.b16 %v182
      %v261 = vunpack.c.l.b16 %v183
      %v262 = vunpack.c.l.b16 %v184
      %v263 = vunpack.c.l.b16 %v185
      %v264 = vunpack.c.l.b16 %v186
      %v265 = vunpack.c.l.b16 %v187
      %v266 = vunpack.c.l.b16 %v188
      %v267 = vunpack.c.l.b16 %v189
      %v268 = vunpack.c.l.b16 %v190
      %v269 = vunpack.c.l.b16 %v191
      %v270 = vunpack.c.l.b16 %v192
      %v271 = vunpack.c.l.b16 %v193
      %v272 = vpack.c.b16 %v255, %v254
      %v273 = vpack.c.b16 %v257, %v256
      %v274 = vpack.c.b16 %v259, %v258
      %v275 = vpack.c.b16 %v261, %v260
      %v276 = vpack.c.b16 %v263, %v262
      %v277 = vpack.c.b16 %v265, %v264
      %v278 = vpack.c.b16 %v267, %v266
      %v279 = vpack.c.b16 %v269, %v268
      %v280 = vpack.c.b16 %v271, %v270
      %vm290 = vcmask 130048
      %v292 = vsel %vm290, %v231, 0
      %v295 = vsel %vm290, %v233, 0
      %297 = vmatprep.subr.bf16.mxu0 0
      %298 = vmatpush1.bf16.msra.mxu0 %v272
      %299 = vmatprep.subr.bf16.mxu0 0
      %300 = vmatpush1.bf16.msra.mxu0 %v273
      %301 = vmatprep.subr.bf16.mxu0 0
      %302 = vmatpush1.bf16.msra.mxu0 %v274
      %303 = vmatprep.subr.bf16.mxu0 0
      %304 = vmatpush1.bf16.msra.mxu0 %v275
      %305 = vmatprep.subr.bf16.mxu0 0
      %306 = vmatpush1.bf16.msra.mxu0 %v276
      %307 = vmatprep.subr.bf16.mxu0 0
      %308 = vmatpush1.bf16.msra.mxu0 %v277
      %309 = vmatprep.subr.bf16.mxu0 0
      %310 = vmatpush1.bf16.msra.mxu0 %v278
      %311 = vmatprep.subr.bf16.mxu0 0
      %312 = vmatpush1.bf16.msra.mxu0 %v279
      %313 = vmatprep.subr.bf16.mxu0 0
      %314 = vmatpush1.bf16.msra.mxu0 %v280
      %315 = vmatprep.subr.bf16.mxu0 0
      %316 = vmatpush1.bf16.msra.mxu0 0
      %317 = vmatprep.subr.bf16.mxu0 0
      %318 = vmatpush1.bf16.msra.mxu0 0
      %319 = vmatprep.subr.bf16.mxu0 0
      %320 = vmatpush1.bf16.msra.mxu0 0
      %321 = vmatprep.subr.bf16.mxu0 0
      %322 = vmatpush1.bf16.msra.mxu0 0
      %323 = vmatprep.subr.bf16.mxu0 0
      %324 = vmatpush1.bf16.msra.mxu0 0
      %325 = vmatprep.subr.bf16.mxu0 0
      %326 = vmatpush1.bf16.msra.mxu0 0
      %327 = vmatprep.subr.bf16.mxu0 0
      %328 = vmatpush1.bf16.msra.mxu0 0
      %329 = vmatprep.mubr.bf16.mxu0 %v292
      %330 = vmatmul.mubr.bf16.gmra.mrb[0].mxu0 %v230
      %v331 = vpop.f32.mrb[0].mxu0
      %v332 = vadd.f32 %v201, %v331
      %v333 = vpop.f32.mrb[0].mxu0
      %v334 = vpop.f32.mrb[0].mxu0
      %v335 = vadd.f32 %v206, %v334
      %v336 = vpop.f32.mrb[0].mxu0
      %337 = vmatprep.mubr.bf16.mxu0 %v295
      %338 = vmatmul.mubr.bf16.gmra.mrb[0].mxu0 %v232
      %v339 = vpop.f32.mrb[0].mxu0
      %v340 = vadd.f32 %v211, %v339
      %v341 = vpop.f32.mrb[0].mxu0
      %v342 = vpop.f32.mrb[0].mxu0
      %v343 = vadd.f32 %v216, %v342
      %v344 = vpop.f32.mrb[0].mxu0
      %345 = vdwg.mxu0
      %vm346 = vcmp.gt.f32.partialorder %v332, 0.0
      %vm347 = vcmp.gt.f32.partialorder %v335, 0.0
      %vm348 = vcmp.gt.f32.partialorder %v340, 0.0
      %vm349 = vcmp.gt.f32.partialorder %v343, 0.0
      %v350 = vmul.f32 %v332, 0.1
      %v351 = vmul.f32 %v335, 0.1
      %v352 = vmul.f32 %v340, 0.1
      %v353 = vmul.f32 %v343, 0.1
      %v354 = vsel %vm346, %v332, %v350
      %v355 = vsel %vm347, %v335, %v351
      %v356 = vsel %vm348, %v340, %v352
      %v357 = vsel %vm349, %v343, %v353
      %358 = vst.msk [vmem:[%s170] sm:$0xff] %vm290, %v354
      %359 = vst.msk [vmem:[%s170 + $0x8] sm:$0xff] %vm290, %v355
      %360 = vst.msk [vmem:[%s170 + $0x10] sm:$0xff] %vm290, %v356
      %361 = vst.msk [vmem:[%s170 + $0x18] sm:$0xff] %vm290, %v357
      %p362 = scmp.lt.s32.totalorder %s14, 1
      %s363 = scalar_select %p362, %s14, 1
      %s364 = smul.addr %s363, 4
      %s365 = smul.addr %s364, 8
      %s366 = scalar_lea.vmem %s3, %s365
      // Predicated region
      $region33: #{_forward_impl.15} parent=31 // pred_check
        %p367 = pneg %p100
      $region34: #{_forward_impl.15} parent=31 // pred_check_branch
        %369 = sbr.rel (%p367) target = $region36
      $region35: #{_forward_impl.15} parent=31 // pred_region
        _
      $region36: #{_forward_impl.15} parent=31 // pred_fallthru
        _
    $region32: #{_forward_impl.15} parent=5 // pred_fallthru
      _
    %p370 = scmp.le.s32.totalorder 2, %s9
    // Predicated region
    $region37: #{_forward_impl.15} parent=5 // pred_check
      %p371 = pneg %p370
    $region38: #{_forward_impl.15} parent=5 // pred_check_branch
      %373 = sbr.rel (%p371) target = $region40
    $region39: #{_forward_impl.15} parent=5 // pred_region
      %s374 = ssub.s32 %s9, 2
      // Predicated region
      $region41: #{_forward_impl.15} parent=39 // pred_check
        %p375 = pneg %p106
      $region42: #{_forward_impl.15} parent=39 // pred_check_branch
        %377 = sbr.rel (%p375) target = $region44
      $region43: #{_forward_impl.15} parent=39 // pred_region
        %p378 = scmp.lt.s32.totalorder %s15, 1
        %s379 = scalar_select %p378, %s15, 1
        %s380 = smul.addr %s379, 4
        %s381 = smul.addr %s380, 8
        %s382 = scalar_lea.vmem %s3, %s381
      $region44: #{_forward_impl.15} parent=39 // pred_fallthru
        _
    $region40: #{_forward_impl.15} parent=5 // pred_fallthru
      _
  $region6: #{_forward_impl.15} parent=0 // loop_footer
    %s13 = sadd.s32 1, %s9
  $region7: #{_forward_impl.15} parent=0 // loop_footer_branch
    %8 = sbr.rel target = $region3
  $region8: #{_forward_impl.15} parent=0 // loop_exit
    _

// kernel: _forward_impl.18
$region0: #{_forward_impl.18}
  #allocation0 [shape = 'u32[]', space=smem, size = 0x4, offset = 0x4, fixed_abs, tag = 'smem constant byte address 0x4 - core index']
  #allocation1 [shape = 'u32[144,128]{1,0:T(1,128)}', space=vmem, size = 0x12000, scoped, tag = 'internal scratch']
  %s0 = inlined_call_operand.vmem [shape: bf16[8,32], index: 0, kind: input, shape index: {}]
  %s1 = inlined_call_operand.vmem [shape: bf16[2,32,16], index: 1, kind: input, shape index: {}]
  %s2 = inlined_call_operand.vmem [shape: f32[8,1], index: 2, kind: input, shape index: {}]
  %s3 = inlined_call_operand.vmem [shape: f32[2,8,16], index: 3, kind: output, shape index: {}]
  %s4 = sld [smem:[#allocation0]]
  $region45: #{_forward_impl.18} parent=0
    _
  %s6 = ssub.s32 1, %s4
  %s7 = scalar_select 0, %s6, %s4
  loop: start=0, step=1, limit=4
  $region2: #{_forward_impl.18} parent=0 // loop_pre_header
    _
  $region3: #{_forward_impl.18} parent=0 // loop_header
    %s9 = sphi 0, %s13
    %p10 = scmp.ge.s32.totalorder %s9, 4
    %s17 = sphi 0, %s17
    %s19 = sphi 0, %s17
    %s20 = sphi 0, %s19
    %s34 = sphi 0, %s20
    %s40 = sphi 0, %s42
    %s43 = sphi 0, %s40
    %s44 = sphi 0, %s43
    %s60 = sphi 0, %s44
    %s64 = sphi 0, %s64
    %s66 = sphi 0, %s64
    %s67 = sphi 0, %s66
    %s81 = sphi 0, %s67
    %s87 = sphi 0, %s89
    %s90 = sphi 0, %s87
    %s91 = sphi 0, %s90
    %s107 = sphi 0, %s91
  $region4: #{_forward_impl.18} parent=0 // loop_header_branch
    %12 = sbr.rel (%p10) target = $region8
  $region5: #{_forward_impl.18} parent=0 // loop_body
    %s14 = ssub.s32 %s9, 1
    %s15 = ssub.s32 %s9, 2
    %s16 = sadd.s32 %s9, 1
    %s18 = sadd.s32 %s17, 1
    %p21 = scmp.eq.s32.totalorder %s9, 1
    %p22 = scmp.ne.s32.totalorder %s17, %s19
    %p23 = scmp.eq.s32.totalorder %s9, 0
    %p24 = por %p22, %p23
    %p25 = scmp.ne.s32.totalorder %s17, %s19
    %p26 = scmp.eq.s32.totalorder %s14, 1
    %p27 = por %p25, %p26
    %p28 = scmp.ne.s32.totalorder %s19, %s20
    %p29 = scmp.eq.s32.totalorder %s14, 0
    %p30 = por %p28, %p29
    %p31 = scmp.ne.s32.totalorder %s19, %s20
    %p32 = scmp.eq.s32.totalorder %s15, 1
    %p33 = por %p31, %p32
    %p35 = scmp.ne.s32.totalorder %s20, %s34
    %p36 = scmp.eq.s32.totalorder %s15, 0
    %p37 = por %p35, %p36
    %s38 = ssub.s32 %s9, %s16
    %p39 = scmp.eq.s32.totalorder %s38, 0
    %s41 = sadd.s32 %s40, 1
    %s42 = scalar_select %p39, %s40, %s41
    %p45 = pneg %p39
    %p46 = scmp.eq.s32.totalorder %s9, 1
    %p47 = por %p45, %p46
    %p48 = scmp.ne.s32.totalorder %s40, %s43
    %p49 = scmp.eq.s32.totalorder %s9, 0
    %p50 = por %p48, %p49
    %p51 = scmp.ne.s32.totalorder %s40, %s43
    %p52 = scmp.eq.s32.totalorder %s14, 1
    %p53 = por %p51, %p52
    %p54 = scmp.ne.s32.totalorder %s43, %s44
    %p55 = scmp.eq.s32.totalorder %s14, 0
    %p56 = por %p54, %p55
    %p57 = scmp.ne.s32.totalorder %s43, %s44
    %p58 = scmp.eq.s32.totalorder %s15, 1
    %p59 = por %p57, %p58
    %p61 = scmp.ne.s32.totalorder %s44, %s60
    %p62 = scmp.eq.s32.totalorder %s15, 0
    %p63 = por %p61, %p62
    %s65 = sadd.s32 %s64, 1
    %p68 = scmp.eq.s32.totalorder %s9, 1
    %p69 = scmp.ne.s32.totalorder %s64, %s66
    %p70 = scmp.eq.s32.totalorder %s9, 0
    %p71 = por %p69, %p70
    %p72 = scmp.ne.s32.totalorder %s64, %s66
    %p73 = scmp.eq.s32.totalorder %s14, 1
    %p74 = por %p72, %p73
    %p75 = scmp.ne.s32.totalorder %s66, %s67
    %p76 = scmp.eq.s32.totalorder %s14, 0
    %p77 = por %p75, %p76
    %p78 = scmp.ne.s32.totalorder %s66, %s67
    %p79 = scmp.eq.s32.totalorder %s15, 1
    %p80 = por %p78, %p79
    %p82 = scmp.ne.s32.totalorder %s67, %s81
    %p83 = scmp.eq.s32.totalorder %s15, 0
    %p84 = por %p82, %p83
    %s85 = ssub.s32 %s9, %s16
    %p86 = scmp.eq.s32.totalorder %s85, 0
    %s88 = sadd.s32 %s87, 1
    %s89 = scalar_select %p86, %s87, %s88
    %p92 = pneg %p86
    %p93 = scmp.eq.s32.totalorder %s9, 1
    %p94 = por %p92, %p93
    %p95 = scmp.ne.s32.totalorder %s87, %s90
    %p96 = scmp.eq.s32.totalorder %s9, 0
    %p97 = por %p95, %p96
    %p98 = scmp.ne.s32.totalorder %s87, %s90
    %p99 = scmp.eq.s32.totalorder %s14, 1
    %p100 = por %p98, %p99
    %p101 = scmp.ne.s32.totalorder %s90, %s91
    %p102 = scmp.eq.s32.totalorder %s14, 0
    %p103 = por %p101, %p102
    %p104 = scmp.ne.s32.totalorder %s90, %s91
    %p105 = scmp.eq.s32.totalorder %s15, 1
    %p106 = por %p104, %p105
    %p108 = scmp.ne.s32.totalorder %s91, %s107
    %p109 = scmp.eq.s32.totalorder %s15, 0
    %p110 = por %p108, %p109
    %p111 = scmp.le.s32.totalorder 1, %s9
    %p112 = scmp.lt.s32.totalorder %s9, 3
    %p113 = pnand %p111, %p112
    %p114 = pneg %p113
    // Predicated region
    $region9: #{_forward_impl.18} parent=5 // pred_check
      _
    $region10: #{_forward_impl.18} parent=5 // pred_check_branch
      %116 = sbr.rel (%p113) target = $region12
    $region11: #{_forward_impl.18} parent=5 // pred_region
      %s117 = ssub.s32 %s9, 1
      // Predicated region
      $region13: #{_forward_impl.18} parent=11 // pred_check
        %p118 = pneg %p30
      $region14: #{_forward_impl.18} parent=11 // pred_check_branch
        %120 = sbr.rel (%p118) target = $region16
      $region15: #{_forward_impl.18} parent=11 // pred_region
        _
      $region16: #{_forward_impl.18} parent=11 // pred_fallthru
        _
      // Predicated region
      $region17: #{_forward_impl.18} parent=11 // pred_check
        %p121 = pneg %p77
      $region18: #{_forward_impl.18} parent=11 // pred_check_branch
        %123 = sbr.rel (%p121) target = $region20
      $region19: #{_forward_impl.18} parent=11 // pred_region
        _
      $region20: #{_forward_impl.18} parent=11 // pred_fallthru
        _
    $region12: #{_forward_impl.18} parent=5 // pred_fallthru
      _
    %p124 = scmp.lt.s32.totalorder %s9, 2
    // Predicated region
    $region21: #{_forward_impl.18} parent=5 // pred_check
      %p125 = pneg %p124
    $region22: #{_forward_impl.18} parent=5 // pred_check_branch
      %127 = sbr.rel (%p125) target = $region24
    $region23: #{_forward_impl.18} parent=5 // pred_region
      // Predicated region
      $region25: #{_forward_impl.18} parent=23 // pred_check
        %p128 = pneg %p50
      $region26: #{_forward_impl.18} parent=23 // pred_check_branch
        %130 = sbr.rel (%p128) target = $region28
      $region27: #{_forward_impl.18} parent=23 // pred_region
        %p131 = scmp.lt.s32.totalorder %s9, 1
        %s132 = scalar_select %p131, %s9, 1
        %s133 = smul.addr %s132, 4
        %s134 = smul.addr %s133, 4
        %s135 = scalar_lea.vmem %s1, %s134
      $region28: #{_forward_impl.18} parent=23 // pred_fallthru
        _
    $region24: #{_forward_impl.18} parent=5 // pred_fallthru
      _
    %p136 = scmp.le.s32.totalorder 1, %s9
    %p137 = scmp.lt.s32.totalorder %s9, 3
    %p138 = pnand %p136, %p137
    %p139 = pneg %p138
    // Predicated region
    $region29: #{_forward_impl.18} parent=5 // pred_check
      _
    $region30: #{_forward_impl.18} parent=5 // pred_check_branch
      %141 = sbr.rel (%p138) target = $region32
    $region31: #{_forward_impl.18} parent=5 // pred_region
      %s142 = ssub.s32 %s9, 1
      %p143 = pneg %p30
      %p144 = pneg %p27
      %p145 = scmp.lt.s32.totalorder %s14, 1
      %s146 = scalar_select %p145, %s14, 1
      %s147 = smul.addr %s146, 4
      %s148 = smul.addr %s147, 4
      %s149 = scalar_lea.vmem %s1, %s148
      %p150 = pneg %p56
      %p151 = pneg %p53
      %p152 = pneg %p77
      %p153 = pneg %p74
      %p154 = pneg %p103
      %p155 = pneg %p100
      %p156 = scmp.lt.s32.totalorder %s14, 1
      %s157 = scalar_select %p156, %s14, 1
      %s158 = smul.addr %s157, 8
      %s159 = scalar_lea.vmem %s3, %s158
      %p160 = scmp.lt.s32.totalorder %s14, 1
      %s161 = scalar_select %p160, %s14, 1
      %s162 = smul.addr %s161, 4
      %s163 = smul.addr %s162, 4
      %s164 = scalar_lea.vmem %s1, %s163
      %p165 = scmp.lt.s32.totalorder %s14, 1
      %s166 = scalar_select %p165, %s14, 1
      %s167 = smul.addr %s166, 8
      %s168 = scalar_lea.vmem %s3, %s167
      %v170 = vld [vmem:[%s0] sm:$0xf]
      %v171 = vld [vmem:[%s164] sm:$0xf]
      %v172 = vld [vmem:[%s164 + $0x4] sm:$0xf]
      %v173 = vld [vmem:[%s164 + $0x8] sm:$0xf]
      %v174 = vld [vmem:[%s164 + $0xc] sm:$0xf]
      %v175 = vld [vmem:[%s2] sm:$0xff]
      %177 = vset.pattern.permute.xlu0 0
      %178 = vperm.xlu0 %177, %v175
      %v179 = vpop.permute.xlu0 %178
      %v185 = vunpack.c.l.b16 %v171
      %v186 = vunpack.c.l.b16 %v172
      %v187 = vunpack.c.l.b16 %v173
      %v188 = vunpack.c.l.b16 %v174
      %v189 = vpack.c.b16 %v186, %v185
      %v190 = vpack.c.b16 %v188, %v187
      %vm193 = vcmask 261120
      %v195 = vsel %vm193, %v170, 0
      %197 = vmatprep.subr.bf16.mxu0 0
      %198 = vmatpush1.bf16.msra.mxu0 %v189
      %199 = vmatprep.subr.bf16.mxu0 0
      %200 = vmatpush1.bf16.msra.mxu0 %v190
      %201 = vmatprep.subr.bf16.mxu0 0
      %202 = vmatpush1.bf16.msra.mxu0 0
      %203 = vmatprep.subr.bf16.mxu0 0
      %204 = vmatpush1.bf16.msra.mxu0 0
      %205 = vmatprep.subr.bf16.mxu0 0
      %206 = vmatpush1.bf16.msra.mxu0 0
      %207 = vmatprep.subr.bf16.mxu0 0
      %208 = vmatpush1.bf16.msra.mxu0 0
      %209 = vmatprep.subr.bf16.mxu0 0
      %210 = vmatpush1.bf16.msra.mxu0 0
      %211 = vmatprep.subr.bf16.mxu0 0
      %212 = vmatpush1.bf16.msra.mxu0 0
      %213 = vmatprep.subr.bf16.mxu0 0
      %214 = vmatpush1.bf16.msra.mxu0 0
      %215 = vmatprep.subr.bf16.mxu0 0
      %216 = vmatpush1.bf16.msra.mxu0 0
      %217 = vmatprep.subr.bf16.mxu0 0
      %218 = vmatpush1.bf16.msra.mxu0 0
      %219 = vmatprep.subr.bf16.mxu0 0
      %220 = vmatpush1.bf16.msra.mxu0 0
      %221 = vmatprep.subr.bf16.mxu0 0
      %222 = vmatpush1.bf16.msra.mxu0 0
      %223 = vmatprep.subr.bf16.mxu0 0
      %224 = vmatpush1.bf16.msra.mxu0 0
      %225 = vmatprep.subr.bf16.mxu0 0
      %226 = vmatpush1.bf16.msra.mxu0 0
      %227 = vmatprep.subr.bf16.mxu0 0
      %228 = vmatpush1.bf16.msra.mxu0 0
      %229 = vmatprep.mubr.bf16.mxu0 0
      %230 = vmatmul.mubr.bf16.gmra.mrb[0].mxu0 %v195
      %v231 = vpop.f32.mrb[0].mxu0
      %v232 = vadd.f32 %v179, %v231
      %v233 = vpop.f32.mrb[0].mxu0
      %v234 = vpop.f32.mrb[0].mxu0
      %v235 = vpop.f32.mrb[0].mxu0
      %236 = vdwg.mxu0
      %vm237 = vcmp.gt.f32.partialorder %v232, 0.0
      %v238 = vmul.f32 %v232, 0.1
      %v239 = vsel %vm237, %v232, %v238
      %vm240 = vcmask 130048
      %241 = vst.msk [vmem:[%s168] sm:$0xff] %vm240, %v239
      %p242 = scmp.lt.s32.totalorder %s14, 1
      %s243 = scalar_select %p242, %s14, 1
      %s244 = smul.addr %s243, 8
      %s245 = scalar_lea.vmem %s3, %s244
      // Predicated region
      $region33: #{_forward_impl.18} parent=31 // pred_check
        %p246 = pneg %p100
      $region34: #{_forward_impl.18} parent=31 // pred_check_branch
        %248 = sbr.rel (%p246) target = $region36
      $region35: #{_forward_impl.18} parent=31 // pred_region
        _
      $region36: #{_forward_impl.18} parent=31 // pred_fallthru
        _
    $region32: #{_forward_impl.18} parent=5 // pred_fallthru
      _
    %p249 = scmp.le.s32.totalorder 2, %s9
    // Predicated region
    $region37: #{_forward_impl.18} parent=5 // pred_check
      %p250 = pneg %p249
    $region38: #{_forward_impl.18} parent=5 // pred_check_branch
      %252 = sbr.rel (%p250) target = $region40
    $region39: #{_forward_impl.18} parent=5 // pred_region
      %s253 = ssub.s32 %s9, 2
      // Predicated region
      $region41: #{_forward_impl.18} parent=39 // pred_check
        %p254 = pneg %p106
      $region42: #{_forward_impl.18} parent=39 // pred_check_branch
        %256 = sbr.rel (%p254) target = $region44
      $region43: #{_forward_impl.18} parent=39 // pred_region
        %p257 = scmp.lt.s32.totalorder %s15, 1
        %s258 = scalar_select %p257, %s15, 1
        %s259 = smul.addr %s258, 8
        %s260 = scalar_lea.vmem %s3, %s259
      $region44: #{_forward_impl.18} parent=39 // pred_fallthru
        _
    $region40: #{_forward_impl.18} parent=5 // pred_fallthru
      _
  $region6: #{_forward_impl.18} parent=0 // loop_footer
    %s13 = sadd.s32 1, %s9
  $region7: #{_forward_impl.18} parent=0 // loop_footer_branch
    %8 = sbr.rel target = $region3
  $region8: #{_forward_impl.18} parent=0 // loop_exit
    _

// kernel: _forward_impl.20
$region0: #{_forward_impl.20}
  #allocation0 [shape = 'u32[]', space=smem, size = 0x4, offset = 0x4, fixed_abs, tag = 'smem constant byte address 0x4 - core index']
  #allocation1 [shape = 'u32[144,128]{1,0:T(1,128)}', space=vmem, size = 0x12000, scoped, tag = 'internal scratch']
  %s0 = inlined_call_operand.vmem [shape: bf16[16,16], index: 0, kind: input, shape index: {}]
  %s1 = inlined_call_operand.vmem [shape: bf16[2,16,64], index: 1, kind: input, shape index: {}]
  %s2 = inlined_call_operand.vmem [shape: f32[16,1], index: 2, kind: input, shape index: {}]
  %s3 = inlined_call_operand.vmem [shape: f32[2,16,64], index: 3, kind: output, shape index: {}]
  %s4 = sld [smem:[#allocation0]]
  $region45: #{_forward_impl.20} parent=0
    _
  %s6 = ssub.s32 1, %s4
  %s7 = scalar_select 0, %s6, %s4
  loop: start=0, step=1, limit=4
  $region2: #{_forward_impl.20} parent=0 // loop_pre_header
    _
  $region3: #{_forward_impl.20} parent=0 // loop_header
    %s9 = sphi 0, %s13
    %p10 = scmp.ge.s32.totalorder %s9, 4
    %s17 = sphi 0, %s17
    %s19 = sphi 0, %s17
    %s20 = sphi 0, %s19
    %s34 = sphi 0, %s20
    %s40 = sphi 0, %s42
    %s43 = sphi 0, %s40
    %s44 = sphi 0, %s43
    %s60 = sphi 0, %s44
    %s64 = sphi 0, %s64
    %s66 = sphi 0, %s64
    %s67 = sphi 0, %s66
    %s81 = sphi 0, %s67
    %s87 = sphi 0, %s89
    %s90 = sphi 0, %s87
    %s91 = sphi 0, %s90
    %s107 = sphi 0, %s91
  $region4: #{_forward_impl.20} parent=0 // loop_header_branch
    %12 = sbr.rel (%p10) target = $region8
  $region5: #{_forward_impl.20} parent=0 // loop_body
    %s14 = ssub.s32 %s9, 1
    %s15 = ssub.s32 %s9, 2
    %s16 = sadd.s32 %s9, 1
    %s18 = sadd.s32 %s17, 1
    %p21 = scmp.eq.s32.totalorder %s9, 1
    %p22 = scmp.ne.s32.totalorder %s17, %s19
    %p23 = scmp.eq.s32.totalorder %s9, 0
    %p24 = por %p22, %p23
    %p25 = scmp.ne.s32.totalorder %s17, %s19
    %p26 = scmp.eq.s32.totalorder %s14, 1
    %p27 = por %p25, %p26
    %p28 = scmp.ne.s32.totalorder %s19, %s20
    %p29 = scmp.eq.s32.totalorder %s14, 0
    %p30 = por %p28, %p29
    %p31 = scmp.ne.s32.totalorder %s19, %s20
    %p32 = scmp.eq.s32.totalorder %s15, 1
    %p33 = por %p31, %p32
    %p35 = scmp.ne.s32.totalorder %s20, %s34
    %p36 = scmp.eq.s32.totalorder %s15, 0
    %p37 = por %p35, %p36
    %s38 = ssub.s32 %s9, %s16
    %p39 = scmp.eq.s32.totalorder %s38, 0
    %s41 = sadd.s32 %s40, 1
    %s42 = scalar_select %p39, %s40, %s41
    %p45 = pneg %p39
    %p46 = scmp.eq.s32.totalorder %s9, 1
    %p47 = por %p45, %p46
    %p48 = scmp.ne.s32.totalorder %s40, %s43
    %p49 = scmp.eq.s32.totalorder %s9, 0
    %p50 = por %p48, %p49
    %p51 = scmp.ne.s32.totalorder %s40, %s43
    %p52 = scmp.eq.s32.totalorder %s14, 1
    %p53 = por %p51, %p52
    %p54 = scmp.ne.s32.totalorder %s43, %s44
    %p55 = scmp.eq.s32.totalorder %s14, 0
    %p56 = por %p54, %p55
    %p57 = scmp.ne.s32.totalorder %s43, %s44
    %p58 = scmp.eq.s32.totalorder %s15, 1
    %p59 = por %p57, %p58
    %p61 = scmp.ne.s32.totalorder %s44, %s60
    %p62 = scmp.eq.s32.totalorder %s15, 0
    %p63 = por %p61, %p62
    %s65 = sadd.s32 %s64, 1
    %p68 = scmp.eq.s32.totalorder %s9, 1
    %p69 = scmp.ne.s32.totalorder %s64, %s66
    %p70 = scmp.eq.s32.totalorder %s9, 0
    %p71 = por %p69, %p70
    %p72 = scmp.ne.s32.totalorder %s64, %s66
    %p73 = scmp.eq.s32.totalorder %s14, 1
    %p74 = por %p72, %p73
    %p75 = scmp.ne.s32.totalorder %s66, %s67
    %p76 = scmp.eq.s32.totalorder %s14, 0
    %p77 = por %p75, %p76
    %p78 = scmp.ne.s32.totalorder %s66, %s67
    %p79 = scmp.eq.s32.totalorder %s15, 1
    %p80 = por %p78, %p79
    %p82 = scmp.ne.s32.totalorder %s67, %s81
    %p83 = scmp.eq.s32.totalorder %s15, 0
    %p84 = por %p82, %p83
    %s85 = ssub.s32 %s9, %s16
    %p86 = scmp.eq.s32.totalorder %s85, 0
    %s88 = sadd.s32 %s87, 1
    %s89 = scalar_select %p86, %s87, %s88
    %p92 = pneg %p86
    %p93 = scmp.eq.s32.totalorder %s9, 1
    %p94 = por %p92, %p93
    %p95 = scmp.ne.s32.totalorder %s87, %s90
    %p96 = scmp.eq.s32.totalorder %s9, 0
    %p97 = por %p95, %p96
    %p98 = scmp.ne.s32.totalorder %s87, %s90
    %p99 = scmp.eq.s32.totalorder %s14, 1
    %p100 = por %p98, %p99
    %p101 = scmp.ne.s32.totalorder %s90, %s91
    %p102 = scmp.eq.s32.totalorder %s14, 0
    %p103 = por %p101, %p102
    %p104 = scmp.ne.s32.totalorder %s90, %s91
    %p105 = scmp.eq.s32.totalorder %s15, 1
    %p106 = por %p104, %p105
    %p108 = scmp.ne.s32.totalorder %s91, %s107
    %p109 = scmp.eq.s32.totalorder %s15, 0
    %p110 = por %p108, %p109
    %p111 = scmp.le.s32.totalorder 1, %s9
    %p112 = scmp.lt.s32.totalorder %s9, 3
    %p113 = pnand %p111, %p112
    %p114 = pneg %p113
    // Predicated region
    $region9: #{_forward_impl.20} parent=5 // pred_check
      _
    $region10: #{_forward_impl.20} parent=5 // pred_check_branch
      %116 = sbr.rel (%p113) target = $region12
    $region11: #{_forward_impl.20} parent=5 // pred_region
      %s117 = ssub.s32 %s9, 1
      // Predicated region
      $region13: #{_forward_impl.20} parent=11 // pred_check
        %p118 = pneg %p30
      $region14: #{_forward_impl.20} parent=11 // pred_check_branch
        %120 = sbr.rel (%p118) target = $region16
      $region15: #{_forward_impl.20} parent=11 // pred_region
        _
      $region16: #{_forward_impl.20} parent=11 // pred_fallthru
        _
      // Predicated region
      $region17: #{_forward_impl.20} parent=11 // pred_check
        %p121 = pneg %p77
      $region18: #{_forward_impl.20} parent=11 // pred_check_branch
        %123 = sbr.rel (%p121) target = $region20
      $region19: #{_forward_impl.20} parent=11 // pred_region
        _
      $region20: #{_forward_impl.20} parent=11 // pred_fallthru
        _
    $region12: #{_forward_impl.20} parent=5 // pred_fallthru
      _
    %p124 = scmp.lt.s32.totalorder %s9, 2
    // Predicated region
    $region21: #{_forward_impl.20} parent=5 // pred_check
      %p125 = pneg %p124
    $region22: #{_forward_impl.20} parent=5 // pred_check_branch
      %127 = sbr.rel (%p125) target = $region24
    $region23: #{_forward_impl.20} parent=5 // pred_region
      // Predicated region
      $region25: #{_forward_impl.20} parent=23 // pred_check
        %p128 = pneg %p50
      $region26: #{_forward_impl.20} parent=23 // pred_check_branch
        %130 = sbr.rel (%p128) target = $region28
      $region27: #{_forward_impl.20} parent=23 // pred_region
        %p131 = scmp.lt.s32.totalorder %s9, 1
        %s132 = scalar_select %p131, %s9, 1
        %s133 = smul.addr %s132, 2
        %s134 = smul.addr %s133, 4
        %s135 = scalar_lea.vmem %s1, %s134
      $region28: #{_forward_impl.20} parent=23 // pred_fallthru
        _
    $region24: #{_forward_impl.20} parent=5 // pred_fallthru
      _
    %p136 = scmp.le.s32.totalorder 1, %s9
    %p137 = scmp.lt.s32.totalorder %s9, 3
    %p138 = pnand %p136, %p137
    %p139 = pneg %p138
    // Predicated region
    $region29: #{_forward_impl.20} parent=5 // pred_check
      _
    $region30: #{_forward_impl.20} parent=5 // pred_check_branch
      %141 = sbr.rel (%p138) target = $region32
    $region31: #{_forward_impl.20} parent=5 // pred_region
      %s142 = ssub.s32 %s9, 1
      %p143 = pneg %p30
      %p144 = pneg %p27
      %p145 = scmp.lt.s32.totalorder %s14, 1
      %s146 = scalar_select %p145, %s14, 1
      %s147 = smul.addr %s146, 2
      %s148 = smul.addr %s147, 4
      %s149 = scalar_lea.vmem %s1, %s148
      %p150 = pneg %p56
      %p151 = pneg %p53
      %p152 = pneg %p77
      %p153 = pneg %p74
      %p154 = pneg %p103
      %p155 = pneg %p100
      %p156 = scmp.lt.s32.totalorder %s14, 1
      %s157 = scalar_select %p156, %s14, 1
      %s158 = smul.addr %s157, 2
      %s159 = smul.addr %s158, 8
      %s160 = scalar_lea.vmem %s3, %s159
      %p161 = scmp.lt.s32.totalorder %s14, 1
      %s162 = scalar_select %p161, %s14, 1
      %s163 = smul.addr %s162, 2
      %s164 = smul.addr %s163, 4
      %s165 = scalar_lea.vmem %s1, %s164
      %p166 = scmp.lt.s32.totalorder %s14, 1
      %s167 = scalar_select %p166, %s14, 1
      %s168 = smul.addr %s167, 2
      %s169 = smul.addr %s168, 8
      %s170 = scalar_lea.vmem %s3, %s169
      %v172 = vld [vmem:[%s0] sm:$0xf]
      %v173 = vld [vmem:[%s0 + $0x4] sm:$0xf]
      %v174 = vld [vmem:[%s165] sm:$0xf]
      %v175 = vld [vmem:[%s165 + $0x4] sm:$0xf]
      %v176 = vld [vmem:[%s2] sm:$0xff]
      %v177 = vld [vmem:[%s2 + $0x8] sm:$0xff]
      %179 = vset.pattern.permute.xlu0 0
      %180 = vperm.xlu0 %179, %v176
      %v181 = vpop.permute.xlu0 %180
      %184 = vset.pattern.permute.xlu0 0
      %185 = vperm.xlu0 %184, %v177
      %v186 = vpop.permute.xlu0 %185
      %v190 = vunpack.c.l.b16 %v172
      %v191 = vunpack.c.l.b16 %v173
      %v192 = vpack.c.b16 %v191, %v190
      %v195 = vunpack.c.l.b16 %v174
      %v196 = vunpack.c.l.b16 %v175
      %v197 = vpack.c.b16 %v196, %v195
      %vm199 = vcmask 130048
      %v201 = vsel %vm199, %v192, 0
      %203 = vmatprep.subr.bf16.mxu0 0
      %204 = vmatpush1.bf16.msra.mxu0 %v197
      %205 = vmatprep.subr.bf16.mxu0 0
      %206 = vmatpush1.bf16.msra.mxu0 0
      %207 = vmatprep.subr.bf16.mxu0 0
      %208 = vmatpush1.bf16.msra.mxu0 0
      %209 = vmatprep.subr.bf16.mxu0 0
      %210 = vmatpush1.bf16.msra.mxu0 0
      %211 = vmatprep.subr.bf16.mxu0 0
      %212 = vmatpush1.bf16.msra.mxu0 0
      %213 = vmatprep.subr.bf16.mxu0 0
      %214 = vmatpush1.bf16.msra.mxu0 0
      %215 = vmatprep.subr.bf16.mxu0 0
      %216 = vmatpush1.bf16.msra.mxu0 0
      %217 = vmatprep.subr.bf16.mxu0 0
      %218 = vmatpush1.bf16.msra.mxu0 0
      %219 = vmatprep.subr.bf16.mxu0 0
      %220 = vmatpush1.bf16.msra.mxu0 0
      %221 = vmatprep.subr.bf16.mxu0 0
      %222 = vmatpush1.bf16.msra.mxu0 0
      %223 = vmatprep.subr.bf16.mxu0 0
      %224 = vmatpush1.bf16.msra.mxu0 0
      %225 = vmatprep.subr.bf16.mxu0 0
      %226 = vmatpush1.bf16.msra.mxu0 0
      %227 = vmatprep.subr.bf16.mxu0 0
      %228 = vmatpush1.bf16.msra.mxu0 0
      %229 = vmatprep.subr.bf16.mxu0 0
      %230 = vmatpush1.bf16.msra.mxu0 0
      %231 = vmatprep.subr.bf16.mxu0 0
      %232 = vmatpush1.bf16.msra.mxu0 0
      %233 = vmatprep.subr.bf16.mxu0 0
      %234 = vmatpush1.bf16.msra.mxu0 0
      %235 = vmatprep.mubr.bf16.mxu0 0
      %236 = vmatmul.mubr.bf16.gmra.mrb[0].mxu0 %v201
      %v237 = vpop.f32.mrb[0].mxu0
      %v238 = vadd.f32 %v181, %v237
      %v239 = vpop.f32.mrb[0].mxu0
      %v240 = vpop.f32.mrb[0].mxu0
      %v241 = vadd.f32 %v186, %v240
      %v242 = vpop.f32.mrb[0].mxu0
      %243 = vdwg.mxu0
      %vm244 = vcmask 523264
      %245 = vst.msk [vmem:[%s170] sm:$0xff] %vm244, %v238
      %246 = vst.msk [vmem:[%s170 + $0x8] sm:$0xff] %vm244, %v241
      %p247 = scmp.lt.s32.totalorder %s14, 1
      %s248 = scalar_select %p247, %s14, 1
      %s249 = smul.addr %s248, 2
      %s250 = smul.addr %s249, 8
      %s251 = scalar_lea.vmem %s3, %s250
      // Predicated region
      $region33: #{_forward_impl.20} parent=31 // pred_check
        %p252 = pneg %p100
      $region34: #{_forward_impl.20} parent=31 // pred_check_branch
        %254 = sbr.rel (%p252) target = $region36
      $region35: #{_forward_impl.20} parent=31 // pred_region
        _
      $region36: #{_forward_impl.20} parent=31 // pred_fallthru
        _
    $region32: #{_forward_impl.20} parent=5 // pred_fallthru
      _
    %p255 = scmp.le.s32.totalorder 2, %s9
    // Predicated region
    $region37: #{_forward_impl.20} parent=5 // pred_check
      %p256 = pneg %p255
    $region38: #{_forward_impl.20} parent=5 // pred_check_branch
      %258 = sbr.rel (%p256) target = $region40
    $region39: #{_forward_impl.20} parent=5 // pred_region
      %s259 = ssub.s32 %s9, 2
      // Predicated region
      $region41: #{_forward_impl.20} parent=39 // pred_check
        %p260 = pneg %p106
      $region42: #{_forward_impl.20} parent=39 // pred_check_branch
        %262 = sbr.rel (%p260) target = $region44
      $region43: #{_forward_impl.20} parent=39 // pred_region
        %p263 = scmp.lt.s32.totalorder %s15, 1
        %s264 = scalar_select %p263, %s15, 1
        %s265 = smul.addr %s264, 2
        %s266 = smul.addr %s265, 8
        %s267 = scalar_lea.vmem %s3, %s266
      $region44: #{_forward_impl.20} parent=39 // pred_fallthru
        _
    $region40: #{_forward_impl.20} parent=5 // pred_fallthru
      _
  $region6: #{_forward_impl.20} parent=0 // loop_footer
    %s13 = sadd.s32 1, %s9
  $region7: #{_forward_impl.20} parent=0 // loop_footer_branch
    %8 = sbr.rel target = $region3
  $region8: #{_forward_impl.20} parent=0 // loop_exit
    _

// kernel: _forward_impl.19
$region0: #{_forward_impl.19}
  #allocation0 [shape = 'u32[]', space=smem, size = 0x4, offset = 0x4, fixed_abs, tag = 'smem constant byte address 0x4 - core index']
  #allocation1 [shape = 'u32[144,128]{1,0:T(1,128)}', space=vmem, size = 0x12000, scoped, tag = 'internal scratch']
  %s0 = inlined_call_operand.vmem [shape: bf16[16,216], index: 0, kind: input, shape index: {}]
  %s1 = inlined_call_operand.vmem [shape: bf16[2,216,64], index: 1, kind: input, shape index: {}]
  %s2 = inlined_call_operand.vmem [shape: f32[16,1], index: 2, kind: input, shape index: {}]
  %s3 = inlined_call_operand.vmem [shape: f32[2,16,64], index: 3, kind: output, shape index: {}]
  %s4 = sld [smem:[#allocation0]]
  $region45: #{_forward_impl.19} parent=0
    _
  %s6 = ssub.s32 1, %s4
  %s7 = scalar_select 0, %s6, %s4
  loop: start=0, step=1, limit=4
  $region2: #{_forward_impl.19} parent=0 // loop_pre_header
    _
  $region3: #{_forward_impl.19} parent=0 // loop_header
    %s9 = sphi 0, %s13
    %p10 = scmp.ge.s32.totalorder %s9, 4
    %s17 = sphi 0, %s17
    %s19 = sphi 0, %s17
    %s20 = sphi 0, %s19
    %s34 = sphi 0, %s20
    %s40 = sphi 0, %s42
    %s43 = sphi 0, %s40
    %s44 = sphi 0, %s43
    %s60 = sphi 0, %s44
    %s64 = sphi 0, %s64
    %s66 = sphi 0, %s64
    %s67 = sphi 0, %s66
    %s81 = sphi 0, %s67
    %s87 = sphi 0, %s89
    %s90 = sphi 0, %s87
    %s91 = sphi 0, %s90
    %s107 = sphi 0, %s91
  $region4: #{_forward_impl.19} parent=0 // loop_header_branch
    %12 = sbr.rel (%p10) target = $region8
  $region5: #{_forward_impl.19} parent=0 // loop_body
    %s14 = ssub.s32 %s9, 1
    %s15 = ssub.s32 %s9, 2
    %s16 = sadd.s32 %s9, 1
    %s18 = sadd.s32 %s17, 1
    %p21 = scmp.eq.s32.totalorder %s9, 1
    %p22 = scmp.ne.s32.totalorder %s17, %s19
    %p23 = scmp.eq.s32.totalorder %s9, 0
    %p24 = por %p22, %p23
    %p25 = scmp.ne.s32.totalorder %s17, %s19
    %p26 = scmp.eq.s32.totalorder %s14, 1
    %p27 = por %p25, %p26
    %p28 = scmp.ne.s32.totalorder %s19, %s20
    %p29 = scmp.eq.s32.totalorder %s14, 0
    %p30 = por %p28, %p29
    %p31 = scmp.ne.s32.totalorder %s19, %s20
    %p32 = scmp.eq.s32.totalorder %s15, 1
    %p33 = por %p31, %p32
    %p35 = scmp.ne.s32.totalorder %s20, %s34
    %p36 = scmp.eq.s32.totalorder %s15, 0
    %p37 = por %p35, %p36
    %s38 = ssub.s32 %s9, %s16
    %p39 = scmp.eq.s32.totalorder %s38, 0
    %s41 = sadd.s32 %s40, 1
    %s42 = scalar_select %p39, %s40, %s41
    %p45 = pneg %p39
    %p46 = scmp.eq.s32.totalorder %s9, 1
    %p47 = por %p45, %p46
    %p48 = scmp.ne.s32.totalorder %s40, %s43
    %p49 = scmp.eq.s32.totalorder %s9, 0
    %p50 = por %p48, %p49
    %p51 = scmp.ne.s32.totalorder %s40, %s43
    %p52 = scmp.eq.s32.totalorder %s14, 1
    %p53 = por %p51, %p52
    %p54 = scmp.ne.s32.totalorder %s43, %s44
    %p55 = scmp.eq.s32.totalorder %s14, 0
    %p56 = por %p54, %p55
    %p57 = scmp.ne.s32.totalorder %s43, %s44
    %p58 = scmp.eq.s32.totalorder %s15, 1
    %p59 = por %p57, %p58
    %p61 = scmp.ne.s32.totalorder %s44, %s60
    %p62 = scmp.eq.s32.totalorder %s15, 0
    %p63 = por %p61, %p62
    %s65 = sadd.s32 %s64, 1
    %p68 = scmp.eq.s32.totalorder %s9, 1
    %p69 = scmp.ne.s32.totalorder %s64, %s66
    %p70 = scmp.eq.s32.totalorder %s9, 0
    %p71 = por %p69, %p70
    %p72 = scmp.ne.s32.totalorder %s64, %s66
    %p73 = scmp.eq.s32.totalorder %s14, 1
    %p74 = por %p72, %p73
    %p75 = scmp.ne.s32.totalorder %s66, %s67
    %p76 = scmp.eq.s32.totalorder %s14, 0
    %p77 = por %p75, %p76
    %p78 = scmp.ne.s32.totalorder %s66, %s67
    %p79 = scmp.eq.s32.totalorder %s15, 1
    %p80 = por %p78, %p79
    %p82 = scmp.ne.s32.totalorder %s67, %s81
    %p83 = scmp.eq.s32.totalorder %s15, 0
    %p84 = por %p82, %p83
    %s85 = ssub.s32 %s9, %s16
    %p86 = scmp.eq.s32.totalorder %s85, 0
    %s88 = sadd.s32 %s87, 1
    %s89 = scalar_select %p86, %s87, %s88
    %p92 = pneg %p86
    %p93 = scmp.eq.s32.totalorder %s9, 1
    %p94 = por %p92, %p93
    %p95 = scmp.ne.s32.totalorder %s87, %s90
    %p96 = scmp.eq.s32.totalorder %s9, 0
    %p97 = por %p95, %p96
    %p98 = scmp.ne.s32.totalorder %s87, %s90
    %p99 = scmp.eq.s32.totalorder %s14, 1
    %p100 = por %p98, %p99
    %p101 = scmp.ne.s32.totalorder %s90, %s91
    %p102 = scmp.eq.s32.totalorder %s14, 0
    %p103 = por %p101, %p102
    %p104 = scmp.ne.s32.totalorder %s90, %s91
    %p105 = scmp.eq.s32.totalorder %s15, 1
    %p106 = por %p104, %p105
    %p108 = scmp.ne.s32.totalorder %s91, %s107
    %p109 = scmp.eq.s32.totalorder %s15, 0
    %p110 = por %p108, %p109
    %p111 = scmp.le.s32.totalorder 1, %s9
    %p112 = scmp.lt.s32.totalorder %s9, 3
    %p113 = pnand %p111, %p112
    %p114 = pneg %p113
    // Predicated region
    $region9: #{_forward_impl.19} parent=5 // pred_check
      _
    $region10: #{_forward_impl.19} parent=5 // pred_check_branch
      %116 = sbr.rel (%p113) target = $region12
    $region11: #{_forward_impl.19} parent=5 // pred_region
      %s117 = ssub.s32 %s9, 1
      // Predicated region
      $region13: #{_forward_impl.19} parent=11 // pred_check
        %p118 = pneg %p30
      $region14: #{_forward_impl.19} parent=11 // pred_check_branch
        %120 = sbr.rel (%p118) target = $region16
      $region15: #{_forward_impl.19} parent=11 // pred_region
        _
      $region16: #{_forward_impl.19} parent=11 // pred_fallthru
        _
      // Predicated region
      $region17: #{_forward_impl.19} parent=11 // pred_check
        %p121 = pneg %p77
      $region18: #{_forward_impl.19} parent=11 // pred_check_branch
        %123 = sbr.rel (%p121) target = $region20
      $region19: #{_forward_impl.19} parent=11 // pred_region
        _
      $region20: #{_forward_impl.19} parent=11 // pred_fallthru
        _
    $region12: #{_forward_impl.19} parent=5 // pred_fallthru
      _
    %p124 = scmp.lt.s32.totalorder %s9, 2
    // Predicated region
    $region21: #{_forward_impl.19} parent=5 // pred_check
      %p125 = pneg %p124
    $region22: #{_forward_impl.19} parent=5 // pred_check_branch
      %127 = sbr.rel (%p125) target = $region24
    $region23: #{_forward_impl.19} parent=5 // pred_region
      // Predicated region
      $region25: #{_forward_impl.19} parent=23 // pred_check
        %p128 = pneg %p50
      $region26: #{_forward_impl.19} parent=23 // pred_check_branch
        %130 = sbr.rel (%p128) target = $region28
      $region27: #{_forward_impl.19} parent=23 // pred_region
        %p131 = scmp.lt.s32.totalorder %s9, 1
        %s132 = scalar_select %p131, %s9, 1
        %s133 = smul.addr %s132, 27
        %s134 = smul.addr %s133, 4
        %s135 = scalar_lea.vmem %s1, %s134
      $region28: #{_forward_impl.19} parent=23 // pred_fallthru
        _
    $region24: #{_forward_impl.19} parent=5 // pred_fallthru
      _
    %p136 = scmp.le.s32.totalorder 1, %s9
    %p137 = scmp.lt.s32.totalorder %s9, 3
    %p138 = pnand %p136, %p137
    %p139 = pneg %p138
    // Predicated region
    $region29: #{_forward_impl.19} parent=5 // pred_check
      _
    $region30: #{_forward_impl.19} parent=5 // pred_check_branch
      %141 = sbr.rel (%p138) target = $region32
    $region31: #{_forward_impl.19} parent=5 // pred_region
      %s142 = ssub.s32 %s9, 1
      %p143 = pneg %p30
      %p144 = pneg %p27
      %p145 = scmp.lt.s32.totalorder %s14, 1
      %s146 = scalar_select %p145, %s14, 1
      %s147 = smul.addr %s146, 27
      %s148 = smul.addr %s147, 4
      %s149 = scalar_lea.vmem %s1, %s148
      %p150 = pneg %p56
      %p151 = pneg %p53
      %p152 = pneg %p77
      %p153 = pneg %p74
      %p154 = pneg %p103
      %p155 = pneg %p100
      %p156 = scmp.lt.s32.totalorder %s14, 1
      %s157 = scalar_select %p156, %s14, 1
      %s158 = smul.addr %s157, 2
      %s159 = smul.addr %s158, 8
      %s160 = scalar_lea.vmem %s3, %s159
      %p161 = scmp.lt.s32.totalorder %s14, 1
      %s162 = scalar_select %p161, %s14, 1
      %s163 = smul.addr %s162, 27
      %s164 = smul.addr %s163, 4
      %s165 = scalar_lea.vmem %s1, %s164
      %p166 = scmp.lt.s32.totalorder %s14, 1
      %s167 = scalar_select %p166, %s14, 1
      %s168 = smul.addr %s167, 2
      %s169 = smul.addr %s168, 8
      %s170 = scalar_lea.vmem %s3, %s169
      %v172 = vld [vmem:[%s0] sm:$0xff]
      %v173 = vld [vmem:[%s0 + $0x8] sm:$0xff]
      %v174 = vld [vmem:[%s165] sm:$0xf]
      %v175 = vld [vmem:[%s165 + $0x4] sm:$0xf]
      %v176 = vld [vmem:[%s165 + $0x8] sm:$0xf]
      %v177 = vld [vmem:[%s165 + $0xc] sm:$0xf]
      %v178 = vld [vmem:[%s165 + $0x10] sm:$0xf]
      %v179 = vld [vmem:[%s165 + $0x14] sm:$0xf]
      %v180 = vld [vmem:[%s165 + $0x18] sm:$0xf]
      %v181 = vld [vmem:[%s165 + $0x1c] sm:$0xf]
      %v182 = vld [vmem:[%s165 + $0x20] sm:$0xf]
      %v183 = vld [vmem:[%s165 + $0x24] sm:$0xf]
      %v184 = vld [vmem:[%s165 + $0x28] sm:$0xf]
      %v185 = vld [vmem:[%s165 + $0x2c] sm:$0xf]
      %v186 = vld [vmem:[%s165 + $0x30] sm:$0xf]
      %v187 = vld [vmem:[%s165 + $0x34] sm:$0xf]
      %v188 = vld [vmem:[%s165 + $0x38] sm:$0xf]
      %v189 = vld [vmem:[%s165 + $0x3c] sm:$0xf]
      %v190 = vld [vmem:[%s165 + $0x40] sm:$0xf]
      %v191 = vld [vmem:[%s165 + $0x44] sm:$0xf]
      %v192 = vld [vmem:[%s165 + $0x48] sm:$0xf]
      %v193 = vld [vmem:[%s165 + $0x4c] sm:$0xf]
      %v194 = vld [vmem:[%s165 + $0x50] sm:$0xf]
      %v195 = vld [vmem:[%s165 + $0x54] sm:$0xf]
      %v196 = vld [vmem:[%s165 + $0x58] sm:$0xf]
      %v197 = vld [vmem:[%s165 + $0x5c] sm:$0xf]
      %v198 = vld [vmem:[%s165 + $0x60] sm:$0xf]
      %v199 = vld [vmem:[%s165 + $0x64] sm:$0xf]
      %v200 = vld [vmem:[%s165 + $0x68] sm:$0xf]
      %v201 = vld [vmem:[%s2] sm:$0xff]
      %v202 = vld [vmem:[%s2 + $0x8] sm:$0xff]
      %204 = vset.pattern.permute.xlu0 0
      %205 = vperm.xlu0 %204, %v201
      %v206 = vpop.permute.xlu0 %205
      %209 = vset.pattern.permute.xlu0 0
      %210 = vperm.xlu0 %209, %v202
      %v211 = vpop.permute.xlu0 %210
      %v215 = vunpack.c.l.b16 %v172
      %v216 = vunpack.c.h.b16 %v172
      %v217 = vunpack.c.l.b16 %v173
      %v218 = vunpack.c.h.b16 %v173
      %v219 = vpack.c.b16 %v217, %v215
      %v220 = vpack.c.b16 %v218, %v216
      %v249 = vunpack.c.l.b16 %v174
      %v250 = vunpack.c.l.b16 %v175
      %v251 = vunpack.c.l.b16 %v176
      %v252 = vunpack.c.l.b16 %v177
      %v253 = vunpack.c.l.b16 %v178
      %v254 = vunpack.c.l.b16 %v179
      %v255 = vunpack.c.l.b16 %v180
      %v256 = vunpack.c.l.b16 %v181
      %v257 = vunpack.c.l.b16 %v182
      %v258 = vunpack.c.l.b16 %v183
      %v259 = vunpack.c.l.b16 %v184
      %v260 = vunpack.c.l.b16 %v185
      %v261 = vunpack.c.l.b16 %v186
      %v262 = vunpack.c.l.b16 %v187
      %v263 = vunpack.c.l.b16 %v188
      %v264 = vunpack.c.l.b16 %v189
      %v265 = vunpack.c.l.b16 %v190
      %v266 = vunpack.c.l.b16 %v191
      %v267 = vunpack.c.l.b16 %v192
      %v268 = vunpack.c.l.b16 %v193
      %v269 = vunpack.c.l.b16 %v194
      %v270 = vunpack.c.l.b16 %v195
      %v271 = vunpack.c.l.b16 %v196
      %v272 = vunpack.c.l.b16 %v197
      %v273 = vunpack.c.l.b16 %v198
      %v274 = vunpack.c.l.b16 %v199
      %v275 = vunpack.c.l.b16 %v200
      %v276 = vpack.c.b16 %v250, %v249
      %v277 = vpack.c.b16 %v252, %v251
      %v278 = vpack.c.b16 %v254, %v253
      %v279 = vpack.c.b16 %v256, %v255
      %v280 = vpack.c.b16 %v258, %v257
      %v281 = vpack.c.b16 %v260, %v259
      %v282 = vpack.c.b16 %v262, %v261
      %v283 = vpack.c.b16 %v264, %v263
      %v284 = vpack.c.b16 %v266, %v265
      %v285 = vpack.c.b16 %v268, %v267
      %v286 = vpack.c.b16 %v270, %v269
      %v287 = vpack.c.b16 %v272, %v271
      %v288 = vpack.c.b16 %v274, %v273
      %v289 = vpack.c.b16 %v275, %v275
      %vm303 = vcmask 719872
      %v305 = vsel %vm303, %v220, 0
      %vm307 = vcmask 1043456
      %v309 = vsel %vm307, %v289, 0
      %311 = vmatprep.subr.bf16.mxu0 0
      %312 = vmatpush1.bf16.msra.mxu0 %v276
      %313 = vmatprep.subr.bf16.mxu0 0
      %314 = vmatpush1.bf16.msra.mxu0 %v277
      %315 = vmatprep.subr.bf16.mxu0 0
      %316 = vmatpush1.bf16.msra.mxu0 %v278
      %317 = vmatprep.subr.bf16.mxu0 0
      %318 = vmatpush1.bf16.msra.mxu0 %v279
      %319 = vmatprep.subr.bf16.mxu0 0
      %320 = vmatpush1.bf16.msra.mxu0 %v280
      %321 = vmatprep.subr.bf16.mxu0 0
      %322 = vmatpush1.bf16.msra.mxu0 %v281
      %323 = vmatprep.subr.bf16.mxu0 0
      %324 = vmatpush1.bf16.msra.mxu0 %v282
      %325 = vmatprep.subr.bf16.mxu0 0
      %326 = vmatpush1.bf16.msra.mxu0 %v283
      %327 = vmatprep.subr.bf16.mxu0 0
      %328 = vmatpush1.bf16.msra.mxu0 %v284
      %329 = vmatprep.subr.bf16.mxu0 0
      %330 = vmatpush1.bf16.msra.mxu0 %v285
      %331 = vmatprep.subr.bf16.mxu0 0
      %332 = vmatpush1.bf16.msra.mxu0 %v286
      %333 = vmatprep.subr.bf16.mxu0 0
      %334 = vmatpush1.bf16.msra.mxu0 %v287
      %335 = vmatprep.subr.bf16.mxu0 0
      %336 = vmatpush1.bf16.msra.mxu0 %v288
      %337 = vmatprep.subr.bf16.mxu0 0
      %338 = vmatpush1.bf16.msra.mxu0 %v309
      %339 = vmatprep.subr.bf16.mxu0 0
      %340 = vmatpush1.bf16.msra.mxu0 0
      %341 = vmatprep.subr.bf16.mxu0 0
      %342 = vmatpush1.bf16.msra.mxu0 0
      %343 = vmatprep.mubr.bf16.mxu0 %v305
      %344 = vmatmul.mubr.bf16.gmra.mrb[0].mxu0 %v219
      %v345 = vpop.f32.mrb[0].mxu0
      %v346 = vadd.f32 %v206, %v345
      %v347 = vpop.f32.mrb[0].mxu0
      %v348 = vpop.f32.mrb[0].mxu0
      %v349 = vadd.f32 %v211, %v348
      %v350 = vpop.f32.mrb[0].mxu0
      %351 = vdwg.mxu0
      %vm352 = vcmp.gt.f32.partialorder %v346, 0.0
      %vm353 = vcmp.gt.f32.partialorder %v349, 0.0
      %v354 = vmul.f32 %v346, 0.1
      %v355 = vmul.f32 %v349, 0.1
      %v356 = vsel %vm352, %v346, %v354
      %v357 = vsel %vm353, %v349, %v355
      %vm358 = vcmask 523264
      %359 = vst.msk [vmem:[%s170] sm:$0xff] %vm358, %v356
      %360 = vst.msk [vmem:[%s170 + $0x8] sm:$0xff] %vm358, %v357
      %p361 = scmp.lt.s32.totalorder %s14, 1
      %s362 = scalar_select %p361, %s14, 1
      %s363 = smul.addr %s362, 2
      %s364 = smul.addr %s363, 8
      %s365 = scalar_lea.vmem %s3, %s364
      // Predicated region
      $region33: #{_forward_impl.19} parent=31 // pred_check
        %p366 = pneg %p100
      $region34: #{_forward_impl.19} parent=31 // pred_check_branch
        %368 = sbr.rel (%p366) target = $region36
      $region35: #{_forward_impl.19} parent=31 // pred_region
        _
      $region36: #{_forward_impl.19} parent=31 // pred_fallthru
        _
    $region32: #{_forward_impl.19} parent=5 // pred_fallthru
      _
    %p369 = scmp.le.s32.totalorder 2, %s9
    // Predicated region
    $region37: #{_forward_impl.19} parent=5 // pred_check
      %p370 = pneg %p369
    $region38: #{_forward_impl.19} parent=5 // pred_check_branch
      %372 = sbr.rel (%p370) target = $region40
    $region39: #{_forward_impl.19} parent=5 // pred_region
      %s373 = ssub.s32 %s9, 2
      // Predicated region
      $region41: #{_forward_impl.19} parent=39 // pred_check
        %p374 = pneg %p106
      $region42: #{_forward_impl.19} parent=39 // pred_check_branch
        %376 = sbr.rel (%p374) target = $region44
      $region43: #{_forward_impl.19} parent=39 // pred_region
        %p377 = scmp.lt.s32.totalorder %s15, 1
        %s378 = scalar_select %p377, %s15, 1
        %s379 = smul.addr %s378, 2
        %s380 = smul.addr %s379, 8
        %s381 = scalar_lea.vmem %s3, %s380
      $region44: #{_forward_impl.19} parent=39 // pred_fallthru
        _
    $region40: #{_forward_impl.19} parent=5 // pred_fallthru
      _
  $region6: #{_forward_impl.19} parent=0 // loop_footer
    %s13 = sadd.s32 1, %s9
  $region7: #{_forward_impl.19} parent=0 // loop_footer_branch
    %8 = sbr.rel target = $region3
  $region8: #{_forward_impl.19} parent=0 // loop_exit
    _

// kernel: _forward_impl.16
$region0: #{_forward_impl.16}
  #allocation0 [shape = 'u32[]', space=smem, size = 0x4, offset = 0x4, fixed_abs, tag = 'smem constant byte address 0x4 - core index']
  #allocation1 [shape = 'u32[144,128]{1,0:T(1,128)}', space=vmem, size = 0x12000, scoped, tag = 'internal scratch']
  %s0 = inlined_call_operand.vmem [shape: bf16[16,32], index: 0, kind: input, shape index: {}]
  %s1 = inlined_call_operand.vmem [shape: bf16[2,32,16], index: 1, kind: input, shape index: {}]
  %s2 = inlined_call_operand.vmem [shape: f32[16,1], index: 2, kind: input, shape index: {}]
  %s3 = inlined_call_operand.vmem [shape: f32[2,16,16], index: 3, kind: output, shape index: {}]
  %s4 = sld [smem:[#allocation0]]
  $region45: #{_forward_impl.16} parent=0
    _
  %s6 = ssub.s32 1, %s4
  %s7 = scalar_select 0, %s6, %s4
  loop: start=0, step=1, limit=4
  $region2: #{_forward_impl.16} parent=0 // loop_pre_header
    _
  $region3: #{_forward_impl.16} parent=0 // loop_header
    %s9 = sphi 0, %s13
    %p10 = scmp.ge.s32.totalorder %s9, 4
    %s17 = sphi 0, %s17
    %s19 = sphi 0, %s17
    %s20 = sphi 0, %s19
    %s34 = sphi 0, %s20
    %s40 = sphi 0, %s42
    %s43 = sphi 0, %s40
    %s44 = sphi 0, %s43
    %s60 = sphi 0, %s44
    %s64 = sphi 0, %s64
    %s66 = sphi 0, %s64
    %s67 = sphi 0, %s66
    %s81 = sphi 0, %s67
    %s87 = sphi 0, %s89
    %s90 = sphi 0, %s87
    %s91 = sphi 0, %s90
    %s107 = sphi 0, %s91
  $region4: #{_forward_impl.16} parent=0 // loop_header_branch
    %12 = sbr.rel (%p10) target = $region8
  $region5: #{_forward_impl.16} parent=0 // loop_body
    %s14 = ssub.s32 %s9, 1
    %s15 = ssub.s32 %s9, 2
    %s16 = sadd.s32 %s9, 1
    %s18 = sadd.s32 %s17, 1
    %p21 = scmp.eq.s32.totalorder %s9, 1
    %p22 = scmp.ne.s32.totalorder %s17, %s19
    %p23 = scmp.eq.s32.totalorder %s9, 0
    %p24 = por %p22, %p23
    %p25 = scmp.ne.s32.totalorder %s17, %s19
    %p26 = scmp.eq.s32.totalorder %s14, 1
    %p27 = por %p25, %p26
    %p28 = scmp.ne.s32.totalorder %s19, %s20
    %p29 = scmp.eq.s32.totalorder %s14, 0
    %p30 = por %p28, %p29
    %p31 = scmp.ne.s32.totalorder %s19, %s20
    %p32 = scmp.eq.s32.totalorder %s15, 1
    %p33 = por %p31, %p32
    %p35 = scmp.ne.s32.totalorder %s20, %s34
    %p36 = scmp.eq.s32.totalorder %s15, 0
    %p37 = por %p35, %p36
    %s38 = ssub.s32 %s9, %s16
    %p39 = scmp.eq.s32.totalorder %s38, 0
    %s41 = sadd.s32 %s40, 1
    %s42 = scalar_select %p39, %s40, %s41
    %p45 = pneg %p39
    %p46 = scmp.eq.s32.totalorder %s9, 1
    %p47 = por %p45, %p46
    %p48 = scmp.ne.s32.totalorder %s40, %s43
    %p49 = scmp.eq.s32.totalorder %s9, 0
    %p50 = por %p48, %p49
    %p51 = scmp.ne.s32.totalorder %s40, %s43
    %p52 = scmp.eq.s32.totalorder %s14, 1
    %p53 = por %p51, %p52
    %p54 = scmp.ne.s32.totalorder %s43, %s44
    %p55 = scmp.eq.s32.totalorder %s14, 0
    %p56 = por %p54, %p55
    %p57 = scmp.ne.s32.totalorder %s43, %s44
    %p58 = scmp.eq.s32.totalorder %s15, 1
    %p59 = por %p57, %p58
    %p61 = scmp.ne.s32.totalorder %s44, %s60
    %p62 = scmp.eq.s32.totalorder %s15, 0
    %p63 = por %p61, %p62
    %s65 = sadd.s32 %s64, 1
    %p68 = scmp.eq.s32.totalorder %s9, 1
    %p69 = scmp.ne.s32.totalorder %s64, %s66
    %p70 = scmp.eq.s32.totalorder %s9, 0
    %p71 = por %p69, %p70
    %p72 = scmp.ne.s32.totalorder %s64, %s66
    %p73 = scmp.eq.s32.totalorder %s14, 1
    %p74 = por %p72, %p73
    %p75 = scmp.ne.s32.totalorder %s66, %s67
    %p76 = scmp.eq.s32.totalorder %s14, 0
    %p77 = por %p75, %p76
    %p78 = scmp.ne.s32.totalorder %s66, %s67
    %p79 = scmp.eq.s32.totalorder %s15, 1
    %p80 = por %p78, %p79
    %p82 = scmp.ne.s32.totalorder %s67, %s81
    %p83 = scmp.eq.s32.totalorder %s15, 0
    %p84 = por %p82, %p83
    %s85 = ssub.s32 %s9, %s16
    %p86 = scmp.eq.s32.totalorder %s85, 0
    %s88 = sadd.s32 %s87, 1
    %s89 = scalar_select %p86, %s87, %s88
    %p92 = pneg %p86
    %p93 = scmp.eq.s32.totalorder %s9, 1
    %p94 = por %p92, %p93
    %p95 = scmp.ne.s32.totalorder %s87, %s90
    %p96 = scmp.eq.s32.totalorder %s9, 0
    %p97 = por %p95, %p96
    %p98 = scmp.ne.s32.totalorder %s87, %s90
    %p99 = scmp.eq.s32.totalorder %s14, 1
    %p100 = por %p98, %p99
    %p101 = scmp.ne.s32.totalorder %s90, %s91
    %p102 = scmp.eq.s32.totalorder %s14, 0
    %p103 = por %p101, %p102
    %p104 = scmp.ne.s32.totalorder %s90, %s91
    %p105 = scmp.eq.s32.totalorder %s15, 1
    %p106 = por %p104, %p105
    %p108 = scmp.ne.s32.totalorder %s91, %s107
    %p109 = scmp.eq.s32.totalorder %s15, 0
    %p110 = por %p108, %p109
    %p111 = scmp.le.s32.totalorder 1, %s9
    %p112 = scmp.lt.s32.totalorder %s9, 3
    %p113 = pnand %p111, %p112
    %p114 = pneg %p113
    // Predicated region
    $region9: #{_forward_impl.16} parent=5 // pred_check
      _
    $region10: #{_forward_impl.16} parent=5 // pred_check_branch
      %116 = sbr.rel (%p113) target = $region12
    $region11: #{_forward_impl.16} parent=5 // pred_region
      %s117 = ssub.s32 %s9, 1
      // Predicated region
      $region13: #{_forward_impl.16} parent=11 // pred_check
        %p118 = pneg %p30
      $region14: #{_forward_impl.16} parent=11 // pred_check_branch
        %120 = sbr.rel (%p118) target = $region16
      $region15: #{_forward_impl.16} parent=11 // pred_region
        _
      $region16: #{_forward_impl.16} parent=11 // pred_fallthru
        _
      // Predicated region
      $region17: #{_forward_impl.16} parent=11 // pred_check
        %p121 = pneg %p77
      $region18: #{_forward_impl.16} parent=11 // pred_check_branch
        %123 = sbr.rel (%p121) target = $region20
      $region19: #{_forward_impl.16} parent=11 // pred_region
        _
      $region20: #{_forward_impl.16} parent=11 // pred_fallthru
        _
    $region12: #{_forward_impl.16} parent=5 // pred_fallthru
      _
    %p124 = scmp.lt.s32.totalorder %s9, 2
    // Predicated region
    $region21: #{_forward_impl.16} parent=5 // pred_check
      %p125 = pneg %p124
    $region22: #{_forward_impl.16} parent=5 // pred_check_branch
      %127 = sbr.rel (%p125) target = $region24
    $region23: #{_forward_impl.16} parent=5 // pred_region
      // Predicated region
      $region25: #{_forward_impl.16} parent=23 // pred_check
        %p128 = pneg %p50
      $region26: #{_forward_impl.16} parent=23 // pred_check_branch
        %130 = sbr.rel (%p128) target = $region28
      $region27: #{_forward_impl.16} parent=23 // pred_region
        %p131 = scmp.lt.s32.totalorder %s9, 1
        %s132 = scalar_select %p131, %s9, 1
        %s133 = smul.addr %s132, 4
        %s134 = smul.addr %s133, 4
        %s135 = scalar_lea.vmem %s1, %s134
      $region28: #{_forward_impl.16} parent=23 // pred_fallthru
        _
    $region24: #{_forward_impl.16} parent=5 // pred_fallthru
      _
    %p136 = scmp.le.s32.totalorder 1, %s9
    %p137 = scmp.lt.s32.totalorder %s9, 3
    %p138 = pnand %p136, %p137
    %p139 = pneg %p138
    // Predicated region
    $region29: #{_forward_impl.16} parent=5 // pred_check
      _
    $region30: #{_forward_impl.16} parent=5 // pred_check_branch
      %141 = sbr.rel (%p138) target = $region32
    $region31: #{_forward_impl.16} parent=5 // pred_region
      %s142 = ssub.s32 %s9, 1
      %p143 = pneg %p30
      %p144 = pneg %p27
      %p145 = scmp.lt.s32.totalorder %s14, 1
      %s146 = scalar_select %p145, %s14, 1
      %s147 = smul.addr %s146, 4
      %s148 = smul.addr %s147, 4
      %s149 = scalar_lea.vmem %s1, %s148
      %p150 = pneg %p56
      %p151 = pneg %p53
      %p152 = pneg %p77
      %p153 = pneg %p74
      %p154 = pneg %p103
      %p155 = pneg %p100
      %p156 = scmp.lt.s32.totalorder %s14, 1
      %s157 = scalar_select %p156, %s14, 1
      %s158 = smul.addr %s157, 2
      %s159 = smul.addr %s158, 8
      %s160 = scalar_lea.vmem %s3, %s159
      %p161 = scmp.lt.s32.totalorder %s14, 1
      %s162 = scalar_select %p161, %s14, 1
      %s163 = smul.addr %s162, 4
      %s164 = smul.addr %s163, 4
      %s165 = scalar_lea.vmem %s1, %s164
      %p166 = scmp.lt.s32.totalorder %s14, 1
      %s167 = scalar_select %p166, %s14, 1
      %s168 = smul.addr %s167, 2
      %s169 = smul.addr %s168, 8
      %s170 = scalar_lea.vmem %s3, %s169
      %v172 = vld [vmem:[%s0] sm:$0xf]
      %v173 = vld [vmem:[%s0 + $0x4] sm:$0xf]
      %v174 = vld [vmem:[%s165] sm:$0xf]
      %v175 = vld [vmem:[%s165 + $0x4] sm:$0xf]
      %v176 = vld [vmem:[%s165 + $0x8] sm:$0xf]
      %v177 = vld [vmem:[%s165 + $0xc] sm:$0xf]
      %v178 = vld [vmem:[%s2] sm:$0xff]
      %v179 = vld [vmem:[%s2 + $0x8] sm:$0xff]
      %181 = vset.pattern.permute.xlu0 0
      %182 = vperm.xlu0 %181, %v178
      %v183 = vpop.permute.xlu0 %182
      %186 = vset.pattern.permute.xlu0 0
      %187 = vperm.xlu0 %186, %v179
      %v188 = vpop.permute.xlu0 %187
      %v192 = vunpack.c.l.b16 %v172
      %v193 = vunpack.c.l.b16 %v173
      %v194 = vpack.c.b16 %v193, %v192
      %v199 = vunpack.c.l.b16 %v174
      %v200 = vunpack.c.l.b16 %v175
      %v201 = vunpack.c.l.b16 %v176
      %v202 = vunpack.c.l.b16 %v177
      %v203 = vpack.c.b16 %v200, %v199
      %v204 = vpack.c.b16 %v202, %v201
      %vm207 = vcmask 261120
      %v209 = vsel %vm207, %v194, 0
      %211 = vmatprep.subr.bf16.mxu0 0
      %212 = vmatpush1.bf16.msra.mxu0 %v203
      %213 = vmatprep.subr.bf16.mxu0 0
      %214 = vmatpush1.bf16.msra.mxu0 %v204
      %215 = vmatprep.subr.bf16.mxu0 0
      %216 = vmatpush1.bf16.msra.mxu0 0
      %217 = vmatprep.subr.bf16.mxu0 0
      %218 = vmatpush1.bf16.msra.mxu0 0
      %219 = vmatprep.subr.bf16.mxu0 0
      %220 = vmatpush1.bf16.msra.mxu0 0
      %221 = vmatprep.subr.bf16.mxu0 0
      %222 = vmatpush1.bf16.msra.mxu0 0
      %223 = vmatprep.subr.bf16.mxu0 0
      %224 = vmatpush1.bf16.msra.mxu0 0
      %225 = vmatprep.subr.bf16.mxu0 0
      %226 = vmatpush1.bf16.msra.mxu0 0
      %227 = vmatprep.subr.bf16.mxu0 0
      %228 = vmatpush1.bf16.msra.mxu0 0
      %229 = vmatprep.subr.bf16.mxu0 0
      %230 = vmatpush1.bf16.msra.mxu0 0
      %231 = vmatprep.subr.bf16.mxu0 0
      %232 = vmatpush1.bf16.msra.mxu0 0
      %233 = vmatprep.subr.bf16.mxu0 0
      %234 = vmatpush1.bf16.msra.mxu0 0
      %235 = vmatprep.subr.bf16.mxu0 0
      %236 = vmatpush1.bf16.msra.mxu0 0
      %237 = vmatprep.subr.bf16.mxu0 0
      %238 = vmatpush1.bf16.msra.mxu0 0
      %239 = vmatprep.subr.bf16.mxu0 0
      %240 = vmatpush1.bf16.msra.mxu0 0
      %241 = vmatprep.subr.bf16.mxu0 0
      %242 = vmatpush1.bf16.msra.mxu0 0
      %243 = vmatprep.mubr.bf16.mxu0 0
      %244 = vmatmul.mubr.bf16.gmra.mrb[0].mxu0 %v209
      %v245 = vpop.f32.mrb[0].mxu0
      %v246 = vadd.f32 %v183, %v245
      %v247 = vpop.f32.mrb[0].mxu0
      %v248 = vpop.f32.mrb[0].mxu0
      %v249 = vadd.f32 %v188, %v248
      %v250 = vpop.f32.mrb[0].mxu0
      %251 = vdwg.mxu0
      %vm252 = vcmask 130048
      %253 = vst.msk [vmem:[%s170] sm:$0xff] %vm252, %v246
      %254 = vst.msk [vmem:[%s170 + $0x8] sm:$0xff] %vm252, %v249
      %p255 = scmp.lt.s32.totalorder %s14, 1
      %s256 = scalar_select %p255, %s14, 1
      %s257 = smul.addr %s256, 2
      %s258 = smul.addr %s257, 8
      %s259 = scalar_lea.vmem %s3, %s258
      // Predicated region
      $region33: #{_forward_impl.16} parent=31 // pred_check
        %p260 = pneg %p100
      $region34: #{_forward_impl.16} parent=31 // pred_check_branch
        %262 = sbr.rel (%p260) target = $region36
      $region35: #{_forward_impl.16} parent=31 // pred_region
        _
      $region36: #{_forward_impl.16} parent=31 // pred_fallthru
        _
    $region32: #{_forward_impl.16} parent=5 // pred_fallthru
      _
    %p263 = scmp.le.s32.totalorder 2, %s9
    // Predicated region
    $region37: #{_forward_impl.16} parent=5 // pred_check
      %p264 = pneg %p263
    $region38: #{_forward_impl.16} parent=5 // pred_check_branch
      %266 = sbr.rel (%p264) target = $region40
    $region39: #{_forward_impl.16} parent=5 // pred_region
      %s267 = ssub.s32 %s9, 2
      // Predicated region
      $region41: #{_forward_impl.16} parent=39 // pred_check
        %p268 = pneg %p106
      $region42: #{_forward_impl.16} parent=39 // pred_check_branch
        %270 = sbr.rel (%p268) target = $region44
      $region43: #{_forward_impl.16} parent=39 // pred_region
        %p271 = scmp.lt.s32.totalorder %s15, 1
        %s272 = scalar_select %p271, %s15, 1
        %s273 = smul.addr %s272, 2
        %s274 = smul.addr %s273, 8
        %s275 = scalar_lea.vmem %s3, %s274
      $region44: #{_forward_impl.16} parent=39 // pred_fallthru
        _
    $region40: #{_forward_impl.16} parent=5 // pred_fallthru
      _
  $region6: #{_forward_impl.16} parent=0 // loop_footer
    %s13 = sadd.s32 1, %s9
  $region7: #{_forward_impl.16} parent=0 // loop_footer_branch
    %8 = sbr.rel target = $region3
  $region8: #{_forward_impl.16} parent=0 // loop_exit
    _

// kernel: _forward_impl.21
$region0: #{_forward_impl.21}
  #allocation0 [shape = 'u32[]', space=smem, size = 0x4, offset = 0x4, fixed_abs, tag = 'smem constant byte address 0x4 - core index']
  #allocation1 [shape = 'u32[144,128]{1,0:T(1,128)}', space=vmem, size = 0x12000, scoped, tag = 'internal scratch']
  %s0 = inlined_call_operand.vmem [shape: f32[2,2,8,64], index: 0, kind: input, shape index: {}]
  %s1 = inlined_call_operand.vmem [shape: f32[2,64], index: 1, kind: input, shape index: {}]
  %s2 = inlined_call_operand.vmem [shape: f32[2,7,128], index: 2, kind: output, shape index: {}]
  %s3 = sld [smem:[#allocation0]]
  $region41: #{_forward_impl.21} parent=0
    _
  %s5 = ssub.s32 1, %s3
  %s6 = scalar_select 0, %s5, %s3
  loop: start=0, step=1, limit=4
  $region2: #{_forward_impl.21} parent=0 // loop_pre_header
    _
  $region3: #{_forward_impl.21} parent=0 // loop_header
    %s8 = sphi 0, %s12
    %p9 = scmp.ge.s32.totalorder %s8, 4
    %s18 = sphi 0, %s20
    %s21 = sphi 0, %s18
    %s22 = sphi 0, %s21
    %s38 = sphi 0, %s22
    %s42 = sphi 0, %s42
    %s44 = sphi 0, %s42
    %s45 = sphi 0, %s44
    %s59 = sphi 0, %s45
    %s65 = sphi 0, %s67
    %s68 = sphi 0, %s65
    %s69 = sphi 0, %s68
    %s85 = sphi 0, %s69
  $region4: #{_forward_impl.21} parent=0 // loop_header_branch
    %11 = sbr.rel (%p9) target = $region8
  $region5: #{_forward_impl.21} parent=0 // loop_body
    %s13 = ssub.s32 %s8, 1
    %s14 = ssub.s32 %s8, 2
    %s15 = sadd.s32 %s8, 1
    %s16 = ssub.s32 %s8, %s15
    %p17 = scmp.eq.s32.totalorder %s16, 0
    %s19 = sadd.s32 %s18, 1
    %s20 = scalar_select %p17, %s18, %s19
    %p23 = pneg %p17
    %p24 = scmp.eq.s32.totalorder %s8, 1
    %p25 = por %p23, %p24
    %p26 = scmp.ne.s32.totalorder %s18, %s21
    %p27 = scmp.eq.s32.totalorder %s8, 0
    %p28 = por %p26, %p27
    %p29 = scmp.ne.s32.totalorder %s18, %s21
    %p30 = scmp.eq.s32.totalorder %s13, 1
    %p31 = por %p29, %p30
    %p32 = scmp.ne.s32.totalorder %s21, %s22
    %p33 = scmp.eq.s32.totalorder %s13, 0
    %p34 = por %p32, %p33
    %p35 = scmp.ne.s32.totalorder %s21, %s22
    %p36 = scmp.eq.s32.totalorder %s14, 1
    %p37 = por %p35, %p36
    %p39 = scmp.ne.s32.totalorder %s22, %s38
    %p40 = scmp.eq.s32.totalorder %s14, 0
    %p41 = por %p39, %p40
    %s43 = sadd.s32 %s42, 1
    %p46 = scmp.eq.s32.totalorder %s8, 1
    %p47 = scmp.ne.s32.totalorder %s42, %s44
    %p48 = scmp.eq.s32.totalorder %s8, 0
    %p49 = por %p47, %p48
    %p50 = scmp.ne.s32.totalorder %s42, %s44
    %p51 = scmp.eq.s32.totalorder %s13, 1
    %p52 = por %p50, %p51
    %p53 = scmp.ne.s32.totalorder %s44, %s45
    %p54 = scmp.eq.s32.totalorder %s13, 0
    %p55 = por %p53, %p54
    %p56 = scmp.ne.s32.totalorder %s44, %s45
    %p57 = scmp.eq.s32.totalorder %s14, 1
    %p58 = por %p56, %p57
    %p60 = scmp.ne.s32.totalorder %s45, %s59
    %p61 = scmp.eq.s32.totalorder %s14, 0
    %p62 = por %p60, %p61
    %s63 = ssub.s32 %s8, %s15
    %p64 = scmp.eq.s32.totalorder %s63, 0
    %s66 = sadd.s32 %s65, 1
    %s67 = scalar_select %p64, %s65, %s66
    %p70 = pneg %p64
    %p71 = scmp.eq.s32.totalorder %s8, 1
    %p72 = por %p70, %p71
    %p73 = scmp.ne.s32.totalorder %s65, %s68
    %p74 = scmp.eq.s32.totalorder %s8, 0
    %p75 = por %p73, %p74
    %p76 = scmp.ne.s32.totalorder %s65, %s68
    %p77 = scmp.eq.s32.totalorder %s13, 1
    %p78 = por %p76, %p77
    %p79 = scmp.ne.s32.totalorder %s68, %s69
    %p80 = scmp.eq.s32.totalorder %s13, 0
    %p81 = por %p79, %p80
    %p82 = scmp.ne.s32.totalorder %s68, %s69
    %p83 = scmp.eq.s32.totalorder %s14, 1
    %p84 = por %p82, %p83
    %p86 = scmp.ne.s32.totalorder %s69, %s85
    %p87 = scmp.eq.s32.totalorder %s14, 0
    %p88 = por %p86, %p87
    %p89 = scmp.le.s32.totalorder 1, %s8
    %p90 = scmp.lt.s32.totalorder %s8, 3
    %p91 = pnand %p89, %p90
    %p92 = pneg %p91
    // Predicated region
    $region9: #{_forward_impl.21} parent=5 // pred_check
      _
    $region10: #{_forward_impl.21} parent=5 // pred_check_branch
      %94 = sbr.rel (%p91) target = $region12
    $region11: #{_forward_impl.21} parent=5 // pred_region
      %s95 = ssub.s32 %s8, 1
      // Predicated region
      $region13: #{_forward_impl.21} parent=11 // pred_check
        %p96 = pneg %p55
      $region14: #{_forward_impl.21} parent=11 // pred_check_branch
        %98 = sbr.rel (%p96) target = $region16
      $region15: #{_forward_impl.21} parent=11 // pred_region
        _
      $region16: #{_forward_impl.21} parent=11 // pred_fallthru
        _
    $region12: #{_forward_impl.21} parent=5 // pred_fallthru
      _
    %p99 = scmp.lt.s32.totalorder %s8, 2
    // Predicated region
    $region17: #{_forward_impl.21} parent=5 // pred_check
      %p100 = pneg %p99
    $region18: #{_forward_impl.21} parent=5 // pred_check_branch
      %102 = sbr.rel (%p100) target = $region20
    $region19: #{_forward_impl.21} parent=5 // pred_region
      // Predicated region
      $region21: #{_forward_impl.21} parent=19 // pred_check
        %p103 = pneg %p28
      $region22: #{_forward_impl.21} parent=19 // pred_check_branch
        %105 = sbr.rel (%p103) target = $region24
      $region23: #{_forward_impl.21} parent=19 // pred_region
        %p106 = scmp.lt.s32.totalorder %s8, 1
        %s107 = scalar_select %p106, %s8, 1
        %s108 = smul.addr %s107, 2
        %s109 = smul.addr %s108, 8
        %s110 = scalar_lea.vmem %s0, %s109
      $region24: #{_forward_impl.21} parent=19 // pred_fallthru
        _
    $region20: #{_forward_impl.21} parent=5 // pred_fallthru
      _
    %p111 = scmp.le.s32.totalorder 1, %s8
    %p112 = scmp.lt.s32.totalorder %s8, 3
    %p113 = pnand %p111, %p112
    %p114 = pneg %p113
    // Predicated region
    $region25: #{_forward_impl.21} parent=5 // pred_check
      _
    $region26: #{_forward_impl.21} parent=5 // pred_check_branch
      %116 = sbr.rel (%p113) target = $region28
    $region27: #{_forward_impl.21} parent=5 // pred_region
      %s117 = ssub.s32 %s8, 1
      %p118 = scmp.lt.s32.totalorder %s13, 1
      %s119 = scalar_select %p118, %s13, 1
      %s120 = smul.addr %s119, 2
      %s121 = smul.addr %s120, 8
      %s122 = scalar_lea.vmem %s0, %s121
      %p123 = pneg %p34
      %p124 = pneg %p31
      %p125 = pneg %p55
      %p126 = pneg %p52
      %p127 = pneg %p81
      %p128 = pneg %p78
      %p129 = scmp.lt.s32.totalorder %s13, 1
      %s130 = scalar_select %p129, %s13, 1
      %s131 = smul.addr %s130, 8
      %s132 = scalar_lea.vmem %s2, %s131
      %p133 = scmp.lt.s32.totalorder %s13, 1
      %s134 = scalar_select %p133, %s13, 1
      %s135 = smul.addr %s134, 2
      %s136 = smul.addr %s135, 8
      %s137 = scalar_lea.vmem %s0, %s136
      %p138 = scmp.lt.s32.totalorder %s13, 1
      %s139 = scalar_select %p138, %s13, 1
      %s140 = smul.addr %s139, 8
      %s141 = scalar_lea.vmem %s2, %s140
      %v142 = vld [vmem:[%s1] sm:$0x1]
      %v143 = vld [vmem:[%s1 + $0x1] sm:$0x1]
      %v144 = vld [vmem:[%s137] sm:$0xff]
      %v145 = vsub.f32 0.0, %v144
      %v146 = vmul.f32 %v145, 1.442695
      %v147 = vpow.pop %v146
      %v148 = vadd.f32 %v147, 1.0
      %v149 = vrcp.pop %v148
      %v150 = vmul.f32 1.0, %v149
      %v151 = vmul.f32 %v150, 1.1
      %v152 = vsub.f32 %v151, 0.05
      %v153 = vadd.f32 %v152, %v142
      %v154 = vrcp.pop 8.0
      %v155 = vmul.f32 %v153, %v154
      %v157 = vrot.slane %v143, 7
      %v159 = vadd.f32 %v152, %v157
      %v160 = vmul.f32 %v159, %v154
      %v161 = vmin.f32 %v144, 80.0
      %v162 = vmul.f32 %v161, 1.442695
      %v163 = vpow.pop %v162
      %v164 = vmul.f32 %v163, 8.0
      %v165 = vmul.f32 %v164, %v154
      %v166 = vmul.f32 %v163, 12.0
      %v167 = vmul.f32 %v166, %v154
      %v168 = vmul.f32 %v165, 0.5
      %v170 = vrot.slane %v168, 2
      %v172 = vsub.f32 %v155, %v170
      %v173 = vmul.f32 %v167, 0.5
      %v175 = vrot.slane %v173, 2
      %v177 = vsub.f32 %v160, %v175
      %v179 = vrot.slane %v165, 2
      %v181 = vadd.f32 %v172, %v179
      %v183 = vrot.slane %v167, 2
      %v185 = vadd.f32 %v177, %v183
      %v186 = vlaneseq
      %v187 = vshrl.u32 %v186, 7
      %v188 = vsub.s32 4, %v187
      %v189 = vrot.slane %v150, %v188
      %v190 = vmul.f32 %v150, %v189
      %v192 = vrot.slane %v181, 6
      %v195 = vrot.slane %v185, 6
      %v198 = vrot.slane %v190, 1
      %vm200 = vcmask 1040384
      %v201 = vsel %vm200, %v172, %v177
      %vm202 = vcmask 1041408
      %v203 = vsel %vm202, %v201, %v192
      %vm204 = vcmask 1042432
      %v205 = vsel %vm204, %v203, %v195
      %vm206 = vcmask 1043456
      %v207 = vsel %vm206, %v205, %v198
      %s208 = scalar_lea.vmem %s137, 8
      %v209 = vld [vmem:[%s208] sm:$0xff]
      %v210 = vsub.f32 0.0, %v209
      %v211 = vmul.f32 %v210, 1.442695
      %v212 = vpow.pop %v211
      %v213 = vadd.f32 %v212, 1.0
      %v214 = vrcp.pop %v213
      %v215 = vmul.f32 1.0, %v214
      %v216 = vmul.f32 %v215, 1.1
      %v217 = vsub.f32 %v216, 0.05
      %v218 = vadd.f32 %v217, %v142
      %v219 = vmul.f32 %v218, %v154
      %v220 = vadd.f32 %v217, %v157
      %v221 = vmul.f32 %v220, %v154
      %v222 = vmin.f32 %v209, 80.0
      %v223 = vmul.f32 %v222, 1.442695
      %v224 = vpow.pop %v223
      %v225 = vmul.f32 %v224, 16.0
      %v226 = vmul.f32 %v225, %v154
      %v227 = vmul.f32 %v224, 24.0
      %v228 = vmul.f32 %v227, %v154
      %v229 = vmul.f32 %v226, 0.5
      %v231 = vrot.slane %v229, 2
      %v233 = vsub.f32 %v219, %v231
      %v234 = vmul.f32 %v228, 0.5
      %v236 = vrot.slane %v234, 2
      %v238 = vsub.f32 %v221, %v236
      %v240 = vrot.slane %v226, 2
      %v242 = vadd.f32 %v233, %v240
      %v244 = vrot.slane %v228, 2
      %v246 = vadd.f32 %v238, %v244
      %v247 = vlaneseq
      %v248 = vshrl.u32 %v247, 7
      %v249 = vsub.s32 4, %v248
      %v250 = vrot.slane %v215, %v249
      %v251 = vmul.f32 %v215, %v250
      %v253 = vrot.slane %v242, 6
      %v256 = vrot.slane %v246, 6
      %v259 = vrot.slane %v251, 1
      %v261 = vsel %vm200, %v233, %v238
      %v262 = vsel %vm202, %v261, %v253
      %v263 = vsel %vm204, %v262, %v256
      %v264 = vsel %vm206, %v263, %v259
      %266 = vrot.lane.b32.xlu0 %v264, 64
      %v267 = vpop.permute.xlu0 %266
      %vm269 = vcmask 523264
      %v270 = vsel %vm269, %v207, %v267
      %271 = vst [vmem:[%s141] sm:$0x7f] %v270
      %p272 = scmp.lt.s32.totalorder %s13, 1
      %s273 = scalar_select %p272, %s13, 1
      %s274 = smul.addr %s273, 8
      %s275 = scalar_lea.vmem %s2, %s274
      // Predicated region
      $region29: #{_forward_impl.21} parent=27 // pred_check
        %p276 = pneg %p78
      $region30: #{_forward_impl.21} parent=27 // pred_check_branch
        %278 = sbr.rel (%p276) target = $region32
      $region31: #{_forward_impl.21} parent=27 // pred_region
        _
      $region32: #{_forward_impl.21} parent=27 // pred_fallthru
        _
    $region28: #{_forward_impl.21} parent=5 // pred_fallthru
      _
    %p279 = scmp.le.s32.totalorder 2, %s8
    // Predicated region
    $region33: #{_forward_impl.21} parent=5 // pred_check
      %p280 = pneg %p279
    $region34: #{_forward_impl.21} parent=5 // pred_check_branch
      %282 = sbr.rel (%p280) target = $region36
    $region35: #{_forward_impl.21} parent=5 // pred_region
      %s283 = ssub.s32 %s8, 2
      // Predicated region
      $region37: #{_forward_impl.21} parent=35 // pred_check
        %p284 = pneg %p84
      $region38: #{_forward_impl.21} parent=35 // pred_check_branch
        %286 = sbr.rel (%p284) target = $region40
      $region39: #{_forward_impl.21} parent=35 // pred_region
        %p287 = scmp.lt.s32.totalorder %s14, 1
        %s288 = scalar_select %p287, %s14, 1
        %s289 = smul.addr %s288, 8
        %s290 = scalar_lea.vmem %s2, %s289
      $region40: #{_forward_impl.21} parent=35 // pred_fallthru
        _
    $region36: #{_forward_impl.21} parent=5 // pred_fallthru
      _
  $region6: #{_forward_impl.21} parent=0 // loop_footer
    %s12 = sadd.s32 1, %s8
  $region7: #{_forward_impl.21} parent=0 // loop_footer_branch
    %7 = sbr.rel target = $region3
  $region8: #{_forward_impl.21} parent=0 // loop_exit
    _

// kernel: _forward_impl.17
$region0: #{_forward_impl.17}
  #allocation0 [shape = 'u32[]', space=smem, size = 0x4, offset = 0x4, fixed_abs, tag = 'smem constant byte address 0x4 - core index']
  #allocation1 [shape = 'u32[144,128]{1,0:T(1,128)}', space=vmem, size = 0x12000, scoped, tag = 'internal scratch']
  %s0 = inlined_call_operand.vmem [shape: f32[2,2,8,16], index: 0, kind: input, shape index: {}]
  %s1 = inlined_call_operand.vmem [shape: f32[2,16], index: 1, kind: input, shape index: {}]
  %s2 = inlined_call_operand.vmem [shape: f32[2,7,32], index: 2, kind: output, shape index: {}]
  %s3 = sld [smem:[#allocation0]]
  $region41: #{_forward_impl.17} parent=0
    _
  %s5 = ssub.s32 1, %s3
  %s6 = scalar_select 0, %s5, %s3
  loop: start=0, step=1, limit=4
  $region2: #{_forward_impl.17} parent=0 // loop_pre_header
    _
  $region3: #{_forward_impl.17} parent=0 // loop_header
    %s8 = sphi 0, %s12
    %p9 = scmp.ge.s32.totalorder %s8, 4
    %s18 = sphi 0, %s20
    %s21 = sphi 0, %s18
    %s22 = sphi 0, %s21
    %s38 = sphi 0, %s22
    %s42 = sphi 0, %s42
    %s44 = sphi 0, %s42
    %s45 = sphi 0, %s44
    %s59 = sphi 0, %s45
    %s65 = sphi 0, %s67
    %s68 = sphi 0, %s65
    %s69 = sphi 0, %s68
    %s85 = sphi 0, %s69
  $region4: #{_forward_impl.17} parent=0 // loop_header_branch
    %11 = sbr.rel (%p9) target = $region8
  $region5: #{_forward_impl.17} parent=0 // loop_body
    %s13 = ssub.s32 %s8, 1
    %s14 = ssub.s32 %s8, 2
    %s15 = sadd.s32 %s8, 1
    %s16 = ssub.s32 %s8, %s15
    %p17 = scmp.eq.s32.totalorder %s16, 0
    %s19 = sadd.s32 %s18, 1
    %s20 = scalar_select %p17, %s18, %s19
    %p23 = pneg %p17
    %p24 = scmp.eq.s32.totalorder %s8, 1
    %p25 = por %p23, %p24
    %p26 = scmp.ne.s32.totalorder %s18, %s21
    %p27 = scmp.eq.s32.totalorder %s8, 0
    %p28 = por %p26, %p27
    %p29 = scmp.ne.s32.totalorder %s18, %s21
    %p30 = scmp.eq.s32.totalorder %s13, 1
    %p31 = por %p29, %p30
    %p32 = scmp.ne.s32.totalorder %s21, %s22
    %p33 = scmp.eq.s32.totalorder %s13, 0
    %p34 = por %p32, %p33
    %p35 = scmp.ne.s32.totalorder %s21, %s22
    %p36 = scmp.eq.s32.totalorder %s14, 1
    %p37 = por %p35, %p36
    %p39 = scmp.ne.s32.totalorder %s22, %s38
    %p40 = scmp.eq.s32.totalorder %s14, 0
    %p41 = por %p39, %p40
    %s43 = sadd.s32 %s42, 1
    %p46 = scmp.eq.s32.totalorder %s8, 1
    %p47 = scmp.ne.s32.totalorder %s42, %s44
    %p48 = scmp.eq.s32.totalorder %s8, 0
    %p49 = por %p47, %p48
    %p50 = scmp.ne.s32.totalorder %s42, %s44
    %p51 = scmp.eq.s32.totalorder %s13, 1
    %p52 = por %p50, %p51
    %p53 = scmp.ne.s32.totalorder %s44, %s45
    %p54 = scmp.eq.s32.totalorder %s13, 0
    %p55 = por %p53, %p54
    %p56 = scmp.ne.s32.totalorder %s44, %s45
    %p57 = scmp.eq.s32.totalorder %s14, 1
    %p58 = por %p56, %p57
    %p60 = scmp.ne.s32.totalorder %s45, %s59
    %p61 = scmp.eq.s32.totalorder %s14, 0
    %p62 = por %p60, %p61
    %s63 = ssub.s32 %s8, %s15
    %p64 = scmp.eq.s32.totalorder %s63, 0
    %s66 = sadd.s32 %s65, 1
    %s67 = scalar_select %p64, %s65, %s66
    %p70 = pneg %p64
    %p71 = scmp.eq.s32.totalorder %s8, 1
    %p72 = por %p70, %p71
    %p73 = scmp.ne.s32.totalorder %s65, %s68
    %p74 = scmp.eq.s32.totalorder %s8, 0
    %p75 = por %p73, %p74
    %p76 = scmp.ne.s32.totalorder %s65, %s68
    %p77 = scmp.eq.s32.totalorder %s13, 1
    %p78 = por %p76, %p77
    %p79 = scmp.ne.s32.totalorder %s68, %s69
    %p80 = scmp.eq.s32.totalorder %s13, 0
    %p81 = por %p79, %p80
    %p82 = scmp.ne.s32.totalorder %s68, %s69
    %p83 = scmp.eq.s32.totalorder %s14, 1
    %p84 = por %p82, %p83
    %p86 = scmp.ne.s32.totalorder %s69, %s85
    %p87 = scmp.eq.s32.totalorder %s14, 0
    %p88 = por %p86, %p87
    %p89 = scmp.le.s32.totalorder 1, %s8
    %p90 = scmp.lt.s32.totalorder %s8, 3
    %p91 = pnand %p89, %p90
    %p92 = pneg %p91
    // Predicated region
    $region9: #{_forward_impl.17} parent=5 // pred_check
      _
    $region10: #{_forward_impl.17} parent=5 // pred_check_branch
      %94 = sbr.rel (%p91) target = $region12
    $region11: #{_forward_impl.17} parent=5 // pred_region
      %s95 = ssub.s32 %s8, 1
      // Predicated region
      $region13: #{_forward_impl.17} parent=11 // pred_check
        %p96 = pneg %p55
      $region14: #{_forward_impl.17} parent=11 // pred_check_branch
        %98 = sbr.rel (%p96) target = $region16
      $region15: #{_forward_impl.17} parent=11 // pred_region
        _
      $region16: #{_forward_impl.17} parent=11 // pred_fallthru
        _
    $region12: #{_forward_impl.17} parent=5 // pred_fallthru
      _
    %p99 = scmp.lt.s32.totalorder %s8, 2
    // Predicated region
    $region17: #{_forward_impl.17} parent=5 // pred_check
      %p100 = pneg %p99
    $region18: #{_forward_impl.17} parent=5 // pred_check_branch
      %102 = sbr.rel (%p100) target = $region20
    $region19: #{_forward_impl.17} parent=5 // pred_region
      // Predicated region
      $region21: #{_forward_impl.17} parent=19 // pred_check
        %p103 = pneg %p28
      $region22: #{_forward_impl.17} parent=19 // pred_check_branch
        %105 = sbr.rel (%p103) target = $region24
      $region23: #{_forward_impl.17} parent=19 // pred_region
        %p106 = scmp.lt.s32.totalorder %s8, 1
        %s107 = scalar_select %p106, %s8, 1
        %s108 = smul.addr %s107, 2
        %s109 = smul.addr %s108, 8
        %s110 = scalar_lea.vmem %s0, %s109
      $region24: #{_forward_impl.17} parent=19 // pred_fallthru
        _
    $region20: #{_forward_impl.17} parent=5 // pred_fallthru
      _
    %p111 = scmp.le.s32.totalorder 1, %s8
    %p112 = scmp.lt.s32.totalorder %s8, 3
    %p113 = pnand %p111, %p112
    %p114 = pneg %p113
    // Predicated region
    $region25: #{_forward_impl.17} parent=5 // pred_check
      _
    $region26: #{_forward_impl.17} parent=5 // pred_check_branch
      %116 = sbr.rel (%p113) target = $region28
    $region27: #{_forward_impl.17} parent=5 // pred_region
      %s117 = ssub.s32 %s8, 1
      %p118 = scmp.lt.s32.totalorder %s13, 1
      %s119 = scalar_select %p118, %s13, 1
      %s120 = smul.addr %s119, 2
      %s121 = smul.addr %s120, 8
      %s122 = scalar_lea.vmem %s0, %s121
      %p123 = pneg %p34
      %p124 = pneg %p31
      %p125 = pneg %p55
      %p126 = pneg %p52
      %p127 = pneg %p81
      %p128 = pneg %p78
      %p129 = scmp.lt.s32.totalorder %s13, 1
      %s130 = scalar_select %p129, %s13, 1
      %s131 = smul.addr %s130, 8
      %s132 = scalar_lea.vmem %s2, %s131
      %p133 = scmp.lt.s32.totalorder %s13, 1
      %s134 = scalar_select %p133, %s13, 1
      %s135 = smul.addr %s134, 2
      %s136 = smul.addr %s135, 8
      %s137 = scalar_lea.vmem %s0, %s136
      %p138 = scmp.lt.s32.totalorder %s13, 1
      %s139 = scalar_select %p138, %s13, 1
      %s140 = smul.addr %s139, 8
      %s141 = scalar_lea.vmem %s2, %s140
      %v142 = vld [vmem:[%s1] sm:$0x1]
      %v143 = vld [vmem:[%s1 + $0x1] sm:$0x1]
      %v144 = vld [vmem:[%s137] sm:$0xff]
      %v145 = vsub.f32 0.0, %v144
      %v146 = vmul.f32 %v145, 1.442695
      %v147 = vpow.pop %v146
      %v148 = vadd.f32 %v147, 1.0
      %v149 = vrcp.pop %v148
      %v150 = vmul.f32 1.0, %v149
      %v151 = vmul.f32 %v150, 1.05
      %v152 = vsub.f32 %v151, 0.025
      %v153 = vadd.f32 %v152, %v142
      %v154 = vrcp.pop 4.0
      %v155 = vmul.f32 %v153, %v154
      %v157 = vrot.slane %v143, 7
      %v159 = vadd.f32 %v152, %v157
      %v160 = vmul.f32 %v159, %v154
      %v161 = vmin.f32 %v144, 80.0
      %v162 = vmul.f32 %v161, 1.442695
      %v163 = vpow.pop %v162
      %v164 = vmul.f32 %v163, %v154
      %v165 = vmul.f32 %v163, 1.5
      %v166 = vmul.f32 %v165, %v154
      %v167 = vmul.f32 %v164, 0.5
      %v169 = vrot.slane %v167, 2
      %v171 = vsub.f32 %v155, %v169
      %v172 = vmul.f32 %v166, 0.5
      %v174 = vrot.slane %v172, 2
      %v176 = vsub.f32 %v160, %v174
      %v178 = vrot.slane %v164, 2
      %v180 = vadd.f32 %v171, %v178
      %v182 = vrot.slane %v166, 2
      %v184 = vadd.f32 %v176, %v182
      %v185 = vlaneseq
      %v186 = vshrl.u32 %v185, 7
      %v187 = vsub.s32 4, %v186
      %v188 = vrot.slane %v150, %v187
      %v189 = vmul.f32 %v150, %v188
      %v191 = vrot.slane %v180, 6
      %v194 = vrot.slane %v184, 6
      %v197 = vrot.slane %v189, 1
      %vm199 = vcmask 1040384
      %v200 = vsel %vm199, %v171, %v176
      %vm201 = vcmask 1041408
      %v202 = vsel %vm201, %v200, %v191
      %vm203 = vcmask 1042432
      %v204 = vsel %vm203, %v202, %v194
      %vm205 = vcmask 1043456
      %v206 = vsel %vm205, %v204, %v197
      %s207 = scalar_lea.vmem %s137, 8
      %v208 = vld [vmem:[%s207] sm:$0xff]
      %v209 = vsub.f32 0.0, %v208
      %v210 = vmul.f32 %v209, 1.442695
      %v211 = vpow.pop %v210
      %v212 = vadd.f32 %v211, 1.0
      %v213 = vrcp.pop %v212
      %v214 = vmul.f32 1.0, %v213
      %v215 = vmul.f32 %v214, 1.05
      %v216 = vsub.f32 %v215, 0.025
      %v217 = vadd.f32 %v216, %v142
      %v218 = vmul.f32 %v217, %v154
      %v219 = vadd.f32 %v216, %v157
      %v220 = vmul.f32 %v219, %v154
      %v221 = vmin.f32 %v208, 80.0
      %v222 = vmul.f32 %v221, 1.442695
      %v223 = vpow.pop %v222
      %v224 = vmul.f32 %v223, 2.0
      %v225 = vmul.f32 %v224, %v154
      %v226 = vmul.f32 %v223, 3.0
      %v227 = vmul.f32 %v226, %v154
      %v228 = vmul.f32 %v225, 0.5
      %v230 = vrot.slane %v228, 2
      %v232 = vsub.f32 %v218, %v230
      %v233 = vmul.f32 %v227, 0.5
      %v235 = vrot.slane %v233, 2
      %v237 = vsub.f32 %v220, %v235
      %v239 = vrot.slane %v225, 2
      %v241 = vadd.f32 %v232, %v239
      %v243 = vrot.slane %v227, 2
      %v245 = vadd.f32 %v237, %v243
      %v246 = vlaneseq
      %v247 = vshrl.u32 %v246, 7
      %v248 = vsub.s32 4, %v247
      %v249 = vrot.slane %v214, %v248
      %v250 = vmul.f32 %v214, %v249
      %v252 = vrot.slane %v241, 6
      %v255 = vrot.slane %v245, 6
      %v258 = vrot.slane %v250, 1
      %v260 = vsel %vm199, %v232, %v237
      %v261 = vsel %vm201, %v260, %v252
      %v262 = vsel %vm203, %v261, %v255
      %v263 = vsel %vm205, %v262, %v258
      %265 = vrot.lane.b32.xlu0 %v263, 16
      %v266 = vpop.permute.xlu0 %265
      %vm268 = vcmask 130048
      %v269 = vsel %vm268, %v206, %v266
      %vm270 = vcmask 260096
      %271 = vst.msk [vmem:[%s141] sm:$0x7f] %vm270, %v269
      %p272 = scmp.lt.s32.totalorder %s13, 1
      %s273 = scalar_select %p272, %s13, 1
      %s274 = smul.addr %s273, 8
      %s275 = scalar_lea.vmem %s2, %s274
      // Predicated region
      $region29: #{_forward_impl.17} parent=27 // pred_check
        %p276 = pneg %p78
      $region30: #{_forward_impl.17} parent=27 // pred_check_branch
        %278 = sbr.rel (%p276) target = $region32
      $region31: #{_forward_impl.17} parent=27 // pred_region
        _
      $region32: #{_forward_impl.17} parent=27 // pred_fallthru
        _
    $region28: #{_forward_impl.17} parent=5 // pred_fallthru
      _
    %p279 = scmp.le.s32.totalorder 2, %s8
    // Predicated region
    $region33: #{_forward_impl.17} parent=5 // pred_check
      %p280 = pneg %p279
    $region34: #{_forward_impl.17} parent=5 // pred_check_branch
      %282 = sbr.rel (%p280) target = $region36
    $region35: #{_forward_impl.17} parent=5 // pred_region
      %s283 = ssub.s32 %s8, 2
      // Predicated region
      $region37: #{_forward_impl.17} parent=35 // pred_check
        %p284 = pneg %p84
      $region38: #{_forward_impl.17} parent=35 // pred_check_branch
        %286 = sbr.rel (%p284) target = $region40
      $region39: #{_forward_impl.17} parent=35 // pred_region
        %p287 = scmp.lt.s32.totalorder %s14, 1
        %s288 = scalar_select %p287, %s14, 1
        %s289 = smul.addr %s288, 8
        %s290 = scalar_lea.vmem %s2, %s289
      $region40: #{_forward_impl.17} parent=35 // pred_fallthru
        _
    $region36: #{_forward_impl.17} parent=5 // pred_fallthru
      _
  $region6: #{_forward_impl.17} parent=0 // loop_footer
    %s12 = sadd.s32 1, %s8
  $region7: #{_forward_impl.17} parent=0 // loop_footer_branch
    %7 = sbr.rel target = $region3
  $region8: #{_forward_impl.17} parent=0 // loop_exit
    _

</llo_original>
